<compile_context>
chip_gen: v6e
topology: v6e:2x2x1
jax: 0.10.0
libtpu: 0.0.40
codegen_flags: <defaults>
</compile_context>

<pallas_src>
import functools

import jax
import jax.numpy as jnp
from jax.experimental import pallas as pl
from jax.experimental.pallas import tpu as pltpu


def _round_up(n, m):
    return ((n + m - 1) // m) * m


# ---------------------------------------------------------------------------
# Pallas kernel: full iAFF forward for one batch element, channel-major.
# ---------------------------------------------------------------------------
def iaff_kernel(
    x_ref, res_ref,
    w1a_ref, lb1_ref, gb1_ref, lw2_ref, b2s1_ref,   # stage 1
    gw2_ref,                                        # shared global 2nd layer
    w1b_ref, l2b1_ref, l2w2_ref, b2s2_ref,          # stage 2
    out_ref,
    *, inv_hw,
):
    cint = lb1_ref.shape[0]   # padded inter_channels (multiple of 8)

    # Epilogue math in f32; MXU operands cast to bf16 at the dot sites.
    x = x_ref[...].astype(jnp.float32)      # (C, HW)
    res = res_ref[...].astype(jnp.float32)  # (C, HW)
    d = x - res                              # reused by both epilogues
    xa = x + res                             # x dead after this point

    gw2 = gw2_ref[...]                       # (C, Cint) f32, shared by stages
    gb1 = gb1_ref[...]                       # (Cint, 1) f32, shared by stages

    def stage(z, w1cat_ref, local_b1, local_w2_ref, b2sum):
        zb = z.astype(jnp.bfloat16)
        # Fused first layer: [local_w1; global_w1] @ z  -> (2*Cint, HW), f32 acc.
        f = jnp.dot(w1cat_ref[...], zb, preferred_element_type=jnp.float32)
        # Local branch: bias + ReLU on the first Cint rows.
        lh = jnp.maximum(f[:cint] + local_b1, 0.0)                    # (Cint, HW)
        # Global branch: mean over HW commutes with the 1x1 conv; bias+ReLU
        # after the (real-HW) mean, exactly as in the module.
        gh = jnp.maximum(
            jnp.sum(f[cint:], axis=1, keepdims=True) * inv_hw + gb1, 0.0)  # (Cint,1)
        xg = jnp.dot(gw2, gh, preferred_element_type=jnp.float32) + b2sum   # (C,1)
        xl = jnp.dot(local_w2_ref[...], lh.astype(jnp.bfloat16),
                     preferred_element_type=jnp.float32)              # (C, HW)
        s = xl + xg                                                    # xg bcast over lanes
        # sigmoid via approx EUP reciprocal (one EUP op instead of refined divide)
        return pl.reciprocal(1.0 + jnp.exp(-s), approx=True)

    # ---- stage 1 -----------------------------------------------------------
    wei = stage(xa, w1a_ref, lb1_ref[...], lw2_ref, b2s1_ref[...])
    xi = res + d * wei                       # == x*wei + res*(1-wei)

    # ---- stage 2 (reuses global_att, as in the PyTorch forward) ------------
    wei2 = stage(xi, w1b_ref, l2b1_ref[...], l2w2_ref, b2s2_ref[...])
    out_ref[...] = res + d * wei2


# ---------------------------------------------------------------------------
# Wrapper
# ---------------------------------------------------------------------------
def iaff_pallas(x_nchw, res_nchw, params):
    B, C, H, W = x_nchw.shape
    HW = H * W
    hw_p = _round_up(HW, 128)    # lane-dense stores / matmul N dimension

    (lw1, lb1, lw2, lb2,
     gw1, gb1, gw2, gb2,
     l2w1, l2b1, l2w2, l2b2) = params
    cint = lw1.shape[0]
    cint_p = _round_up(cint, 8)  # sublane-aligned split of the fused matmul

    def pad_rows(a, n):
        return a if a.shape[0] == n else jnp.pad(a, ((0, n - a.shape[0]), (0, 0)))

    def pad_cols(a, n):
        return a if a.shape[1] == n else jnp.pad(a, ((0, 0), (0, n - a.shape[1])))

    lw1p, gw1p, l2w1p = (pad_rows(w, cint_p) for w in (lw1, gw1, l2w1))
    lb1p, gb1p, l2b1p = (pad_rows(b, cint_p) for b in (lb1, gb1, l2b1))
    lw2p, gw2p, l2w2p = (pad_cols(w, cint_p) for w in (lw2, gw2, l2w2))

    # Fuse local/global first-layer weights once (glue, plain JAX); bf16 MXU weights.
    w1a = jnp.concatenate([lw1p, gw1p], axis=0).astype(jnp.bfloat16)   # stage 1
    w1b = jnp.concatenate([l2w1p, gw1p], axis=0).astype(jnp.bfloat16)  # stage 2 (global_att reused)
    lw2b = lw2p.astype(jnp.bfloat16)
    l2w2b = l2w2p.astype(jnp.bfloat16)
    # Folded second-layer biases: one (C,1) add instead of two broadcast adds.
    b2s1 = lb2 + gb2
    b2s2 = l2b2 + gb2

    # NCHW is already channel-major: flatten spatial, keep activations bf16.
    x_cm = x_nchw.reshape(B, C, HW).astype(jnp.bfloat16)
    res_cm = res_nchw.reshape(B, C, HW).astype(jnp.bfloat16)
    if hw_p != HW:
        pad = ((0, 0), (0, 0), (0, hw_p - HW))
        x_cm = jnp.pad(x_cm, pad)
        res_cm = jnp.pad(res_cm, pad)

    kernel_fn = functools.partial(iaff_kernel, inv_hw=1.0 / HW)

    weights = (w1a, lb1p, gb1p, lw2b, b2s1, gw2p, w1b, l2b1p, l2w2b, b2s2)
    weight_shapes = [tuple(w.shape) for w in weights]
    weight_bytes = int(sum(int(w.size) * w.dtype.itemsize for w in weights))

    # Advisory cost hint (weights + both stages' activation traffic included).
    mm_flops = (2 * (2 * cint_p) * C * hw_p          # fused first layer
                + 2 * C * cint_p * hw_p              # local second layer
                + 2 * C * cint_p)                    # global second layer
    flops = int(B * 2 * (mm_flops + 10 * C * hw_p))
    cost = pl.CostEstimate(
        flops=flops,
        transcendentals=int(B * 4 * C * hw_p),       # exp + recip, two stages
        bytes_accessed=int(B * C * hw_p * (2 + 2 + 4)) + weight_bytes,
    )

    act_spec = pl.BlockSpec((pl.Squeezed(), C, hw_p), lambda b: (b, 0, 0))

    def call(single_buffer_weights):
        def wspec(shape):
            if single_buffer_weights:
                # Grid-invariant (index_map == (0,0) for all b): single-buffer.
                return pl.BlockSpec(shape, lambda b: (0, 0),
                                    pipeline_mode=pl.Buffered(1))
            return pl.BlockSpec(shape, lambda b: (0, 0))

        grid_spec = pltpu.PrefetchScalarGridSpec(
            num_scalar_prefetch=0,
            grid=(B,),
            in_specs=[act_spec, act_spec] + [wspec(s) for s in weight_shapes],
            out_specs=act_spec,
        )
        return pl.pallas_call(
            kernel_fn,
            out_shape=jax.ShapeDtypeStruct((B, C, hw_p), jnp.float32),
            grid_spec=grid_spec,
            compiler_params=pltpu.CompilerParams(
                dimension_semantics=("parallel",),   # batch across both TCs on v7x
                vmem_limit_bytes=48 * 1024 * 1024,   # above all default scoped limits
            ),
            cost_estimate=cost,
        )(x_cm, res_cm, *weights)

    try:
        out_cm = call(True)
    except Exception:
        # This jax build rejected pl.Buffered(1) single-buffering of the
        # grid-invariant weights; fall back to default double-buffered specs.
        out_cm = call(False)

    if hw_p != HW:
        out_cm = out_cm[:, :, :HW]
    return out_cm.reshape(B, C, H, W)


# ---------------------------------------------------------------------------
# Parameter construction (deterministic, synthetic) + BN folding
# ---------------------------------------------------------------------------
def fold_conv_bn(w_oi, b_o, gamma, beta, mean, var, eps=1e-5):
    """Fold eval-mode BatchNorm into a preceding 1x1 conv.

    Returns (weight (out, in), bias (out, 1)) shaped for channel-major
    left-multiplication in the kernel.
    """
    scale = gamma / jnp.sqrt(var + eps)
    w_f = w_oi * scale[:, None]
    b_f = (b_o - mean) * scale + beta
    return w_f, b_f.reshape(-1, 1)


def make_branch_params(key, channels, inter_channels):
    ks = jax.random.split(key, 12)
    s1 = 1.0 / jnp.sqrt(channels)
    s2 = 1.0 / jnp.sqrt(inter_channels)
    w1 = jax.random.uniform(ks[0], (inter_channels, channels), jnp.float32, -s1, s1)
    b1 = jax.random.uniform(ks[1], (inter_channels,), jnp.float32, -s1, s1)
    g1 = 1.0 + 0.1 * jax.random.normal(ks[2], (inter_channels,), jnp.float32)
    be1 = 0.1 * jax.random.normal(ks[3], (inter_channels,), jnp.float32)
    m1 = 0.1 * jax.random.normal(ks[4], (inter_channels,), jnp.float32)
    v1 = 1.0 + 0.1 * jax.random.uniform(ks[5], (inter_channels,), jnp.float32)
    w2 = jax.random.uniform(ks[6], (channels, inter_channels), jnp.float32, -s2, s2)
    b2 = jax.random.uniform(ks[7], (channels,), jnp.float32, -s2, s2)
    g2 = 1.0 + 0.1 * jax.random.normal(ks[8], (channels,), jnp.float32)
    be2 = 0.1 * jax.random.normal(ks[9], (channels,), jnp.float32)
    m2 = 0.1 * jax.random.normal(ks[10], (channels,), jnp.float32)
    v2 = 1.0 + 0.1 * jax.random.uniform(ks[11], (channels,), jnp.float32)

    fw1, fb1 = fold_conv_bn(w1, b1, g1, be1, m1, v1)
    fw2, fb2 = fold_conv_bn(w2, b2, g2, be2, m2, v2)
    return fw1, fb1, fw2, fb2


# ---------------------------------------------------------------------------
# Pure-JAX f32 reference (unfused, channel-major) for a correctness check
# ---------------------------------------------------------------------------
def iaff_ref(x_nchw, res_nchw, params):
    B, C, H, W = x_nchw.shape
    HW = H * W
    x = x_nchw.reshape(B, C, HW)
    res = res_nchw.reshape(B, C, HW)
    (lw1, lb1, lw2, lb2, gw1, gb1, gw2, gb2, l2w1, l2b1, l2w2, l2b2) = params

    def local_branch(z, w1, b1, w2, b2):
        h = jnp.maximum(jnp.einsum('oc,bcs->bos', w1, z) + b1, 0.0)
        return jnp.einsum('co,bos->bcs', w2, h) + b2

    def global_branch(z, w1, b1, w2, b2):
        zm = jnp.mean(z, axis=2, keepdims=True)
        h = jnp.maximum(jnp.einsum('oc,bcs->bos', w1, zm) + b1, 0.0)
        return jnp.einsum('co,bos->bcs', w2, h) + b2

    xa = x + res
    wei = jax.nn.sigmoid(local_branch(xa, lw1, lb1, lw2, lb2)
                         + global_branch(xa, gw1, gb1, gw2, gb2))
    xi = x * wei + res * (1.0 - wei)
    wei2 = jax.nn.sigmoid(local_branch(xi, l2w1, l2b1, l2w2, l2b2)
                          + global_branch(xi, gw1, gb1, gw2, gb2))
    out = x * wei2 + res * (1.0 - wei2)
    return out.reshape(B, C, H, W)


if __name__ == "__main__":
    B, C, H, W = 2, 64, 16, 16
    r = 4
    Cint = C // r

    key = jax.random.PRNGKey(0)
    k_x, k_r, k_l, k_g, k_l2, k_g2 = jax.random.split(key, 6)

    x_f32 = jax.random.normal(k_x, (B, C, H, W), jnp.float32)
    res_f32 = jax.random.normal(k_r, (B, C, H, W), jnp.float32)
    # Kernel consumes bf16 activations (halves HBM traffic); build them once
    # and run the f32 reference on the same bf16-representable values so only
    # matmul / approx-sigmoid rounding enters the error budget.
    x = x_f32.astype(jnp.bfloat16)
    residual = res_f32.astype(jnp.bfloat16)

    local_p = make_branch_params(k_l, C, Cint)
    global_p = make_branch_params(k_g, C, Cint)
    local2_p = make_branch_params(k_l2, C, Cint)
    _global2_p = make_branch_params(k_g2, C, Cint)  # built but never used (as in PyTorch forward)

    params = (*local_p, *global_p, *local2_p)

    out = iaff_pallas(x, residual, params)
    out = jax.block_until_ready(out)

    ref = iaff_ref(x.astype(jnp.float32), residual.astype(jnp.float32), params)
    assert out.shape == (B, C, H, W)
    # bf16 MXU operands + approx-reciprocal sigmoid give ~1e-2-level deltas vs
    # the f32 reference; 5e-2 still catches structural bugs (those are O(1)).
    max_err = float(jnp.max(jnp.abs(out - ref)))
    assert jnp.allclose(out, ref, atol=5e-2, rtol=5e-2), max_err

    print("KERNEL_OK")
</pallas_src>

<mosaic_0001>
module attributes {stable_mosaic.version = 11 : i64} {
  func.func @iaff_kernel(%arg0: i32, %arg1: memref<1x64x256xbf16, #tpu.memory_space<vmem>>, %arg2: memref<1x64x256xbf16, #tpu.memory_space<vmem>>, %arg3: memref<32x64xbf16, #tpu.memory_space<vmem>>, %arg4: memref<16x1xf32, #tpu.memory_space<vmem>>, %arg5: memref<16x1xf32, #tpu.memory_space<vmem>>, %arg6: memref<64x16xbf16, #tpu.memory_space<vmem>>, %arg7: memref<64x1xf32, #tpu.memory_space<vmem>>, %arg8: memref<64x16xf32, #tpu.memory_space<vmem>>, %arg9: memref<32x64xbf16, #tpu.memory_space<vmem>>, %arg10: memref<16x1xf32, #tpu.memory_space<vmem>>, %arg11: memref<64x16xbf16, #tpu.memory_space<vmem>>, %arg12: memref<64x1xf32, #tpu.memory_space<vmem>>, %arg13: memref<1x64x256xf32, #tpu.memory_space<vmem>>) attributes {dimension_semantics = [#tpu.dimension_semantics<parallel>], iteration_bounds = array<i64: 2>, scalar_prefetch = 0 : i64, scratch_operands = 0 : i64, tpu.core_type = #tpu.core_type<tc>, window_params = [{transform_indices = @transform_0, window_bounds = array<i64: 1, 64, 256>}, {transform_indices = @transform_1, window_bounds = array<i64: 1, 64, 256>}, {pipeline_mode = #tpu.pipeline_mode<synchronous>, transform_indices = @transform_2, window_bounds = array<i64: 32, 64>}, {pipeline_mode = #tpu.pipeline_mode<synchronous>, transform_indices = @transform_3, window_bounds = array<i64: 16, 1>}, {pipeline_mode = #tpu.pipeline_mode<synchronous>, transform_indices = @transform_4, window_bounds = array<i64: 16, 1>}, {pipeline_mode = #tpu.pipeline_mode<synchronous>, transform_indices = @transform_5, window_bounds = array<i64: 64, 16>}, {pipeline_mode = #tpu.pipeline_mode<synchronous>, transform_indices = @transform_6, window_bounds = array<i64: 64, 1>}, {pipeline_mode = #tpu.pipeline_mode<synchronous>, transform_indices = @transform_7, window_bounds = array<i64: 64, 16>}, {pipeline_mode = #tpu.pipeline_mode<synchronous>, transform_indices = @transform_8, window_bounds = array<i64: 32, 64>}, {pipeline_mode = #tpu.pipeline_mode<synchronous>, transform_indices = @transform_9, window_bounds = array<i64: 16, 1>}, {pipeline_mode = #tpu.pipeline_mode<synchronous>, transform_indices = @transform_10, window_bounds = array<i64: 64, 16>}, {pipeline_mode = #tpu.pipeline_mode<synchronous>, transform_indices = @transform_11, window_bounds = array<i64: 64, 1>}, {transform_indices = @transform_12, window_bounds = array<i64: 1, 64, 256>}]} {
    %c0 = arith.constant 0 : index
    %c0_0 = arith.constant 0 : index
    %c0_1 = arith.constant 0 : index
    %0 = vector.load %arg1[%c0, %c0_0, %c0_1] : memref<1x64x256xbf16, #tpu.memory_space<vmem>>, vector<1x64x256xbf16>
    %1 = vector.shape_cast %0 : vector<1x64x256xbf16> to vector<64x256xbf16>
    %2 = arith.extf %1 : vector<64x256xbf16> to vector<64x256xf32>
    %c0_2 = arith.constant 0 : index
    %c0_3 = arith.constant 0 : index
    %c0_4 = arith.constant 0 : index
    %3 = vector.load %arg2[%c0_2, %c0_3, %c0_4] : memref<1x64x256xbf16, #tpu.memory_space<vmem>>, vector<1x64x256xbf16>
    %4 = vector.shape_cast %3 : vector<1x64x256xbf16> to vector<64x256xbf16>
    %5 = arith.extf %4 : vector<64x256xbf16> to vector<64x256xf32>
    %6 = arith.subf %2, %5 : vector<64x256xf32>
    %7 = arith.addf %2, %5 : vector<64x256xf32>
    %c0_5 = arith.constant 0 : index
    %c0_6 = arith.constant 0 : index
    %8 = vector.load %arg8[%c0_5, %c0_6] : memref<64x16xf32, #tpu.memory_space<vmem>>, vector<64x16xf32>
    %c0_7 = arith.constant 0 : index
    %c0_8 = arith.constant 0 : index
    %9 = vector.load %arg5[%c0_7, %c0_8] : memref<16x1xf32, #tpu.memory_space<vmem>>, vector<16x1xf32>
    %c0_9 = arith.constant 0 : index
    %c0_10 = arith.constant 0 : index
    %10 = vector.load %arg4[%c0_9, %c0_10] : memref<16x1xf32, #tpu.memory_space<vmem>>, vector<16x1xf32>
    %c0_11 = arith.constant 0 : index
    %c0_12 = arith.constant 0 : index
    %11 = vector.load %arg7[%c0_11, %c0_12] : memref<64x1xf32, #tpu.memory_space<vmem>>, vector<64x1xf32>
    %12 = arith.truncf %7 : vector<64x256xf32> to vector<64x256xbf16>
    %c0_13 = arith.constant 0 : index
    %c0_14 = arith.constant 0 : index
    %13 = vector.load %arg3[%c0_13, %c0_14] : memref<32x64xbf16, #tpu.memory_space<vmem>>, vector<32x64xbf16>
    %cst = arith.constant dense<0.000000e+00> : vector<32x256xf32>
    %14 = tpu.matmul %13, %12, %cst {dimension_numbers = #tpu.dot_dimension_numbers<[1], [0], [0], [1], [0, 0, 1, 1], [], []>} : vector<32x64xbf16>, vector<64x256xbf16>, vector<32x256xf32> -> vector<32x256xf32>
    %15 = vector.extract_strided_slice %14 {offsets = [0, 0], sizes = [16, 256], strides = [1, 1]} : vector<32x256xf32> to vector<16x256xf32>
    %16 = vector.broadcast %10 : vector<16x1xf32> to vector<16x256xf32>
    %17 = arith.addf %15, %16 : vector<16x256xf32>
    %cst_15 = arith.constant 0.000000e+00 : f32
    %18 = vector.broadcast %cst_15 : f32 to vector<16x256xf32>
    %19 = arith.maximumf %17, %18 : vector<16x256xf32>
    %20 = vector.extract_strided_slice %14 {offsets = [16, 0], sizes = [16, 256], strides = [1, 1]} : vector<32x256xf32> to vector<16x256xf32>
    %cst_16 = arith.constant dense<0.000000e+00> : vector<16xf32>
    %21 = vector.multi_reduction <add>, %20, %cst_16 [1] : vector<16x256xf32> to vector<16xf32>
    %22 = vector.shape_cast %21 : vector<16xf32> to vector<16x1xf32>
    %cst_17 = arith.constant 3.906250e-03 : f32
    %23 = vector.broadcast %cst_17 : f32 to vector<16x1xf32>
    %24 = arith.mulf %22, %23 : vector<16x1xf32>
    %25 = arith.addf %24, %9 : vector<16x1xf32>
    %cst_18 = arith.constant 0.000000e+00 : f32
    %26 = vector.broadcast %cst_18 : f32 to vector<16x1xf32>
    %27 = arith.maximumf %25, %26 : vector<16x1xf32>
    %cst_19 = arith.constant dense<0.000000e+00> : vector<64x1xf32>
    %28 = tpu.matmul %8, %27, %cst_19 {dimension_numbers = #tpu.dot_dimension_numbers<[1], [0], [0], [1], [0, 0, 1, 1], [], []>} : vector<64x16xf32>, vector<16x1xf32>, vector<64x1xf32> -> vector<64x1xf32>
    %29 = arith.addf %28, %11 : vector<64x1xf32>
    %c0_20 = arith.constant 0 : index
    %c0_21 = arith.constant 0 : index
    %30 = vector.load %arg6[%c0_20, %c0_21] : memref<64x16xbf16, #tpu.memory_space<vmem>>, vector<64x16xbf16>
    %31 = arith.truncf %19 : vector<16x256xf32> to vector<16x256xbf16>
    %cst_22 = arith.constant dense<0.000000e+00> : vector<64x256xf32>
    %32 = tpu.matmul %30, %31, %cst_22 {dimension_numbers = #tpu.dot_dimension_numbers<[1], [0], [0], [1], [0, 0, 1, 1], [], []>} : vector<64x16xbf16>, vector<16x256xbf16>, vector<64x256xf32> -> vector<64x256xf32>
    %33 = vector.broadcast %29 : vector<64x1xf32> to vector<64x256xf32>
    %34 = arith.addf %32, %33 : vector<64x256xf32>
    %cst_23 = arith.constant 0.000000e+00 : f32
    %35 = vector.broadcast %cst_23 : f32 to vector<64x256xf32>
    %36 = arith.subf %35, %34 : vector<64x256xf32>
    %37 = math.exp %36 : vector<64x256xf32>
    %cst_24 = arith.constant 1.000000e+00 : f32
    %38 = vector.broadcast %cst_24 : f32 to vector<64x256xf32>
    %39 = arith.addf %38, %37 : vector<64x256xf32>
    %40 = tpu.reciprocal %39 {approx = true} : vector<64x256xf32> -> vector<64x256xf32>
    %41 = arith.mulf %6, %40 : vector<64x256xf32>
    %42 = arith.addf %5, %41 : vector<64x256xf32>
    %c0_25 = arith.constant 0 : index
    %c0_26 = arith.constant 0 : index
    %43 = vector.load %arg10[%c0_25, %c0_26] : memref<16x1xf32, #tpu.memory_space<vmem>>, vector<16x1xf32>
    %c0_27 = arith.constant 0 : index
    %c0_28 = arith.constant 0 : index
    %44 = vector.load %arg12[%c0_27, %c0_28] : memref<64x1xf32, #tpu.memory_space<vmem>>, vector<64x1xf32>
    %45 = arith.truncf %42 : vector<64x256xf32> to vector<64x256xbf16>
    %c0_29 = arith.constant 0 : index
    %c0_30 = arith.constant 0 : index
    %46 = vector.load %arg9[%c0_29, %c0_30] : memref<32x64xbf16, #tpu.memory_space<vmem>>, vector<32x64xbf16>
    %cst_31 = arith.constant dense<0.000000e+00> : vector<32x256xf32>
    %47 = tpu.matmul %46, %45, %cst_31 {dimension_numbers = #tpu.dot_dimension_numbers<[1], [0], [0], [1], [0, 0, 1, 1], [], []>} : vector<32x64xbf16>, vector<64x256xbf16>, vector<32x256xf32> -> vector<32x256xf32>
    %48 = vector.extract_strided_slice %47 {offsets = [0, 0], sizes = [16, 256], strides = [1, 1]} : vector<32x256xf32> to vector<16x256xf32>
    %49 = vector.broadcast %43 : vector<16x1xf32> to vector<16x256xf32>
    %50 = arith.addf %48, %49 : vector<16x256xf32>
    %cst_32 = arith.constant 0.000000e+00 : f32
    %51 = vector.broadcast %cst_32 : f32 to vector<16x256xf32>
    %52 = arith.maximumf %50, %51 : vector<16x256xf32>
    %53 = vector.extract_strided_slice %47 {offsets = [16, 0], sizes = [16, 256], strides = [1, 1]} : vector<32x256xf32> to vector<16x256xf32>
    %cst_33 = arith.constant dense<0.000000e+00> : vector<16xf32>
    %54 = vector.multi_reduction <add>, %53, %cst_33 [1] : vector<16x256xf32> to vector<16xf32>
    %55 = vector.shape_cast %54 : vector<16xf32> to vector<16x1xf32>
    %cst_34 = arith.constant 3.906250e-03 : f32
    %56 = vector.broadcast %cst_34 : f32 to vector<16x1xf32>
    %57 = arith.mulf %55, %56 : vector<16x1xf32>
    %58 = arith.addf %57, %9 : vector<16x1xf32>
    %cst_35 = arith.constant 0.000000e+00 : f32
    %59 = vector.broadcast %cst_35 : f32 to vector<16x1xf32>
    %60 = arith.maximumf %58, %59 : vector<16x1xf32>
    %cst_36 = arith.constant dense<0.000000e+00> : vector<64x1xf32>
    %61 = tpu.matmul %8, %60, %cst_36 {dimension_numbers = #tpu.dot_dimension_numbers<[1], [0], [0], [1], [0, 0, 1, 1], [], []>} : vector<64x16xf32>, vector<16x1xf32>, vector<64x1xf32> -> vector<64x1xf32>
    %62 = arith.addf %61, %44 : vector<64x1xf32>
    %c0_37 = arith.constant 0 : index
    %c0_38 = arith.constant 0 : index
    %63 = vector.load %arg11[%c0_37, %c0_38] : memref<64x16xbf16, #tpu.memory_space<vmem>>, vector<64x16xbf16>
    %64 = arith.truncf %52 : vector<16x256xf32> to vector<16x256xbf16>
    %cst_39 = arith.constant dense<0.000000e+00> : vector<64x256xf32>
    %65 = tpu.matmul %63, %64, %cst_39 {dimension_numbers = #tpu.dot_dimension_numbers<[1], [0], [0], [1], [0, 0, 1, 1], [], []>} : vector<64x16xbf16>, vector<16x256xbf16>, vector<64x256xf32> -> vector<64x256xf32>
    %66 = vector.broadcast %62 : vector<64x1xf32> to vector<64x256xf32>
    %67 = arith.addf %65, %66 : vector<64x256xf32>
    %cst_40 = arith.constant 0.000000e+00 : f32
    %68 = vector.broadcast %cst_40 : f32 to vector<64x256xf32>
    %69 = arith.subf %68, %67 : vector<64x256xf32>
    %70 = math.exp %69 : vector<64x256xf32>
    %cst_41 = arith.constant 1.000000e+00 : f32
    %71 = vector.broadcast %cst_41 : f32 to vector<64x256xf32>
    %72 = arith.addf %71, %70 : vector<64x256xf32>
    %73 = tpu.reciprocal %72 {approx = true} : vector<64x256xf32> -> vector<64x256xf32>
    %74 = arith.mulf %6, %73 : vector<64x256xf32>
    %75 = arith.addf %5, %74 : vector<64x256xf32>
    %c0_42 = arith.constant 0 : index
    %c0_43 = arith.constant 0 : index
    %c0_44 = arith.constant 0 : index
    %76 = vector.load %arg13[%c0_42, %c0_43, %c0_44] : memref<1x64x256xf32, #tpu.memory_space<vmem>>, vector<1x64x256xf32>
    %77 = vector.shape_cast %76 : vector<1x64x256xf32> to vector<64x256xf32>
    %78 = vector.shape_cast %75 : vector<64x256xf32> to vector<1x64x256xf32>
    tpu.vector_store %arg13[%c0_42, %c0_43, %c0_44], %78 {strides = array<i32>} : memref<1x64x256xf32, #tpu.memory_space<vmem>>, vector<1x64x256xf32>,
    return
  }
  func.func @transform_0(%arg0: i32) -> (i32, i32, i32) {
    %c0_i32 = arith.constant 0 : i32
    %c0_i32_0 = arith.constant 0 : i32
    %c0_i32_1 = arith.constant 0 : i32
    return %arg0, %c0_i32, %c0_i32_0 : i32, i32, i32
  }
  func.func @transform_1(%arg0: i32) -> (i32, i32, i32) {
    %c0_i32 = arith.constant 0 : i32
    %c0_i32_0 = arith.constant 0 : i32
    %c0_i32_1 = arith.constant 0 : i32
    return %arg0, %c0_i32, %c0_i32_0 : i32, i32, i32
  }
  func.func @transform_2(%arg0: i32) -> (i32, i32) {
    %c0_i32 = arith.constant 0 : i32
    %c0_i32_0 = arith.constant 0 : i32
    %c0_i32_1 = arith.constant 0 : i32
    return %c0_i32, %c0_i32_0 : i32, i32
  }
  func.func @transform_3(%arg0: i32) -> (i32, i32) {
    %c0_i32 = arith.constant 0 : i32
    %c0_i32_0 = arith.constant 0 : i32
    %c0_i32_1 = arith.constant 0 : i32
    return %c0_i32, %c0_i32_0 : i32, i32
  }
  func.func @transform_4(%arg0: i32) -> (i32, i32) {
    %c0_i32 = arith.constant 0 : i32
    %c0_i32_0 = arith.constant 0 : i32
    %c0_i32_1 = arith.constant 0 : i32
    return %c0_i32, %c0_i32_0 : i32, i32
  }
  func.func @transform_5(%arg0: i32) -> (i32, i32) {
    %c0_i32 = arith.constant 0 : i32
    %c0_i32_0 = arith.constant 0 : i32
    %c0_i32_1 = arith.constant 0 : i32
    return %c0_i32, %c0_i32_0 : i32, i32
  }
  func.func @transform_6(%arg0: i32) -> (i32, i32) {
    %c0_i32 = arith.constant 0 : i32
    %c0_i32_0 = arith.constant 0 : i32
    %c0_i32_1 = arith.constant 0 : i32
    return %c0_i32, %c0_i32_0 : i32, i32
  }
  func.func @transform_7(%arg0: i32) -> (i32, i32) {
    %c0_i32 = arith.constant 0 : i32
    %c0_i32_0 = arith.constant 0 : i32
    %c0_i32_1 = arith.constant 0 : i32
    return %c0_i32, %c0_i32_0 : i32, i32
  }
  func.func @transform_8(%arg0: i32) -> (i32, i32) {
    %c0_i32 = arith.constant 0 : i32
    %c0_i32_0 = arith.constant 0 : i32
    %c0_i32_1 = arith.constant 0 : i32
    return %c0_i32, %c0_i32_0 : i32, i32
  }
  func.func @transform_9(%arg0: i32) -> (i32, i32) {
    %c0_i32 = arith.constant 0 : i32
    %c0_i32_0 = arith.constant 0 : i32
    %c0_i32_1 = arith.constant 0 : i32
    return %c0_i32, %c0_i32_0 : i32, i32
  }
  func.func @transform_10(%arg0: i32) -> (i32, i32) {
    %c0_i32 = arith.constant 0 : i32
    %c0_i32_0 = arith.constant 0 : i32
    %c0_i32_1 = arith.constant 0 : i32
    return %c0_i32, %c0_i32_0 : i32, i32
  }
  func.func @transform_11(%arg0: i32) -> (i32, i32) {
    %c0_i32 = arith.constant 0 : i32
    %c0_i32_0 = arith.constant 0 : i32
    %c0_i32_1 = arith.constant 0 : i32
    return %c0_i32, %c0_i32_0 : i32, i32
  }
  func.func @transform_12(%arg0: i32) -> (i32, i32, i32) {
    %c0_i32 = arith.constant 0 : i32
    %c0_i32_0 = arith.constant 0 : i32
    %c0_i32_1 = arith.constant 0 : i32
    return %arg0, %c0_i32, %c0_i32_0 : i32, i32, i32
  }
}

module attributes {stable_mosaic.version = 11 : i64} {
  func.func @iaff_kernel(%arg0: i32, %arg1: memref<1x64x256xbf16, #tpu.memory_space<vmem>>, %arg2: memref<1x64x256xbf16, #tpu.memory_space<vmem>>, %arg3: memref<32x64xbf16, #tpu.memory_space<vmem>>, %arg4: memref<16x1xf32, #tpu.memory_space<vmem>>, %arg5: memref<16x1xf32, #tpu.memory_space<vmem>>, %arg6: memref<64x16xbf16, #tpu.memory_space<vmem>>, %arg7: memref<64x1xf32, #tpu.memory_space<vmem>>, %arg8: memref<64x16xf32, #tpu.memory_space<vmem>>, %arg9: memref<32x64xbf16, #tpu.memory_space<vmem>>, %arg10: memref<16x1xf32, #tpu.memory_space<vmem>>, %arg11: memref<64x16xbf16, #tpu.memory_space<vmem>>, %arg12: memref<64x1xf32, #tpu.memory_space<vmem>>, %arg13: memref<1x64x256xf32, #tpu.memory_space<vmem>>) attributes {dimension_semantics = [#tpu.dimension_semantics<parallel>], iteration_bounds = array<i64: 2>, scalar_prefetch = 0 : i64, scratch_operands = 0 : i64, tpu.core_type = #tpu.core_type<tc>, window_params = [{transform_indices = @transform_0, window_bounds = array<i64: 1, 64, 256>}, {transform_indices = @transform_1, window_bounds = array<i64: 1, 64, 256>}, {pipeline_mode = #tpu.pipeline_mode<synchronous>, transform_indices = @transform_2, window_bounds = array<i64: 32, 64>}, {pipeline_mode = #tpu.pipeline_mode<synchronous>, transform_indices = @transform_3, window_bounds = array<i64: 16, 1>}, {pipeline_mode = #tpu.pipeline_mode<synchronous>, transform_indices = @transform_4, window_bounds = array<i64: 16, 1>}, {pipeline_mode = #tpu.pipeline_mode<synchronous>, transform_indices = @transform_5, window_bounds = array<i64: 64, 16>}, {pipeline_mode = #tpu.pipeline_mode<synchronous>, transform_indices = @transform_6, window_bounds = array<i64: 64, 1>}, {pipeline_mode = #tpu.pipeline_mode<synchronous>, transform_indices = @transform_7, window_bounds = array<i64: 64, 16>}, {pipeline_mode = #tpu.pipeline_mode<synchronous>, transform_indices = @transform_8, window_bounds = array<i64: 32, 64>}, {pipeline_mode = #tpu.pipeline_mode<synchronous>, transform_indices = @transform_9, window_bounds = array<i64: 16, 1>}, {pipeline_mode = #tpu.pipeline_mode<synchronous>, transform_indices = @transform_10, window_bounds = array<i64: 64, 16>}, {pipeline_mode = #tpu.pipeline_mode<synchronous>, transform_indices = @transform_11, window_bounds = array<i64: 64, 1>}, {transform_indices = @transform_12, window_bounds = array<i64: 1, 64, 256>}]} {
    %c0 = arith.constant 0 : index
    %c0_0 = arith.constant 0 : index
    %c0_1 = arith.constant 0 : index
    %0 = vector.load %arg1[%c0, %c0_0, %c0_1] : memref<1x64x256xbf16, #tpu.memory_space<vmem>>, vector<1x64x256xbf16>
    %1 = vector.shape_cast %0 : vector<1x64x256xbf16> to vector<64x256xbf16>
    %2 = arith.extf %1 : vector<64x256xbf16> to vector<64x256xf32>
    %c0_2 = arith.constant 0 : index
    %c0_3 = arith.constant 0 : index
    %c0_4 = arith.constant 0 : index
    %3 = vector.load %arg2[%c0_2, %c0_3, %c0_4] : memref<1x64x256xbf16, #tpu.memory_space<vmem>>, vector<1x64x256xbf16>
    %4 = vector.shape_cast %3 : vector<1x64x256xbf16> to vector<64x256xbf16>
    %5 = arith.extf %4 : vector<64x256xbf16> to vector<64x256xf32>
    %6 = arith.subf %2, %5 : vector<64x256xf32>
    %7 = arith.addf %2, %5 : vector<64x256xf32>
    %c0_5 = arith.constant 0 : index
    %c0_6 = arith.constant 0 : index
    %8 = vector.load %arg8[%c0_5, %c0_6] : memref<64x16xf32, #tpu.memory_space<vmem>>, vector<64x16xf32>
    %c0_7 = arith.constant 0 : index
    %c0_8 = arith.constant 0 : index
    %9 = vector.load %arg5[%c0_7, %c0_8] : memref<16x1xf32, #tpu.memory_space<vmem>>, vector<16x1xf32>
    %c0_9 = arith.constant 0 : index
    %c0_10 = arith.constant 0 : index
    %10 = vector.load %arg4[%c0_9, %c0_10] : memref<16x1xf32, #tpu.memory_space<vmem>>, vector<16x1xf32>
    %c0_11 = arith.constant 0 : index
    %c0_12 = arith.constant 0 : index
    %11 = vector.load %arg7[%c0_11, %c0_12] : memref<64x1xf32, #tpu.memory_space<vmem>>, vector<64x1xf32>
    %12 = arith.truncf %7 : vector<64x256xf32> to vector<64x256xbf16>
    %c0_13 = arith.constant 0 : index
    %c0_14 = arith.constant 0 : index
    %13 = vector.load %arg3[%c0_13, %c0_14] : memref<32x64xbf16, #tpu.memory_space<vmem>>, vector<32x64xbf16>
    %cst = arith.constant dense<0.000000e+00> : vector<32x256xf32>
    %14 = tpu.matmul %13, %12, %cst {dimension_numbers = #tpu.dot_dimension_numbers<[1], [0], [0], [1], [0, 0, 1, 1], [], []>} : vector<32x64xbf16>, vector<64x256xbf16>, vector<32x256xf32> -> vector<32x256xf32>
    %15 = vector.extract_strided_slice %14 {offsets = [0, 0], sizes = [16, 256], strides = [1, 1]} : vector<32x256xf32> to vector<16x256xf32>
    %16 = vector.broadcast %10 : vector<16x1xf32> to vector<16x256xf32>
    %17 = arith.addf %15, %16 : vector<16x256xf32>
    %cst_15 = arith.constant 0.000000e+00 : f32
    %18 = vector.broadcast %cst_15 : f32 to vector<16x256xf32>
    %19 = arith.maximumf %17, %18 : vector<16x256xf32>
    %20 = vector.extract_strided_slice %14 {offsets = [16, 0], sizes = [16, 256], strides = [1, 1]} : vector<32x256xf32> to vector<16x256xf32>
    %cst_16 = arith.constant dense<0.000000e+00> : vector<16xf32>
    %21 = vector.multi_reduction <add>, %20, %cst_16 [1] : vector<16x256xf32> to vector<16xf32>
    %22 = vector.shape_cast %21 : vector<16xf32> to vector<16x1xf32>
    %cst_17 = arith.constant 3.906250e-03 : f32
    %23 = vector.broadcast %cst_17 : f32 to vector<16x1xf32>
    %24 = arith.mulf %22, %23 : vector<16x1xf32>
    %25 = arith.addf %24, %9 : vector<16x1xf32>
    %cst_18 = arith.constant 0.000000e+00 : f32
    %26 = vector.broadcast %cst_18 : f32 to vector<16x1xf32>
    %27 = arith.maximumf %25, %26 : vector<16x1xf32>
    %cst_19 = arith.constant dense<0.000000e+00> : vector<64x1xf32>
    %28 = tpu.matmul %8, %27, %cst_19 {dimension_numbers = #tpu.dot_dimension_numbers<[1], [0], [0], [1], [0, 0, 1, 1], [], []>} : vector<64x16xf32>, vector<16x1xf32>, vector<64x1xf32> -> vector<64x1xf32>
    %29 = arith.addf %28, %11 : vector<64x1xf32>
    %c0_20 = arith.constant 0 : index
    %c0_21 = arith.constant 0 : index
    %30 = vector.load %arg6[%c0_20, %c0_21] : memref<64x16xbf16, #tpu.memory_space<vmem>>, vector<64x16xbf16>
    %31 = arith.truncf %19 : vector<16x256xf32> to vector<16x256xbf16>
    %cst_22 = arith.constant dense<0.000000e+00> : vector<64x256xf32>
    %32 = tpu.matmul %30, %31, %cst_22 {dimension_numbers = #tpu.dot_dimension_numbers<[1], [0], [0], [1], [0, 0, 1, 1], [], []>} : vector<64x16xbf16>, vector<16x256xbf16>, vector<64x256xf32> -> vector<64x256xf32>
    %33 = vector.broadcast %29 : vector<64x1xf32> to vector<64x256xf32>
    %34 = arith.addf %32, %33 : vector<64x256xf32>
    %cst_23 = arith.constant 0.000000e+00 : f32
    %35 = vector.broadcast %cst_23 : f32 to vector<64x256xf32>
    %36 = arith.subf %35, %34 : vector<64x256xf32>
    %37 = math.exp %36 : vector<64x256xf32>
    %cst_24 = arith.constant 1.000000e+00 : f32
    %38 = vector.broadcast %cst_24 : f32 to vector<64x256xf32>
    %39 = arith.addf %38, %37 : vector<64x256xf32>
    %40 = tpu.reciprocal %39 {approx = true} : vector<64x256xf32> -> vector<64x256xf32>
    %41 = arith.mulf %6, %40 : vector<64x256xf32>
    %42 = arith.addf %5, %41 : vector<64x256xf32>
    %c0_25 = arith.constant 0 : index
    %c0_26 = arith.constant 0 : index
    %43 = vector.load %arg10[%c0_25, %c0_26] : memref<16x1xf32, #tpu.memory_space<vmem>>, vector<16x1xf32>
    %c0_27 = arith.constant 0 : index
    %c0_28 = arith.constant 0 : index
    %44 = vector.load %arg12[%c0_27, %c0_28] : memref<64x1xf32, #tpu.memory_space<vmem>>, vector<64x1xf32>
    %45 = arith.truncf %42 : vector<64x256xf32> to vector<64x256xbf16>
    %c0_29 = arith.constant 0 : index
    %c0_30 = arith.constant 0 : index
    %46 = vector.load %arg9[%c0_29, %c0_30] : memref<32x64xbf16, #tpu.memory_space<vmem>>, vector<32x64xbf16>
    %cst_31 = arith.constant dense<0.000000e+00> : vector<32x256xf32>
    %47 = tpu.matmul %46, %45, %cst_31 {dimension_numbers = #tpu.dot_dimension_numbers<[1], [0], [0], [1], [0, 0, 1, 1], [], []>} : vector<32x64xbf16>, vector<64x256xbf16>, vector<32x256xf32> -> vector<32x256xf32>
    %48 = vector.extract_strided_slice %47 {offsets = [0, 0], sizes = [16, 256], strides = [1, 1]} : vector<32x256xf32> to vector<16x256xf32>
    %49 = vector.broadcast %43 : vector<16x1xf32> to vector<16x256xf32>
    %50 = arith.addf %48, %49 : vector<16x256xf32>
    %cst_32 = arith.constant 0.000000e+00 : f32
    %51 = vector.broadcast %cst_32 : f32 to vector<16x256xf32>
    %52 = arith.maximumf %50, %51 : vector<16x256xf32>
    %53 = vector.extract_strided_slice %47 {offsets = [16, 0], sizes = [16, 256], strides = [1, 1]} : vector<32x256xf32> to vector<16x256xf32>
    %cst_33 = arith.constant dense<0.000000e+00> : vector<16xf32>
    %54 = vector.multi_reduction <add>, %53, %cst_33 [1] : vector<16x256xf32> to vector<16xf32>
    %55 = vector.shape_cast %54 : vector<16xf32> to vector<16x1xf32>
    %cst_34 = arith.constant 3.906250e-03 : f32
    %56 = vector.broadcast %cst_34 : f32 to vector<16x1xf32>
    %57 = arith.mulf %55, %56 : vector<16x1xf32>
    %58 = arith.addf %57, %9 : vector<16x1xf32>
    %cst_35 = arith.constant 0.000000e+00 : f32
    %59 = vector.broadcast %cst_35 : f32 to vector<16x1xf32>
    %60 = arith.maximumf %58, %59 : vector<16x1xf32>
    %cst_36 = arith.constant dense<0.000000e+00> : vector<64x1xf32>
    %61 = tpu.matmul %8, %60, %cst_36 {dimension_numbers = #tpu.dot_dimension_numbers<[1], [0], [0], [1], [0, 0, 1, 1], [], []>} : vector<64x16xf32>, vector<16x1xf32>, vector<64x1xf32> -> vector<64x1xf32>
    %62 = arith.addf %61, %44 : vector<64x1xf32>
    %c0_37 = arith.constant 0 : index
    %c0_38 = arith.constant 0 : index
    %63 = vector.load %arg11[%c0_37, %c0_38] : memref<64x16xbf16, #tpu.memory_space<vmem>>, vector<64x16xbf16>
    %64 = arith.truncf %52 : vector<16x256xf32> to vector<16x256xbf16>
    %cst_39 = arith.constant dense<0.000000e+00> : vector<64x256xf32>
    %65 = tpu.matmul %63, %64, %cst_39 {dimension_numbers = #tpu.dot_dimension_numbers<[1], [0], [0], [1], [0, 0, 1, 1], [], []>} : vector<64x16xbf16>, vector<16x256xbf16>, vector<64x256xf32> -> vector<64x256xf32>
    %66 = vector.broadcast %62 : vector<64x1xf32> to vector<64x256xf32>
    %67 = arith.addf %65, %66 : vector<64x256xf32>
    %cst_40 = arith.constant 0.000000e+00 : f32
    %68 = vector.broadcast %cst_40 : f32 to vector<64x256xf32>
    %69 = arith.subf %68, %67 : vector<64x256xf32>
    %70 = math.exp %69 : vector<64x256xf32>
    %cst_41 = arith.constant 1.000000e+00 : f32
    %71 = vector.broadcast %cst_41 : f32 to vector<64x256xf32>
    %72 = arith.addf %71, %70 : vector<64x256xf32>
    %73 = tpu.reciprocal %72 {approx = true} : vector<64x256xf32> -> vector<64x256xf32>
    %74 = arith.mulf %6, %73 : vector<64x256xf32>
    %75 = arith.addf %5, %74 : vector<64x256xf32>
    %c0_42 = arith.constant 0 : index
    %c0_43 = arith.constant 0 : index
    %c0_44 = arith.constant 0 : index
    %76 = vector.load %arg13[%c0_42, %c0_43, %c0_44] : memref<1x64x256xf32, #tpu.memory_space<vmem>>, vector<1x64x256xf32>
    %77 = vector.shape_cast %76 : vector<1x64x256xf32> to vector<64x256xf32>
    %78 = vector.shape_cast %75 : vector<64x256xf32> to vector<1x64x256xf32>
    tpu.vector_store %arg13[%c0_42, %c0_43, %c0_44], %78 {strides = array<i32>} : memref<1x64x256xf32, #tpu.memory_space<vmem>>, vector<1x64x256xf32>,
    return
  }
  func.func @transform_0(%arg0: i32) -> (i32, i32, i32) {
    %c0_i32 = arith.constant 0 : i32
    %c0_i32_0 = arith.constant 0 : i32
    %c0_i32_1 = arith.constant 0 : i32
    return %arg0, %c0_i32, %c0_i32_0 : i32, i32, i32
  }
  func.func @transform_1(%arg0: i32) -> (i32, i32, i32) {
    %c0_i32 = arith.constant 0 : i32
    %c0_i32_0 = arith.constant 0 : i32
    %c0_i32_1 = arith.constant 0 : i32
    return %arg0, %c0_i32, %c0_i32_0 : i32, i32, i32
  }
  func.func @transform_2(%arg0: i32) -> (i32, i32) {
    %c0_i32 = arith.constant 0 : i32
    %c0_i32_0 = arith.constant 0 : i32
    %c0_i32_1 = arith.constant 0 : i32
    return %c0_i32, %c0_i32_0 : i32, i32
  }
  func.func @transform_3(%arg0: i32) -> (i32, i32) {
    %c0_i32 = arith.constant 0 : i32
    %c0_i32_0 = arith.constant 0 : i32
    %c0_i32_1 = arith.constant 0 : i32
    return %c0_i32, %c0_i32_0 : i32, i32
  }
  func.func @transform_4(%arg0: i32) -> (i32, i32) {
    %c0_i32 = arith.constant 0 : i32
    %c0_i32_0 = arith.constant 0 : i32
    %c0_i32_1 = arith.constant 0 : i32
    return %c0_i32, %c0_i32_0 : i32, i32
  }
  func.func @transform_5(%arg0: i32) -> (i32, i32) {
    %c0_i32 = arith.constant 0 : i32
    %c0_i32_0 = arith.constant 0 : i32
    %c0_i32_1 = arith.constant 0 : i32
    return %c0_i32, %c0_i32_0 : i32, i32
  }
  func.func @transform_6(%arg0: i32) -> (i32, i32) {
    %c0_i32 = arith.constant 0 : i32
    %c0_i32_0 = arith.constant 0 : i32
    %c0_i32_1 = arith.constant 0 : i32
    return %c0_i32, %c0_i32_0 : i32, i32
  }
  func.func @transform_7(%arg0: i32) -> (i32, i32) {
    %c0_i32 = arith.constant 0 : i32
    %c0_i32_0 = arith.constant 0 : i32
    %c0_i32_1 = arith.constant 0 : i32
    return %c0_i32, %c0_i32_0 : i32, i32
  }
  func.func @transform_8(%arg0: i32) -> (i32, i32) {
    %c0_i32 = arith.constant 0 : i32
    %c0_i32_0 = arith.constant 0 : i32
    %c0_i32_1 = arith.constant 0 : i32
    return %c0_i32, %c0_i32_0 : i32, i32
  }
  func.func @transform_9(%arg0: i32) -> (i32, i32) {
    %c0_i32 = arith.constant 0 : i32
    %c0_i32_0 = arith.constant 0 : i32
    %c0_i32_1 = arith.constant 0 : i32
    return %c0_i32, %c0_i32_0 : i32, i32
  }
  func.func @transform_10(%arg0: i32) -> (i32, i32) {
    %c0_i32 = arith.constant 0 : i32
    %c0_i32_0 = arith.constant 0 : i32
    %c0_i32_1 = arith.constant 0 : i32
    return %c0_i32, %c0_i32_0 : i32, i32
  }
  func.func @transform_11(%arg0: i32) -> (i32, i32) {
    %c0_i32 = arith.constant 0 : i32
    %c0_i32_0 = arith.constant 0 : i32
    %c0_i32_1 = arith.constant 0 : i32
    return %c0_i32, %c0_i32_0 : i32, i32
  }
  func.func @transform_12(%arg0: i32) -> (i32, i32, i32) {
    %c0_i32 = arith.constant 0 : i32
    %c0_i32_0 = arith.constant 0 : i32
    %c0_i32_1 = arith.constant 0 : i32
    return %arg0, %c0_i32, %c0_i32_0 : i32, i32, i32
  }
}

</mosaic_0001>

<llo_original>
// kernel: tpu_custom_call.1
$region0: #{tpu_custom_call.1}
  #allocation0 [shape = 'u32[]', space=smem, size = 0x4, offset = 0x4, fixed_abs, tag = 'smem constant byte address 0x4 - core index']
  #allocation1 [shape = 'u32[144,128]{1,0:T(1,128)}', space=vmem, size = 0x12000, scoped, tag = 'internal scratch']
  %s0 = inlined_call_operand.vmem [shape: bf16[2,64,256], index: 0, kind: input, shape index: {}]
  %s1 = inlined_call_operand.vmem [shape: bf16[2,64,256], index: 1, kind: input, shape index: {}]
  %s2 = inlined_call_operand.vmem [shape: bf16[32,64], index: 2, kind: input, shape index: {}]
  %s3 = inlined_call_operand.vmem [shape: f32[16,1], index: 3, kind: input, shape index: {}]
  %s4 = inlined_call_operand.vmem [shape: f32[16,1], index: 4, kind: input, shape index: {}]
  %s5 = inlined_call_operand.vmem [shape: bf16[64,16], index: 5, kind: input, shape index: {}]
  %s6 = inlined_call_operand.vmem [shape: f32[64,1], index: 6, kind: input, shape index: {}]
  %s7 = inlined_call_operand.vmem [shape: f32[64,16], index: 7, kind: input, shape index: {}]
  %s8 = inlined_call_operand.vmem [shape: bf16[32,64], index: 8, kind: input, shape index: {}]
  %s9 = inlined_call_operand.vmem [shape: f32[16,1], index: 9, kind: input, shape index: {}]
  %s10 = inlined_call_operand.vmem [shape: bf16[64,16], index: 10, kind: input, shape index: {}]
  %s11 = inlined_call_operand.vmem [shape: f32[64,1], index: 11, kind: input, shape index: {}]
  %s12 = inlined_call_operand.hbm [shape: f32[2,64,256], index: 12, kind: output, shape index: {}]
  %s13 = sld [smem:[#allocation0]]
  $region81: #{tpu_custom_call.1} parent=0
    _
  %s15 = ssub.s32 1, %s13
  %s16 = scalar_select 0, %s15, %s13
  $region1: #{tpu_custom_call.1} parent=0
    #allocation2 [shape = 'u8[131072]{0}', space=vmem, size = 0x20000, scoped, tag = 'output window, operand 0']
    #allocation3 [shape = 's32[2]{0}', space=sflag, size = 0x8, scoped, tag = 'scoped memory for tpu_custom_call.1']
    %17 = vsyncpa [#allocation3], 0
    %s18 = scalar_lea.sflag [#allocation3], 1
    %19 = vsyncpa %s18, 0
    loop: start=0, step=1, limit=4
    $region2: #{tpu_custom_call.1} parent=1 // loop_pre_header
      _
    $region3: #{tpu_custom_call.1} parent=1 // loop_header
      %s21 = sphi 0, %s25
      %p22 = scmp.ge.s32.totalorder %s21, 4
      %s31 = sphi 0, %s33
      %s34 = sphi 0, %s31
      %s35 = sphi 0, %s34
      %s51 = sphi 0, %s35
      %s57 = sphi 0, %s59
      %s60 = sphi 0, %s57
      %s61 = sphi 0, %s60
      %s77 = sphi 0, %s61
      %s81 = sphi 0, %s81
      %s83 = sphi 0, %s81
      %s84 = sphi 0, %s83
      %s98 = sphi 0, %s84
      %s102 = sphi 0, %s102
      %s104 = sphi 0, %s102
      %s105 = sphi 0, %s104
      %s119 = sphi 0, %s105
      %s123 = sphi 0, %s123
      %s125 = sphi 0, %s123
      %s126 = sphi 0, %s125
      %s140 = sphi 0, %s126
      %s144 = sphi 0, %s144
      %s146 = sphi 0, %s144
      %s147 = sphi 0, %s146
      %s161 = sphi 0, %s147
      %s165 = sphi 0, %s165
      %s167 = sphi 0, %s165
      %s168 = sphi 0, %s167
      %s182 = sphi 0, %s168
      %s186 = sphi 0, %s186
      %s188 = sphi 0, %s186
      %s189 = sphi 0, %s188
      %s203 = sphi 0, %s189
      %s207 = sphi 0, %s207
      %s209 = sphi 0, %s207
      %s210 = sphi 0, %s209
      %s224 = sphi 0, %s210
      %s228 = sphi 0, %s228
      %s230 = sphi 0, %s228
      %s231 = sphi 0, %s230
      %s245 = sphi 0, %s231
      %s249 = sphi 0, %s249
      %s251 = sphi 0, %s249
      %s252 = sphi 0, %s251
      %s266 = sphi 0, %s252
      %s270 = sphi 0, %s270
      %s272 = sphi 0, %s270
      %s273 = sphi 0, %s272
      %s287 = sphi 0, %s273
      %s293 = sphi 0, %s295
      %s296 = sphi 0, %s293
      %s297 = sphi 0, %s296
      %s313 = sphi 0, %s297
    $region4: #{tpu_custom_call.1} parent=1 // loop_header_branch
      %24 = sbr.rel (%p22) target = $region8
    $region5: #{tpu_custom_call.1} parent=1 // loop_body
      %s26 = ssub.s32 %s21, 1
      %s27 = ssub.s32 %s21, 2
      %s28 = sadd.s32 %s21, 1
      %s29 = ssub.s32 %s21, %s28
      %p30 = scmp.eq.s32.totalorder %s29, 0
      %s32 = sadd.s32 %s31, 1
      %s33 = scalar_select %p30, %s31, %s32
      %p36 = pneg %p30
      %p37 = scmp.eq.s32.totalorder %s21, 1
      %p38 = por %p36, %p37
      %p39 = scmp.ne.s32.totalorder %s31, %s34
      %p40 = scmp.eq.s32.totalorder %s21, 0
      %p41 = por %p39, %p40
      %p42 = scmp.ne.s32.totalorder %s31, %s34
      %p43 = scmp.eq.s32.totalorder %s26, 1
      %p44 = por %p42, %p43
      %p45 = scmp.ne.s32.totalorder %s34, %s35
      %p46 = scmp.eq.s32.totalorder %s26, 0
      %p47 = por %p45, %p46
      %p48 = scmp.ne.s32.totalorder %s34, %s35
      %p49 = scmp.eq.s32.totalorder %s27, 1
      %p50 = por %p48, %p49
      %p52 = scmp.ne.s32.totalorder %s35, %s51
      %p53 = scmp.eq.s32.totalorder %s27, 0
      %p54 = por %p52, %p53
      %s55 = ssub.s32 %s21, %s28
      %p56 = scmp.eq.s32.totalorder %s55, 0
      %s58 = sadd.s32 %s57, 1
      %s59 = scalar_select %p56, %s57, %s58
      %p62 = pneg %p56
      %p63 = scmp.eq.s32.totalorder %s21, 1
      %p64 = por %p62, %p63
      %p65 = scmp.ne.s32.totalorder %s57, %s60
      %p66 = scmp.eq.s32.totalorder %s21, 0
      %p67 = por %p65, %p66
      %p68 = scmp.ne.s32.totalorder %s57, %s60
      %p69 = scmp.eq.s32.totalorder %s26, 1
      %p70 = por %p68, %p69
      %p71 = scmp.ne.s32.totalorder %s60, %s61
      %p72 = scmp.eq.s32.totalorder %s26, 0
      %p73 = por %p71, %p72
      %p74 = scmp.ne.s32.totalorder %s60, %s61
      %p75 = scmp.eq.s32.totalorder %s27, 1
      %p76 = por %p74, %p75
      %p78 = scmp.ne.s32.totalorder %s61, %s77
      %p79 = scmp.eq.s32.totalorder %s27, 0
      %p80 = por %p78, %p79
      %s82 = sadd.s32 %s81, 1
      %p85 = scmp.eq.s32.totalorder %s21, 1
      %p86 = scmp.ne.s32.totalorder %s81, %s83
      %p87 = scmp.eq.s32.totalorder %s21, 0
      %p88 = por %p86, %p87
      %p89 = scmp.ne.s32.totalorder %s81, %s83
      %p90 = scmp.eq.s32.totalorder %s26, 1
      %p91 = por %p89, %p90
      %p92 = scmp.ne.s32.totalorder %s83, %s84
      %p93 = scmp.eq.s32.totalorder %s26, 0
      %p94 = por %p92, %p93
      %p95 = scmp.ne.s32.totalorder %s83, %s84
      %p96 = scmp.eq.s32.totalorder %s27, 1
      %p97 = por %p95, %p96
      %p99 = scmp.ne.s32.totalorder %s84, %s98
      %p100 = scmp.eq.s32.totalorder %s27, 0
      %p101 = por %p99, %p100
      %s103 = sadd.s32 %s102, 1
      %p106 = scmp.eq.s32.totalorder %s21, 1
      %p107 = scmp.ne.s32.totalorder %s102, %s104
      %p108 = scmp.eq.s32.totalorder %s21, 0
      %p109 = por %p107, %p108
      %p110 = scmp.ne.s32.totalorder %s102, %s104
      %p111 = scmp.eq.s32.totalorder %s26, 1
      %p112 = por %p110, %p111
      %p113 = scmp.ne.s32.totalorder %s104, %s105
      %p114 = scmp.eq.s32.totalorder %s26, 0
      %p115 = por %p113, %p114
      %p116 = scmp.ne.s32.totalorder %s104, %s105
      %p117 = scmp.eq.s32.totalorder %s27, 1
      %p118 = por %p116, %p117
      %p120 = scmp.ne.s32.totalorder %s105, %s119
      %p121 = scmp.eq.s32.totalorder %s27, 0
      %p122 = por %p120, %p121
      %s124 = sadd.s32 %s123, 1
      %p127 = scmp.eq.s32.totalorder %s21, 1
      %p128 = scmp.ne.s32.totalorder %s123, %s125
      %p129 = scmp.eq.s32.totalorder %s21, 0
      %p130 = por %p128, %p129
      %p131 = scmp.ne.s32.totalorder %s123, %s125
      %p132 = scmp.eq.s32.totalorder %s26, 1
      %p133 = por %p131, %p132
      %p134 = scmp.ne.s32.totalorder %s125, %s126
      %p135 = scmp.eq.s32.totalorder %s26, 0
      %p136 = por %p134, %p135
      %p137 = scmp.ne.s32.totalorder %s125, %s126
      %p138 = scmp.eq.s32.totalorder %s27, 1
      %p139 = por %p137, %p138
      %p141 = scmp.ne.s32.totalorder %s126, %s140
      %p142 = scmp.eq.s32.totalorder %s27, 0
      %p143 = por %p141, %p142
      %s145 = sadd.s32 %s144, 1
      %p148 = scmp.eq.s32.totalorder %s21, 1
      %p149 = scmp.ne.s32.totalorder %s144, %s146
      %p150 = scmp.eq.s32.totalorder %s21, 0
      %p151 = por %p149, %p150
      %p152 = scmp.ne.s32.totalorder %s144, %s146
      %p153 = scmp.eq.s32.totalorder %s26, 1
      %p154 = por %p152, %p153
      %p155 = scmp.ne.s32.totalorder %s146, %s147
      %p156 = scmp.eq.s32.totalorder %s26, 0
      %p157 = por %p155, %p156
      %p158 = scmp.ne.s32.totalorder %s146, %s147
      %p159 = scmp.eq.s32.totalorder %s27, 1
      %p160 = por %p158, %p159
      %p162 = scmp.ne.s32.totalorder %s147, %s161
      %p163 = scmp.eq.s32.totalorder %s27, 0
      %p164 = por %p162, %p163
      %s166 = sadd.s32 %s165, 1
      %p169 = scmp.eq.s32.totalorder %s21, 1
      %p170 = scmp.ne.s32.totalorder %s165, %s167
      %p171 = scmp.eq.s32.totalorder %s21, 0
      %p172 = por %p170, %p171
      %p173 = scmp.ne.s32.totalorder %s165, %s167
      %p174 = scmp.eq.s32.totalorder %s26, 1
      %p175 = por %p173, %p174
      %p176 = scmp.ne.s32.totalorder %s167, %s168
      %p177 = scmp.eq.s32.totalorder %s26, 0
      %p178 = por %p176, %p177
      %p179 = scmp.ne.s32.totalorder %s167, %s168
      %p180 = scmp.eq.s32.totalorder %s27, 1
      %p181 = por %p179, %p180
      %p183 = scmp.ne.s32.totalorder %s168, %s182
      %p184 = scmp.eq.s32.totalorder %s27, 0
      %p185 = por %p183, %p184
      %s187 = sadd.s32 %s186, 1
      %p190 = scmp.eq.s32.totalorder %s21, 1
      %p191 = scmp.ne.s32.totalorder %s186, %s188
      %p192 = scmp.eq.s32.totalorder %s21, 0
      %p193 = por %p191, %p192
      %p194 = scmp.ne.s32.totalorder %s186, %s188
      %p195 = scmp.eq.s32.totalorder %s26, 1
      %p196 = por %p194, %p195
      %p197 = scmp.ne.s32.totalorder %s188, %s189
      %p198 = scmp.eq.s32.totalorder %s26, 0
      %p199 = por %p197, %p198
      %p200 = scmp.ne.s32.totalorder %s188, %s189
      %p201 = scmp.eq.s32.totalorder %s27, 1
      %p202 = por %p200, %p201
      %p204 = scmp.ne.s32.totalorder %s189, %s203
      %p205 = scmp.eq.s32.totalorder %s27, 0
      %p206 = por %p204, %p205
      %s208 = sadd.s32 %s207, 1
      %p211 = scmp.eq.s32.totalorder %s21, 1
      %p212 = scmp.ne.s32.totalorder %s207, %s209
      %p213 = scmp.eq.s32.totalorder %s21, 0
      %p214 = por %p212, %p213
      %p215 = scmp.ne.s32.totalorder %s207, %s209
      %p216 = scmp.eq.s32.totalorder %s26, 1
      %p217 = por %p215, %p216
      %p218 = scmp.ne.s32.totalorder %s209, %s210
      %p219 = scmp.eq.s32.totalorder %s26, 0
      %p220 = por %p218, %p219
      %p221 = scmp.ne.s32.totalorder %s209, %s210
      %p222 = scmp.eq.s32.totalorder %s27, 1
      %p223 = por %p221, %p222
      %p225 = scmp.ne.s32.totalorder %s210, %s224
      %p226 = scmp.eq.s32.totalorder %s27, 0
      %p227 = por %p225, %p226
      %s229 = sadd.s32 %s228, 1
      %p232 = scmp.eq.s32.totalorder %s21, 1
      %p233 = scmp.ne.s32.totalorder %s228, %s230
      %p234 = scmp.eq.s32.totalorder %s21, 0
      %p235 = por %p233, %p234
      %p236 = scmp.ne.s32.totalorder %s228, %s230
      %p237 = scmp.eq.s32.totalorder %s26, 1
      %p238 = por %p236, %p237
      %p239 = scmp.ne.s32.totalorder %s230, %s231
      %p240 = scmp.eq.s32.totalorder %s26, 0
      %p241 = por %p239, %p240
      %p242 = scmp.ne.s32.totalorder %s230, %s231
      %p243 = scmp.eq.s32.totalorder %s27, 1
      %p244 = por %p242, %p243
      %p246 = scmp.ne.s32.totalorder %s231, %s245
      %p247 = scmp.eq.s32.totalorder %s27, 0
      %p248 = por %p246, %p247
      %s250 = sadd.s32 %s249, 1
      %p253 = scmp.eq.s32.totalorder %s21, 1
      %p254 = scmp.ne.s32.totalorder %s249, %s251
      %p255 = scmp.eq.s32.totalorder %s21, 0
      %p256 = por %p254, %p255
      %p257 = scmp.ne.s32.totalorder %s249, %s251
      %p258 = scmp.eq.s32.totalorder %s26, 1
      %p259 = por %p257, %p258
      %p260 = scmp.ne.s32.totalorder %s251, %s252
      %p261 = scmp.eq.s32.totalorder %s26, 0
      %p262 = por %p260, %p261
      %p263 = scmp.ne.s32.totalorder %s251, %s252
      %p264 = scmp.eq.s32.totalorder %s27, 1
      %p265 = por %p263, %p264
      %p267 = scmp.ne.s32.totalorder %s252, %s266
      %p268 = scmp.eq.s32.totalorder %s27, 0
      %p269 = por %p267, %p268
      %s271 = sadd.s32 %s270, 1
      %p274 = scmp.eq.s32.totalorder %s21, 1
      %p275 = scmp.ne.s32.totalorder %s270, %s272
      %p276 = scmp.eq.s32.totalorder %s21, 0
      %p277 = por %p275, %p276
      %p278 = scmp.ne.s32.totalorder %s270, %s272
      %p279 = scmp.eq.s32.totalorder %s26, 1
      %p280 = por %p278, %p279
      %p281 = scmp.ne.s32.totalorder %s272, %s273
      %p282 = scmp.eq.s32.totalorder %s26, 0
      %p283 = por %p281, %p282
      %p284 = scmp.ne.s32.totalorder %s272, %s273
      %p285 = scmp.eq.s32.totalorder %s27, 1
      %p286 = por %p284, %p285
      %p288 = scmp.ne.s32.totalorder %s273, %s287
      %p289 = scmp.eq.s32.totalorder %s27, 0
      %p290 = por %p288, %p289
      %s291 = ssub.s32 %s21, %s28
      %p292 = scmp.eq.s32.totalorder %s291, 0
      %s294 = sadd.s32 %s293, 1
      %s295 = scalar_select %p292, %s293, %s294
      %p298 = pneg %p292
      %p299 = scmp.eq.s32.totalorder %s21, 1
      %p300 = por %p298, %p299
      %p301 = scmp.ne.s32.totalorder %s293, %s296
      %p302 = scmp.eq.s32.totalorder %s21, 0
      %p303 = por %p301, %p302
      %p304 = scmp.ne.s32.totalorder %s293, %s296
      %p305 = scmp.eq.s32.totalorder %s26, 1
      %p306 = por %p304, %p305
      %p307 = scmp.ne.s32.totalorder %s296, %s297
      %p308 = scmp.eq.s32.totalorder %s26, 0
      %p309 = por %p307, %p308
      %p310 = scmp.ne.s32.totalorder %s296, %s297
      %p311 = scmp.eq.s32.totalorder %s27, 1
      %p312 = por %p310, %p311
      %p314 = scmp.ne.s32.totalorder %s297, %s313
      %p315 = scmp.eq.s32.totalorder %s27, 0
      %p316 = por %p314, %p315
      %p317 = scmp.le.s32.totalorder 1, %s21
      %p318 = scmp.lt.s32.totalorder %s21, 3
      %p319 = pnand %p317, %p318
      %p320 = pneg %p319
      // Predicated region
      $region9: #{tpu_custom_call.1} parent=5 // pred_check
        _
      $region10: #{tpu_custom_call.1} parent=5 // pred_check_branch
        %322 = sbr.rel (%p319) target = $region12
      $region11: #{tpu_custom_call.1} parent=5 // pred_region
        %s323 = ssub.s32 %s21, 1
        // Predicated region
        $region13: #{tpu_custom_call.1} parent=11 // pred_check
          %p324 = pneg %p94
        $region14: #{tpu_custom_call.1} parent=11 // pred_check_branch
          %326 = sbr.rel (%p324) target = $region16
        $region15: #{tpu_custom_call.1} parent=11 // pred_region
          _
        $region16: #{tpu_custom_call.1} parent=11 // pred_fallthru
          _
        // Predicated region
        $region17: #{tpu_custom_call.1} parent=11 // pred_check
          %p327 = pneg %p115
        $region18: #{tpu_custom_call.1} parent=11 // pred_check_branch
          %329 = sbr.rel (%p327) target = $region20
        $region19: #{tpu_custom_call.1} parent=11 // pred_region
          _
        $region20: #{tpu_custom_call.1} parent=11 // pred_fallthru
          _
        // Predicated region
        $region21: #{tpu_custom_call.1} parent=11 // pred_check
          %p330 = pneg %p136
        $region22: #{tpu_custom_call.1} parent=11 // pred_check_branch
          %332 = sbr.rel (%p330) target = $region24
        $region23: #{tpu_custom_call.1} parent=11 // pred_region
          _
        $region24: #{tpu_custom_call.1} parent=11 // pred_fallthru
          _
        // Predicated region
        $region25: #{tpu_custom_call.1} parent=11 // pred_check
          %p333 = pneg %p157
        $region26: #{tpu_custom_call.1} parent=11 // pred_check_branch
          %335 = sbr.rel (%p333) target = $region28
        $region27: #{tpu_custom_call.1} parent=11 // pred_region
          _
        $region28: #{tpu_custom_call.1} parent=11 // pred_fallthru
          _
        // Predicated region
        $region29: #{tpu_custom_call.1} parent=11 // pred_check
          %p336 = pneg %p178
        $region30: #{tpu_custom_call.1} parent=11 // pred_check_branch
          %338 = sbr.rel (%p336) target = $region32
        $region31: #{tpu_custom_call.1} parent=11 // pred_region
          _
        $region32: #{tpu_custom_call.1} parent=11 // pred_fallthru
          _
        // Predicated region
        $region33: #{tpu_custom_call.1} parent=11 // pred_check
          %p339 = pneg %p199
        $region34: #{tpu_custom_call.1} parent=11 // pred_check_branch
          %341 = sbr.rel (%p339) target = $region36
        $region35: #{tpu_custom_call.1} parent=11 // pred_region
          _
        $region36: #{tpu_custom_call.1} parent=11 // pred_fallthru
          _
        // Predicated region
        $region37: #{tpu_custom_call.1} parent=11 // pred_check
          %p342 = pneg %p220
        $region38: #{tpu_custom_call.1} parent=11 // pred_check_branch
          %344 = sbr.rel (%p342) target = $region40
        $region39: #{tpu_custom_call.1} parent=11 // pred_region
          _
        $region40: #{tpu_custom_call.1} parent=11 // pred_fallthru
          _
        // Predicated region
        $region41: #{tpu_custom_call.1} parent=11 // pred_check
          %p345 = pneg %p241
        $region42: #{tpu_custom_call.1} parent=11 // pred_check_branch
          %347 = sbr.rel (%p345) target = $region44
        $region43: #{tpu_custom_call.1} parent=11 // pred_region
          _
        $region44: #{tpu_custom_call.1} parent=11 // pred_fallthru
          _
        // Predicated region
        $region45: #{tpu_custom_call.1} parent=11 // pred_check
          %p348 = pneg %p262
        $region46: #{tpu_custom_call.1} parent=11 // pred_check_branch
          %350 = sbr.rel (%p348) target = $region48
        $region47: #{tpu_custom_call.1} parent=11 // pred_region
          _
        $region48: #{tpu_custom_call.1} parent=11 // pred_fallthru
          _
        // Predicated region
        $region49: #{tpu_custom_call.1} parent=11 // pred_check
          %p351 = pneg %p283
        $region50: #{tpu_custom_call.1} parent=11 // pred_check_branch
          %353 = sbr.rel (%p351) target = $region52
        $region51: #{tpu_custom_call.1} parent=11 // pred_region
          _
        $region52: #{tpu_custom_call.1} parent=11 // pred_fallthru
          _
      $region12: #{tpu_custom_call.1} parent=5 // pred_fallthru
        _
      %p354 = scmp.lt.s32.totalorder %s21, 2
      // Predicated region
      $region53: #{tpu_custom_call.1} parent=5 // pred_check
        %p355 = pneg %p354
      $region54: #{tpu_custom_call.1} parent=5 // pred_check_branch
        %357 = sbr.rel (%p355) target = $region56
      $region55: #{tpu_custom_call.1} parent=5 // pred_region
        // Predicated region
        $region57: #{tpu_custom_call.1} parent=55 // pred_check
          %p358 = pneg %p41
        $region58: #{tpu_custom_call.1} parent=55 // pred_check_branch
          %360 = sbr.rel (%p358) target = $region60
        $region59: #{tpu_custom_call.1} parent=55 // pred_region
          %p361 = scmp.lt.s32.totalorder %s21, 1
          %s362 = scalar_select %p361, %s21, 1
          %s363 = smul.addr %s362, 16
          %s364 = smul.addr %s363, 4
          %s365 = scalar_lea.vmem %s0, %s364
        $region60: #{tpu_custom_call.1} parent=55 // pred_fallthru
          _
        // Predicated region
        $region61: #{tpu_custom_call.1} parent=55 // pred_check
          %p366 = pneg %p67
        $region62: #{tpu_custom_call.1} parent=55 // pred_check_branch
          %368 = sbr.rel (%p366) target = $region64
        $region63: #{tpu_custom_call.1} parent=55 // pred_region
          %p369 = scmp.lt.s32.totalorder %s21, 1
          %s370 = scalar_select %p369, %s21, 1
          %s371 = smul.addr %s370, 16
          %s372 = smul.addr %s371, 4
          %s373 = scalar_lea.vmem %s1, %s372
        $region64: #{tpu_custom_call.1} parent=55 // pred_fallthru
          _
      $region56: #{tpu_custom_call.1} parent=5 // pred_fallthru
        _
      %p374 = scmp.le.s32.totalorder 1, %s21
      %p375 = scmp.lt.s32.totalorder %s21, 3
      %p376 = pnand %p374, %p375
      %p377 = pneg %p376
      // Predicated region
      $region65: #{tpu_custom_call.1} parent=5 // pred_check
        _
      $region66: #{tpu_custom_call.1} parent=5 // pred_check_branch
        %379 = sbr.rel (%p376) target = $region68
      $region67: #{tpu_custom_call.1} parent=5 // pred_region
        %s380 = ssub.s32 %s21, 1
        %p381 = scmp.lt.s32.totalorder %s26, 1
        %s382 = scalar_select %p381, %s26, 1
        %s383 = smul.addr %s382, 16
        %s384 = smul.addr %s383, 4
        %s385 = scalar_lea.vmem %s0, %s384
        %p386 = pneg %p47
        %p387 = pneg %p44
        %p388 = scmp.lt.s32.totalorder %s26, 1
        %s389 = scalar_select %p388, %s26, 1
        %s390 = smul.addr %s389, 16
        %s391 = smul.addr %s390, 4
        %s392 = scalar_lea.vmem %s1, %s391
        %p393 = pneg %p73
        %p394 = pneg %p70
        %p395 = pneg %p94
        %p396 = pneg %p91
        %p397 = pneg %p115
        %p398 = pneg %p112
        %p399 = pneg %p136
        %p400 = pneg %p133
        %p401 = pneg %p157
        %p402 = pneg %p154
        %p403 = pneg %p178
        %p404 = pneg %p175
        %p405 = pneg %p199
        %p406 = pneg %p196
        %p407 = pneg %p220
        %p408 = pneg %p217
        %p409 = pneg %p241
        %p410 = pneg %p238
        %p411 = pneg %p262
        %p412 = pneg %p259
        %p413 = pneg %p283
        %p414 = pneg %p280
        %p415 = pneg %p309
        %p416 = pneg %p306
        %s417 = sand.u32 %s296, 1
        %s418 = scalar_lea.sflag [#allocation3], %s417
        %s419 = sand.u32 %s296, 1
        %s420 = smul.addr %s419, 128
        %s421 = scalar_lea.vmem [#allocation2], %s420
        %p422 = scmp.lt.s32.totalorder %s26, 1
        %s423 = scalar_select %p422, %s26, 1
        %s424 = smul.addr %s423, 16
        %s425 = smul.addr %s424, 4
        %s426 = scalar_lea.vmem %s0, %s425
        %p427 = scmp.lt.s32.totalorder %s26, 1
        %s428 = scalar_select %p427, %s26, 1
        %s429 = smul.addr %s428, 16
        %s430 = smul.addr %s429, 4
        %s431 = scalar_lea.vmem %s1, %s430
        %v433 = vld [vmem:[%s426] sm:$0xff]
        %v434 = vld [vmem:[%s426 + $0x8] sm:$0xff]
        %v435 = vld [vmem:[%s426 + $0x10] sm:$0xff]
        %v436 = vld [vmem:[%s426 + $0x18] sm:$0xff]
        %v437 = vld [vmem:[%s426 + $0x20] sm:$0xff]
        %v438 = vld [vmem:[%s426 + $0x28] sm:$0xff]
        %v439 = vld [vmem:[%s426 + $0x30] sm:$0xff]
        %v440 = vld [vmem:[%s426 + $0x38] sm:$0xff]
        %v441 = vunpack.c.l.bf16 %v433
        %v442 = vunpack.c.h.bf16 %v433
        %v443 = vunpack.c.l.bf16 %v434
        %v444 = vunpack.c.h.bf16 %v434
        %v445 = vunpack.c.l.bf16 %v435
        %v446 = vunpack.c.h.bf16 %v435
        %v447 = vunpack.c.l.bf16 %v436
        %v448 = vunpack.c.h.bf16 %v436
        %v449 = vunpack.c.l.bf16 %v437
        %v450 = vunpack.c.h.bf16 %v437
        %v451 = vunpack.c.l.bf16 %v438
        %v452 = vunpack.c.h.bf16 %v438
        %v453 = vunpack.c.l.bf16 %v439
        %v454 = vunpack.c.h.bf16 %v439
        %v455 = vunpack.c.l.bf16 %v440
        %v456 = vunpack.c.h.bf16 %v440
        %v457 = vld [vmem:[%s431] sm:$0xff]
        %v458 = vld [vmem:[%s431 + $0x8] sm:$0xff]
        %v459 = vld [vmem:[%s431 + $0x10] sm:$0xff]
        %v460 = vld [vmem:[%s431 + $0x18] sm:$0xff]
        %v461 = vld [vmem:[%s431 + $0x20] sm:$0xff]
        %v462 = vld [vmem:[%s431 + $0x28] sm:$0xff]
        %v463 = vld [vmem:[%s431 + $0x30] sm:$0xff]
        %v464 = vld [vmem:[%s431 + $0x38] sm:$0xff]
        %v465 = vunpack.c.l.bf16 %v457
        %v466 = vunpack.c.h.bf16 %v457
        %v467 = vunpack.c.l.bf16 %v458
        %v468 = vunpack.c.h.bf16 %v458
        %v469 = vunpack.c.l.bf16 %v459
        %v470 = vunpack.c.h.bf16 %v459
        %v471 = vunpack.c.l.bf16 %v460
        %v472 = vunpack.c.h.bf16 %v460
        %v473 = vunpack.c.l.bf16 %v461
        %v474 = vunpack.c.h.bf16 %v461
        %v475 = vunpack.c.l.bf16 %v462
        %v476 = vunpack.c.h.bf16 %v462
        %v477 = vunpack.c.l.bf16 %v463
        %v478 = vunpack.c.h.bf16 %v463
        %v479 = vunpack.c.l.bf16 %v464
        %v480 = vunpack.c.h.bf16 %v464
        %v481 = vsub.f32 %v441, %v465
        %v482 = vsub.f32 %v442, %v466
        %v483 = vsub.f32 %v443, %v467
        %v484 = vsub.f32 %v444, %v468
        %v485 = vsub.f32 %v445, %v469
        %v486 = vsub.f32 %v446, %v470
        %v487 = vsub.f32 %v447, %v471
        %v488 = vsub.f32 %v448, %v472
        %v489 = vsub.f32 %v449, %v473
        %v490 = vsub.f32 %v450, %v474
        %v491 = vsub.f32 %v451, %v475
        %v492 = vsub.f32 %v452, %v476
        %v493 = vsub.f32 %v453, %v477
        %v494 = vsub.f32 %v454, %v478
        %v495 = vsub.f32 %v455, %v479
        %v496 = vsub.f32 %v456, %v480
        %v497 = vadd.f32 %v441, %v465
        %v498 = vadd.f32 %v442, %v466
        %v499 = vadd.f32 %v443, %v467
        %v500 = vadd.f32 %v444, %v468
        %v501 = vadd.f32 %v445, %v469
        %v502 = vadd.f32 %v446, %v470
        %v503 = vadd.f32 %v447, %v471
        %v504 = vadd.f32 %v448, %v472
        %v505 = vadd.f32 %v449, %v473
        %v506 = vadd.f32 %v450, %v474
        %v507 = vadd.f32 %v451, %v475
        %v508 = vadd.f32 %v452, %v476
        %v509 = vadd.f32 %v453, %v477
        %v510 = vadd.f32 %v454, %v478
        %v511 = vadd.f32 %v455, %v479
        %v512 = vadd.f32 %v456, %v480
        %v513 = vld [vmem:[%s7] sm:$0xff]
        %v514 = vld [vmem:[%s7 + $0x8] sm:$0xff]
        %v515 = vld [vmem:[%s7 + $0x10] sm:$0xff]
        %v516 = vld [vmem:[%s7 + $0x18] sm:$0xff]
        %v517 = vld [vmem:[%s7 + $0x20] sm:$0xff]
        %v518 = vld [vmem:[%s7 + $0x28] sm:$0xff]
        %v519 = vld [vmem:[%s7 + $0x30] sm:$0xff]
        %v520 = vld [vmem:[%s7 + $0x38] sm:$0xff]
        %v521 = vld [vmem:[%s4] sm:$0xff]
        %v522 = vld [vmem:[%s4 + $0x8] sm:$0xff]
        %v523 = vld [vmem:[%s3] sm:$0xff]
        %v524 = vld [vmem:[%s3 + $0x8] sm:$0xff]
        %v525 = vld [vmem:[%s6] sm:$0xff]
        %v526 = vld [vmem:[%s6 + $0x8] sm:$0xff]
        %v527 = vld [vmem:[%s6 + $0x10] sm:$0xff]
        %v528 = vld [vmem:[%s6 + $0x18] sm:$0xff]
        %v529 = vld [vmem:[%s6 + $0x20] sm:$0xff]
        %v530 = vld [vmem:[%s6 + $0x28] sm:$0xff]
        %v531 = vld [vmem:[%s6 + $0x30] sm:$0xff]
        %v532 = vld [vmem:[%s6 + $0x38] sm:$0xff]
        %v533 = vpack.c.bf16 %v499, %v497
        %v534 = vpack.c.bf16 %v500, %v498
        %v535 = vpack.c.bf16 %v503, %v501
        %v536 = vpack.c.bf16 %v504, %v502
        %v537 = vpack.c.bf16 %v507, %v505
        %v538 = vpack.c.bf16 %v508, %v506
        %v539 = vpack.c.bf16 %v511, %v509
        %v540 = vpack.c.bf16 %v512, %v510
        %v541 = vld [vmem:[%s2] sm:$0xf]
        %v542 = vld [vmem:[%s2 + $0x4] sm:$0xf]
        %v543 = vld [vmem:[%s2 + $0x8] sm:$0xf]
        %v544 = vld [vmem:[%s2 + $0xc] sm:$0xf]
        %v549 = vunpack.c.l.b16 %v541
        %v550 = vunpack.c.l.b16 %v542
        %v551 = vunpack.c.l.b16 %v543
        %v552 = vunpack.c.l.b16 %v544
        %v553 = vpack.c.b16 %v550, %v549
        %v554 = vpack.c.b16 %v552, %v551
        %vm555 = vcmask 523264
        %v557 = vsel %vm555, %v553, 0
        %v560 = vsel %vm555, %v554, 0
        %562 = vmatprep.subr.bf16.mxu0 0
        %563 = vmatpush1.bf16.msra.mxu0 0
        %564 = vmatprep.subr.bf16.mxu0 0
        %565 = vmatpush1.bf16.msra.mxu0 0
        %566 = vmatprep.subr.bf16.mxu0 0
        %567 = vmatpush1.bf16.msra.mxu0 0
        %568 = vmatprep.subr.bf16.mxu0 0
        %569 = vmatpush1.bf16.msra.mxu0 0
        %570 = vmatprep.subr.bf16.mxu0 %v540
        %571 = vmatpush1.bf16.msra.mxu0 %v539
        %572 = vmatprep.subr.bf16.mxu0 %v538
        %573 = vmatpush1.bf16.msra.mxu0 %v537
        %574 = vmatprep.subr.bf16.mxu0 %v536
        %575 = vmatpush1.bf16.msra.mxu0 %v535
        %576 = vmatprep.subr.bf16.mxu0 %v534
        %577 = vmatpush1.bf16.msra.mxu0 %v533
        %578 = vmatprep.subr.bf16.mxu0 0
        %579 = vmatpush2.bf16.msra.mxu0 0
        %580 = vmatprep.subr.bf16.mxu0 0
        %581 = vmatpush2.bf16.msra.mxu0 0
        %582 = vmatprep.subr.bf16.mxu0 0
        %583 = vmatpush2.bf16.msra.mxu0 0
        %584 = vmatprep.subr.bf16.mxu0 0
        %585 = vmatpush2.bf16.msra.mxu0 0
        %586 = vmatprep.subr.bf16.mxu0 0
        %587 = vmatpush2.bf16.msra.mxu0 0
        %588 = vmatprep.subr.bf16.mxu0 0
        %589 = vmatpush2.bf16.msra.mxu0 0
        %590 = vmatprep.subr.bf16.mxu0 0
        %591 = vmatpush2.bf16.msra.mxu0 0
        %592 = vmatprep.subr.bf16.mxu0 0
        %593 = vmatpush2.bf16.msra.mxu0 0
        %594 = vmatprep.mubr.bf16.mxu0 0
        %595 = vmatmul.mubr.bf16.gmra.mxu0 %v557
        %v596 = vpop.f32.mrf.mxu0
        %v597 = vadd.f32 0.0, %v596
        %v598 = vpop.f32.mrf.mxu0
        %v599 = vadd.f32 0.0, %v598
        %v600 = vpop.f32.mrf.mxu0
        %v601 = vadd.f32 0.0, %v600
        %v602 = vpop.f32.mrf.mxu0
        %v603 = vadd.f32 0.0, %v602
        %604 = vmatprep.mubr.bf16.mxu0 0
        %605 = vmatmul.mubr.bf16.gmra.mxu0 %v560
        %v606 = vpop.f32.mrf.mxu0
        %v607 = vadd.f32 0.0, %v606
        %v608 = vpop.f32.mrf.mxu0
        %v609 = vadd.f32 0.0, %v608
        %v610 = vpop.f32.mrf.mxu0
        %v611 = vadd.f32 0.0, %v610
        %v612 = vpop.f32.mrf.mxu0
        %v613 = vadd.f32 0.0, %v612
        %614 = vdwg.mxu0
        %616 = vset.pattern.permute.xlu0 0
        %617 = vperm.xlu0 %616, %v523
        %v618 = vpop.permute.xlu0 %617
        %621 = vset.pattern.permute.xlu0 0
        %622 = vperm.xlu0 %621, %v524
        %v623 = vpop.permute.xlu0 %622
        %v625 = vadd.f32 %v597, %v618
        %v626 = vadd.f32 %v599, %v618
        %v627 = vadd.f32 %v601, %v623
        %v628 = vadd.f32 %v603, %v623
        %v629 = vmax.f32 %v625, 0.0
        %v630 = vmax.f32 %v626, 0.0
        %v631 = vmax.f32 %v627, 0.0
        %v632 = vmax.f32 %v628, 0.0
        %v633 = vadd.f32 %v607, %v609
        %634 = vadd.xlane.f32.xlu0 %v633
        %v635 = vpop.xlane.xlu0 %634
        %v636 = vadd.f32 %v611, %v613
        %637 = vadd.xlane.f32.xlu0 %v636
        %v638 = vpop.xlane.xlu0 %637
        %v639 = vmul.f32 %v635, 0.00390625
        %v640 = vmul.f32 %v638, 0.00390625
        %v641 = vadd.f32 %v639, %v521
        %v642 = vadd.f32 %v640, %v522
        %v643 = vmax.f32 %v641, 0.0
        %v644 = vmax.f32 %v642, 0.0
        %vm645 = vcmask 130048
        %v647 = vsel %vm645, %v513, 0
        %v650 = vsel %vm645, %v514, 0
        %v653 = vsel %vm645, %v515, 0
        %v656 = vsel %vm645, %v516, 0
        %v659 = vsel %vm645, %v517, 0
        %v662 = vsel %vm645, %v518, 0
        %v665 = vsel %vm645, %v519, 0
        %v668 = vsel %vm645, %v520, 0
        %670 = vmatprep.subr.mxu0 0.0
        %671 = vmatpush1.msra.mxu0 0.0
        %672 = vmatprep.subr.mxu0 0.0
        %673 = vmatpush1.msra.mxu0 0.0
        %674 = vmatprep.subr.mxu0 0.0
        %675 = vmatpush1.msra.mxu0 0.0
        %676 = vmatprep.subr.mxu0 0.0
        %677 = vmatpush1.msra.mxu0 0.0
        %678 = vmatprep.subr.mxu0 0.0
        %679 = vmatpush1.msra.mxu0 0.0
        %680 = vmatprep.subr.mxu0 0.0
        %681 = vmatpush1.msra.mxu0 0.0
        %682 = vmatprep.subr.mxu0 0.0
        %683 = vmatpush1.msra.mxu0 0.0
        %684 = vmatprep.subr.mxu0 0.0
        %685 = vmatpush1.msra.mxu0 0.0
        %686 = vmatprep.subr.mxu0 0.0
        %687 = vmatpush1.msra.mxu0 0.0
        %688 = vmatprep.subr.mxu0 0.0
        %689 = vmatpush1.msra.mxu0 0.0
        %690 = vmatprep.subr.mxu0 0.0
        %691 = vmatpush1.msra.mxu0 0.0
        %692 = vmatprep.subr.mxu0 0.0
        %693 = vmatpush1.msra.mxu0 0.0
        %694 = vmatprep.subr.mxu0 0.0
        %695 = vmatpush1.msra.mxu0 0.0
        %696 = vmatprep.subr.mxu0 0.0
        %697 = vmatpush1.msra.mxu0 0.0
        %698 = vmatprep.subr.mxu0 0.0
        %699 = vmatpush1.msra.mxu0 %v644
        %700 = vmatprep.subr.mxu0 0.0
        %701 = vmatpush1.msra.mxu0 %v643
        %702 = vmatprep.subr.mxu0 0.0
        %703 = vmatpush2.msra.mxu0 0.0
        %704 = vmatprep.subr.mxu0 0.0
        %705 = vmatpush2.msra.mxu0 0.0
        %706 = vmatprep.subr.mxu0 0.0
        %707 = vmatpush2.msra.mxu0 0.0
        %708 = vmatprep.subr.mxu0 0.0
        %709 = vmatpush2.msra.mxu0 0.0
        %710 = vmatprep.subr.mxu0 0.0
        %711 = vmatpush2.msra.mxu0 0.0
        %712 = vmatprep.subr.mxu0 0.0
        %713 = vmatpush2.msra.mxu0 0.0
        %714 = vmatprep.subr.mxu0 0.0
        %715 = vmatpush2.msra.mxu0 0.0
        %716 = vmatprep.subr.mxu0 0.0
        %717 = vmatpush2.msra.mxu0 0.0
        %718 = vmatprep.subr.mxu0 0.0
        %719 = vmatpush2.msra.mxu0 0.0
        %720 = vmatprep.subr.mxu0 0.0
        %721 = vmatpush2.msra.mxu0 0.0
        %722 = vmatprep.subr.mxu0 0.0
        %723 = vmatpush2.msra.mxu0 0.0
        %724 = vmatprep.subr.mxu0 0.0
        %725 = vmatpush2.msra.mxu0 0.0
        %726 = vmatprep.subr.mxu0 0.0
        %727 = vmatpush2.msra.mxu0 0.0
        %728 = vmatprep.subr.mxu0 0.0
        %729 = vmatpush2.msra.mxu0 0.0
        %730 = vmatprep.subr.mxu0 0.0
        %731 = vmatpush2.msra.mxu0 0.0
        %732 = vmatprep.subr.mxu0 0.0
        %733 = vmatpush2.msra.mxu0 0.0
        %734 = vmatprep.mubr.f32.mxu0 0.0
        %735 = vmatmul.mubr.f32.gmra.mxu0 %v647
        %v736 = vpop.f32.mrf.mxu0
        %v737 = vadd.f32 %v525, %v736
        %v738 = vpop.f32.mrf.mxu0
        %739 = vmatprep.mubr.f32.mxu0 0.0
        %740 = vmatmul.mubr.f32.gmra.mxu0 %v650
        %v741 = vpop.f32.mrf.mxu0
        %v742 = vadd.f32 %v526, %v741
        %v743 = vpop.f32.mrf.mxu0
        %744 = vmatprep.mubr.f32.mxu0 0.0
        %745 = vmatmul.mubr.f32.gmra.mxu0 %v653
        %v746 = vpop.f32.mrf.mxu0
        %v747 = vadd.f32 %v527, %v746
        %v748 = vpop.f32.mrf.mxu0
        %749 = vmatprep.mubr.f32.mxu0 0.0
        %750 = vmatmul.mubr.f32.gmra.mxu0 %v656
        %v751 = vpop.f32.mrf.mxu0
        %v752 = vadd.f32 %v528, %v751
        %v753 = vpop.f32.mrf.mxu0
        %754 = vmatprep.mubr.f32.mxu0 0.0
        %755 = vmatmul.mubr.f32.gmra.mxu0 %v659
        %v756 = vpop.f32.mrf.mxu0
        %v757 = vadd.f32 %v529, %v756
        %v758 = vpop.f32.mrf.mxu0
        %759 = vmatprep.mubr.f32.mxu0 0.0
        %760 = vmatmul.mubr.f32.gmra.mxu0 %v662
        %v761 = vpop.f32.mrf.mxu0
        %v762 = vadd.f32 %v530, %v761
        %v763 = vpop.f32.mrf.mxu0
        %764 = vmatprep.mubr.f32.mxu0 0.0
        %765 = vmatmul.mubr.f32.gmra.mxu0 %v665
        %v766 = vpop.f32.mrf.mxu0
        %v767 = vadd.f32 %v531, %v766
        %v768 = vpop.f32.mrf.mxu0
        %769 = vmatprep.mubr.f32.mxu0 0.0
        %770 = vmatmul.mubr.f32.gmra.mxu0 %v668
        %v771 = vpop.f32.mrf.mxu0
        %v772 = vadd.f32 %v532, %v771
        %v773 = vpop.f32.mrf.mxu0
        %774 = vdwg.mxu0
        %v775 = vld [vmem:[%s5] sm:$0xf]
        %v776 = vld [vmem:[%s5 + $0x4] sm:$0xf]
        %v777 = vld [vmem:[%s5 + $0x8] sm:$0xf]
        %v778 = vld [vmem:[%s5 + $0xc] sm:$0xf]
        %v779 = vld [vmem:[%s5 + $0x10] sm:$0xf]
        %v780 = vld [vmem:[%s5 + $0x14] sm:$0xf]
        %v781 = vld [vmem:[%s5 + $0x18] sm:$0xf]
        %v782 = vld [vmem:[%s5 + $0x1c] sm:$0xf]
        %v783 = vpack.c.bf16 %v631, %v629
        %v784 = vpack.c.bf16 %v632, %v630
        %786 = vset.pattern.permute.xlu0 0
        %787 = vperm.xlu0 %786, %v737
        %v788 = vpop.permute.xlu0 %787
        %791 = vset.pattern.permute.xlu0 0
        %792 = vperm.xlu0 %791, %v742
        %v793 = vpop.permute.xlu0 %792
        %796 = vset.pattern.permute.xlu0 0
        %797 = vperm.xlu0 %796, %v747
        %v798 = vpop.permute.xlu0 %797
        %801 = vset.pattern.permute.xlu0 0
        %802 = vperm.xlu0 %801, %v752
        %v803 = vpop.permute.xlu0 %802
        %806 = vset.pattern.permute.xlu0 0
        %807 = vperm.xlu0 %806, %v757
        %v808 = vpop.permute.xlu0 %807
        %811 = vset.pattern.permute.xlu0 0
        %812 = vperm.xlu0 %811, %v762
        %v813 = vpop.permute.xlu0 %812
        %816 = vset.pattern.permute.xlu0 0
        %817 = vperm.xlu0 %816, %v767
        %v818 = vpop.permute.xlu0 %817
        %821 = vset.pattern.permute.xlu0 0
        %822 = vperm.xlu0 %821, %v772
        %v823 = vpop.permute.xlu0 %822
        %v833 = vunpack.c.l.b16 %v775
        %v834 = vunpack.c.l.b16 %v776
        %v835 = vunpack.c.l.b16 %v777
        %v836 = vunpack.c.l.b16 %v778
        %v837 = vunpack.c.l.b16 %v779
        %v838 = vunpack.c.l.b16 %v780
        %v839 = vunpack.c.l.b16 %v781
        %v840 = vunpack.c.l.b16 %v782
        %v841 = vpack.c.b16 %v834, %v833
        %v842 = vpack.c.b16 %v836, %v835
        %v843 = vpack.c.b16 %v838, %v837
        %v844 = vpack.c.b16 %v840, %v839
        %v846 = vsel %vm645, %v841, 0
        %v849 = vsel %vm645, %v842, 0
        %v852 = vsel %vm645, %v843, 0
        %v855 = vsel %vm645, %v844, 0
        %857 = vmatprep.subr.bf16.mxu0 0
        %858 = vmatpush1.bf16.msra.mxu0 0
        %859 = vmatprep.subr.bf16.mxu0 0
        %860 = vmatpush1.bf16.msra.mxu0 0
        %861 = vmatprep.subr.bf16.mxu0 0
        %862 = vmatpush1.bf16.msra.mxu0 0
        %863 = vmatprep.subr.bf16.mxu0 0
        %864 = vmatpush1.bf16.msra.mxu0 0
        %865 = vmatprep.subr.bf16.mxu0 0
        %866 = vmatpush1.bf16.msra.mxu0 0
        %867 = vmatprep.subr.bf16.mxu0 0
        %868 = vmatpush1.bf16.msra.mxu0 0
        %869 = vmatprep.subr.bf16.mxu0 0
        %870 = vmatpush1.bf16.msra.mxu0 0
        %871 = vmatprep.subr.bf16.mxu0 %v784
        %872 = vmatpush1.bf16.msra.mxu0 %v783
        %873 = vmatprep.subr.bf16.mxu0 0
        %874 = vmatpush2.bf16.msra.mxu0 0
        %875 = vmatprep.subr.bf16.mxu0 0
        %876 = vmatpush2.bf16.msra.mxu0 0
        %877 = vmatprep.subr.bf16.mxu0 0
        %878 = vmatpush2.bf16.msra.mxu0 0
        %879 = vmatprep.subr.bf16.mxu0 0
        %880 = vmatpush2.bf16.msra.mxu0 0
        %881 = vmatprep.subr.bf16.mxu0 0
        %882 = vmatpush2.bf16.msra.mxu0 0
        %883 = vmatprep.subr.bf16.mxu0 0
        %884 = vmatpush2.bf16.msra.mxu0 0
        %885 = vmatprep.subr.bf16.mxu0 0
        %886 = vmatpush2.bf16.msra.mxu0 0
        %887 = vmatprep.subr.bf16.mxu0 0
        %888 = vmatpush2.bf16.msra.mxu0 0
        %889 = vmatprep.mubr.bf16.mxu0 0
        %890 = vmatmul.mubr.bf16.gmra.mxu0 %v846
        %v891 = vpop.f32.mrf.mxu0
        %v892 = vadd.f32 %v788, %v891
        %v893 = vpop.f32.mrf.mxu0
        %v894 = vadd.f32 %v788, %v893
        %v895 = vpop.f32.mrf.mxu0
        %v896 = vadd.f32 %v793, %v895
        %v897 = vpop.f32.mrf.mxu0
        %v898 = vadd.f32 %v793, %v897
        %899 = vmatprep.mubr.bf16.mxu0 0
        %900 = vmatmul.mubr.bf16.gmra.mxu0 %v849
        %v901 = vpop.f32.mrf.mxu0
        %v902 = vadd.f32 %v798, %v901
        %v903 = vpop.f32.mrf.mxu0
        %v904 = vadd.f32 %v798, %v903
        %v905 = vpop.f32.mrf.mxu0
        %v906 = vadd.f32 %v803, %v905
        %v907 = vpop.f32.mrf.mxu0
        %v908 = vadd.f32 %v803, %v907
        %909 = vmatprep.mubr.bf16.mxu0 0
        %910 = vmatmul.mubr.bf16.gmra.mxu0 %v852
        %v911 = vpop.f32.mrf.mxu0
        %v912 = vadd.f32 %v808, %v911
        %v913 = vpop.f32.mrf.mxu0
        %v914 = vadd.f32 %v808, %v913
        %v915 = vpop.f32.mrf.mxu0
        %v916 = vadd.f32 %v813, %v915
        %v917 = vpop.f32.mrf.mxu0
        %v918 = vadd.f32 %v813, %v917
        %919 = vmatprep.mubr.bf16.mxu0 0
        %920 = vmatmul.mubr.bf16.gmra.mxu0 %v855
        %v921 = vpop.f32.mrf.mxu0
        %v922 = vadd.f32 %v818, %v921
        %v923 = vpop.f32.mrf.mxu0
        %v924 = vadd.f32 %v818, %v923
        %v925 = vpop.f32.mrf.mxu0
        %v926 = vadd.f32 %v823, %v925
        %v927 = vpop.f32.mrf.mxu0
        %v928 = vadd.f32 %v823, %v927
        %929 = vdwg.mxu0
        %v930 = vsub.f32 0.0, %v892
        %v931 = vsub.f32 0.0, %v894
        %v932 = vsub.f32 0.0, %v896
        %v933 = vsub.f32 0.0, %v898
        %v934 = vsub.f32 0.0, %v902
        %v935 = vsub.f32 0.0, %v904
        %v936 = vsub.f32 0.0, %v906
        %v937 = vsub.f32 0.0, %v908
        %v938 = vsub.f32 0.0, %v912
        %v939 = vsub.f32 0.0, %v914
        %v940 = vsub.f32 0.0, %v916
        %v941 = vsub.f32 0.0, %v918
        %v942 = vsub.f32 0.0, %v922
        %v943 = vsub.f32 0.0, %v924
        %v944 = vsub.f32 0.0, %v926
        %v945 = vsub.f32 0.0, %v928
        %v946 = vmul.f32 %v930, 1.442695
        %v947 = vpow.pop %v946
        %v948 = vmul.f32 %v931, 1.442695
        %v949 = vpow.pop %v948
        %v950 = vmul.f32 %v932, 1.442695
        %v951 = vpow.pop %v950
        %v952 = vmul.f32 %v933, 1.442695
        %v953 = vpow.pop %v952
        %v954 = vmul.f32 %v934, 1.442695
        %v955 = vpow.pop %v954
        %v956 = vmul.f32 %v935, 1.442695
        %v957 = vpow.pop %v956
        %v958 = vmul.f32 %v936, 1.442695
        %v959 = vpow.pop %v958
        %v960 = vmul.f32 %v937, 1.442695
        %v961 = vpow.pop %v960
        %v962 = vmul.f32 %v938, 1.442695
        %v963 = vpow.pop %v962
        %v964 = vmul.f32 %v939, 1.442695
        %v965 = vpow.pop %v964
        %v966 = vmul.f32 %v940, 1.442695
        %v967 = vpow.pop %v966
        %v968 = vmul.f32 %v941, 1.442695
        %v969 = vpow.pop %v968
        %v970 = vmul.f32 %v942, 1.442695
        %v971 = vpow.pop %v970
        %v972 = vmul.f32 %v943, 1.442695
        %v973 = vpow.pop %v972
        %v974 = vmul.f32 %v944, 1.442695
        %v975 = vpow.pop %v974
        %v976 = vmul.f32 %v945, 1.442695
        %v977 = vpow.pop %v976
        %v978 = vadd.f32 %v947, 1.0
        %v979 = vadd.f32 %v949, 1.0
        %v980 = vadd.f32 %v951, 1.0
        %v981 = vadd.f32 %v953, 1.0
        %v982 = vadd.f32 %v955, 1.0
        %v983 = vadd.f32 %v957, 1.0
        %v984 = vadd.f32 %v959, 1.0
        %v985 = vadd.f32 %v961, 1.0
        %v986 = vadd.f32 %v963, 1.0
        %v987 = vadd.f32 %v965, 1.0
        %v988 = vadd.f32 %v967, 1.0
        %v989 = vadd.f32 %v969, 1.0
        %v990 = vadd.f32 %v971, 1.0
        %v991 = vadd.f32 %v973, 1.0
        %v992 = vadd.f32 %v975, 1.0
        %v993 = vadd.f32 %v977, 1.0
        %v994 = vrcp.pop %v978
        %v995 = vrcp.pop %v979
        %v996 = vrcp.pop %v980
        %v997 = vrcp.pop %v981
        %v998 = vrcp.pop %v982
        %v999 = vrcp.pop %v983
        %v1000 = vrcp.pop %v984
        %v1001 = vrcp.pop %v985
        %v1002 = vrcp.pop %v986
        %v1003 = vrcp.pop %v987
        %v1004 = vrcp.pop %v988
        %v1005 = vrcp.pop %v989
        %v1006 = vrcp.pop %v990
        %v1007 = vrcp.pop %v991
        %v1008 = vrcp.pop %v992
        %v1009 = vrcp.pop %v993
        %v1010 = vmul.f32 %v481, %v994
        %v1011 = vmul.f32 %v482, %v995
        %v1012 = vmul.f32 %v483, %v996
        %v1013 = vmul.f32 %v484, %v997
        %v1014 = vmul.f32 %v485, %v998
        %v1015 = vmul.f32 %v486, %v999
        %v1016 = vmul.f32 %v487, %v1000
        %v1017 = vmul.f32 %v488, %v1001
        %v1018 = vmul.f32 %v489, %v1002
        %v1019 = vmul.f32 %v490, %v1003
        %v1020 = vmul.f32 %v491, %v1004
        %v1021 = vmul.f32 %v492, %v1005
        %v1022 = vmul.f32 %v493, %v1006
        %v1023 = vmul.f32 %v494, %v1007
        %v1024 = vmul.f32 %v495, %v1008
        %v1025 = vmul.f32 %v496, %v1009
        %v1026 = vadd.f32 %v465, %v1010
        %v1027 = vadd.f32 %v466, %v1011
        %v1028 = vadd.f32 %v467, %v1012
        %v1029 = vadd.f32 %v468, %v1013
        %v1030 = vadd.f32 %v469, %v1014
        %v1031 = vadd.f32 %v470, %v1015
        %v1032 = vadd.f32 %v471, %v1016
        %v1033 = vadd.f32 %v472, %v1017
        %v1034 = vadd.f32 %v473, %v1018
        %v1035 = vadd.f32 %v474, %v1019
        %v1036 = vadd.f32 %v475, %v1020
        %v1037 = vadd.f32 %v476, %v1021
        %v1038 = vadd.f32 %v477, %v1022
        %v1039 = vadd.f32 %v478, %v1023
        %v1040 = vadd.f32 %v479, %v1024
        %v1041 = vadd.f32 %v480, %v1025
        %v1042 = vld [vmem:[%s9] sm:$0xff]
        %v1043 = vld [vmem:[%s9 + $0x8] sm:$0xff]
        %v1044 = vld [vmem:[%s11] sm:$0xff]
        %v1045 = vld [vmem:[%s11 + $0x8] sm:$0xff]
        %v1046 = vld [vmem:[%s11 + $0x10] sm:$0xff]
        %v1047 = vld [vmem:[%s11 + $0x18] sm:$0xff]
        %v1048 = vld [vmem:[%s11 + $0x20] sm:$0xff]
        %v1049 = vld [vmem:[%s11 + $0x28] sm:$0xff]
        %v1050 = vld [vmem:[%s11 + $0x30] sm:$0xff]
        %v1051 = vld [vmem:[%s11 + $0x38] sm:$0xff]
        %v1052 = vpack.c.bf16 %v1028, %v1026
        %v1053 = vpack.c.bf16 %v1029, %v1027
        %v1054 = vpack.c.bf16 %v1032, %v1030
        %v1055 = vpack.c.bf16 %v1033, %v1031
        %v1056 = vpack.c.bf16 %v1036, %v1034
        %v1057 = vpack.c.bf16 %v1037, %v1035
        %v1058 = vpack.c.bf16 %v1040, %v1038
        %v1059 = vpack.c.bf16 %v1041, %v1039
        %v1060 = vld [vmem:[%s8] sm:$0xf]
        %v1061 = vld [vmem:[%s8 + $0x4] sm:$0xf]
        %v1062 = vld [vmem:[%s8 + $0x8] sm:$0xf]
        %v1063 = vld [vmem:[%s8 + $0xc] sm:$0xf]
        %v1068 = vunpack.c.l.b16 %v1060
        %v1069 = vunpack.c.l.b16 %v1061
        %v1070 = vunpack.c.l.b16 %v1062
        %v1071 = vunpack.c.l.b16 %v1063
        %v1072 = vpack.c.b16 %v1069, %v1068
        %v1073 = vpack.c.b16 %v1071, %v1070
        %v1075 = vsel %vm555, %v1072, 0
        %v1078 = vsel %vm555, %v1073, 0
        %1080 = vmatprep.subr.bf16.mxu0 0
        %1081 = vmatpush1.bf16.msra.mxu0 0
        %1082 = vmatprep.subr.bf16.mxu0 0
        %1083 = vmatpush1.bf16.msra.mxu0 0
        %1084 = vmatprep.subr.bf16.mxu0 0
        %1085 = vmatpush1.bf16.msra.mxu0 0
        %1086 = vmatprep.subr.bf16.mxu0 0
        %1087 = vmatpush1.bf16.msra.mxu0 0
        %1088 = vmatprep.subr.bf16.mxu0 %v1059
        %1089 = vmatpush1.bf16.msra.mxu0 %v1058
        %1090 = vmatprep.subr.bf16.mxu0 %v1057
        %1091 = vmatpush1.bf16.msra.mxu0 %v1056
        %1092 = vmatprep.subr.bf16.mxu0 %v1055
        %1093 = vmatpush1.bf16.msra.mxu0 %v1054
        %1094 = vmatprep.subr.bf16.mxu0 %v1053
        %1095 = vmatpush1.bf16.msra.mxu0 %v1052
        %1096 = vmatprep.subr.bf16.mxu0 0
        %1097 = vmatpush2.bf16.msra.mxu0 0
        %1098 = vmatprep.subr.bf16.mxu0 0
        %1099 = vmatpush2.bf16.msra.mxu0 0
        %1100 = vmatprep.subr.bf16.mxu0 0
        %1101 = vmatpush2.bf16.msra.mxu0 0
        %1102 = vmatprep.subr.bf16.mxu0 0
        %1103 = vmatpush2.bf16.msra.mxu0 0
        %1104 = vmatprep.subr.bf16.mxu0 0
        %1105 = vmatpush2.bf16.msra.mxu0 0
        %1106 = vmatprep.subr.bf16.mxu0 0
        %1107 = vmatpush2.bf16.msra.mxu0 0
        %1108 = vmatprep.subr.bf16.mxu0 0
        %1109 = vmatpush2.bf16.msra.mxu0 0
        %1110 = vmatprep.subr.bf16.mxu0 0
        %1111 = vmatpush2.bf16.msra.mxu0 0
        %1112 = vmatprep.mubr.bf16.mxu0 0
        %1113 = vmatmul.mubr.bf16.gmra.mxu0 %v1075
        %v1114 = vpop.f32.mrf.mxu0
        %v1115 = vadd.f32 0.0, %v1114
        %v1116 = vpop.f32.mrf.mxu0
        %v1117 = vadd.f32 0.0, %v1116
        %v1118 = vpop.f32.mrf.mxu0
        %v1119 = vadd.f32 0.0, %v1118
        %v1120 = vpop.f32.mrf.mxu0
        %v1121 = vadd.f32 0.0, %v1120
        %1122 = vmatprep.mubr.bf16.mxu0 0
        %1123 = vmatmul.mubr.bf16.gmra.mxu0 %v1078
        %v1124 = vpop.f32.mrf.mxu0
        %v1125 = vadd.f32 0.0, %v1124
        %v1126 = vpop.f32.mrf.mxu0
        %v1127 = vadd.f32 0.0, %v1126
        %v1128 = vpop.f32.mrf.mxu0
        %v1129 = vadd.f32 0.0, %v1128
        %v1130 = vpop.f32.mrf.mxu0
        %v1131 = vadd.f32 0.0, %v1130
        %1132 = vdwg.mxu0
        %1134 = vset.pattern.permute.xlu0 0
        %1135 = vperm.xlu0 %1134, %v1042
        %v1136 = vpop.permute.xlu0 %1135
        %1139 = vset.pattern.permute.xlu0 0
        %1140 = vperm.xlu0 %1139, %v1043
        %v1141 = vpop.permute.xlu0 %1140
        %v1143 = vadd.f32 %v1115, %v1136
        %v1144 = vadd.f32 %v1117, %v1136
        %v1145 = vadd.f32 %v1119, %v1141
        %v1146 = vadd.f32 %v1121, %v1141
        %v1147 = vmax.f32 %v1143, 0.0
        %v1148 = vmax.f32 %v1144, 0.0
        %v1149 = vmax.f32 %v1145, 0.0
        %v1150 = vmax.f32 %v1146, 0.0
        %v1151 = vadd.f32 %v1125, %v1127
        %1152 = vadd.xlane.f32.xlu0 %v1151
        %v1153 = vpop.xlane.xlu0 %1152
        %v1154 = vadd.f32 %v1129, %v1131
        %1155 = vadd.xlane.f32.xlu0 %v1154
        %v1156 = vpop.xlane.xlu0 %1155
        %v1157 = vmul.f32 %v1153, 0.00390625
        %v1158 = vmul.f32 %v1156, 0.00390625
        %v1159 = vadd.f32 %v1157, %v521
        %v1160 = vadd.f32 %v1158, %v522
        %v1161 = vmax.f32 %v1159, 0.0
        %v1162 = vmax.f32 %v1160, 0.0
        %1163 = vmatprep.subr.mxu0 0.0
        %1164 = vmatpush1.msra.mxu0 0.0
        %1165 = vmatprep.subr.mxu0 0.0
        %1166 = vmatpush1.msra.mxu0 0.0
        %1167 = vmatprep.subr.mxu0 0.0
        %1168 = vmatpush1.msra.mxu0 0.0
        %1169 = vmatprep.subr.mxu0 0.0
        %1170 = vmatpush1.msra.mxu0 0.0
        %1171 = vmatprep.subr.mxu0 0.0
        %1172 = vmatpush1.msra.mxu0 0.0
        %1173 = vmatprep.subr.mxu0 0.0
        %1174 = vmatpush1.msra.mxu0 0.0
        %1175 = vmatprep.subr.mxu0 0.0
        %1176 = vmatpush1.msra.mxu0 0.0
        %1177 = vmatprep.subr.mxu0 0.0
        %1178 = vmatpush1.msra.mxu0 0.0
        %1179 = vmatprep.subr.mxu0 0.0
        %1180 = vmatpush1.msra.mxu0 0.0
        %1181 = vmatprep.subr.mxu0 0.0
        %1182 = vmatpush1.msra.mxu0 0.0
        %1183 = vmatprep.subr.mxu0 0.0
        %1184 = vmatpush1.msra.mxu0 0.0
        %1185 = vmatprep.subr.mxu0 0.0
        %1186 = vmatpush1.msra.mxu0 0.0
        %1187 = vmatprep.subr.mxu0 0.0
        %1188 = vmatpush1.msra.mxu0 0.0
        %1189 = vmatprep.subr.mxu0 0.0
        %1190 = vmatpush1.msra.mxu0 0.0
        %1191 = vmatprep.subr.mxu0 0.0
        %1192 = vmatpush1.msra.mxu0 %v1162
        %1193 = vmatprep.subr.mxu0 0.0
        %1194 = vmatpush1.msra.mxu0 %v1161
        %1195 = vmatprep.subr.mxu0 0.0
        %1196 = vmatpush2.msra.mxu0 0.0
        %1197 = vmatprep.subr.mxu0 0.0
        %1198 = vmatpush2.msra.mxu0 0.0
        %1199 = vmatprep.subr.mxu0 0.0
        %1200 = vmatpush2.msra.mxu0 0.0
        %1201 = vmatprep.subr.mxu0 0.0
        %1202 = vmatpush2.msra.mxu0 0.0
        %1203 = vmatprep.subr.mxu0 0.0
        %1204 = vmatpush2.msra.mxu0 0.0
        %1205 = vmatprep.subr.mxu0 0.0
        %1206 = vmatpush2.msra.mxu0 0.0
        %1207 = vmatprep.subr.mxu0 0.0
        %1208 = vmatpush2.msra.mxu0 0.0
        %1209 = vmatprep.subr.mxu0 0.0
        %1210 = vmatpush2.msra.mxu0 0.0
        %1211 = vmatprep.subr.mxu0 0.0
        %1212 = vmatpush2.msra.mxu0 0.0
        %1213 = vmatprep.subr.mxu0 0.0
        %1214 = vmatpush2.msra.mxu0 0.0
        %1215 = vmatprep.subr.mxu0 0.0
        %1216 = vmatpush2.msra.mxu0 0.0
        %1217 = vmatprep.subr.mxu0 0.0
        %1218 = vmatpush2.msra.mxu0 0.0
        %1219 = vmatprep.subr.mxu0 0.0
        %1220 = vmatpush2.msra.mxu0 0.0
        %1221 = vmatprep.subr.mxu0 0.0
        %1222 = vmatpush2.msra.mxu0 0.0
        %1223 = vmatprep.subr.mxu0 0.0
        %1224 = vmatpush2.msra.mxu0 0.0
        %1225 = vmatprep.subr.mxu0 0.0
        %1226 = vmatpush2.msra.mxu0 0.0
        %1227 = vmatprep.mubr.f32.mxu0 0.0
        %1228 = vmatmul.mubr.f32.gmra.mxu0 %v647
        %v1229 = vpop.f32.mrf.mxu0
        %v1230 = vadd.f32 %v1044, %v1229
        %v1231 = vpop.f32.mrf.mxu0
        %1232 = vmatprep.mubr.f32.mxu0 0.0
        %1233 = vmatmul.mubr.f32.gmra.mxu0 %v650
        %v1234 = vpop.f32.mrf.mxu0
        %v1235 = vadd.f32 %v1045, %v1234
        %v1236 = vpop.f32.mrf.mxu0
        %1237 = vmatprep.mubr.f32.mxu0 0.0
        %1238 = vmatmul.mubr.f32.gmra.mxu0 %v653
        %v1239 = vpop.f32.mrf.mxu0
        %v1240 = vadd.f32 %v1046, %v1239
        %v1241 = vpop.f32.mrf.mxu0
        %1242 = vmatprep.mubr.f32.mxu0 0.0
        %1243 = vmatmul.mubr.f32.gmra.mxu0 %v656
        %v1244 = vpop.f32.mrf.mxu0
        %v1245 = vadd.f32 %v1047, %v1244
        %v1246 = vpop.f32.mrf.mxu0
        %1247 = vmatprep.mubr.f32.mxu0 0.0
        %1248 = vmatmul.mubr.f32.gmra.mxu0 %v659
        %v1249 = vpop.f32.mrf.mxu0
        %v1250 = vadd.f32 %v1048, %v1249
        %v1251 = vpop.f32.mrf.mxu0
        %1252 = vmatprep.mubr.f32.mxu0 0.0
        %1253 = vmatmul.mubr.f32.gmra.mxu0 %v662
        %v1254 = vpop.f32.mrf.mxu0
        %v1255 = vadd.f32 %v1049, %v1254
        %v1256 = vpop.f32.mrf.mxu0
        %1257 = vmatprep.mubr.f32.mxu0 0.0
        %1258 = vmatmul.mubr.f32.gmra.mxu0 %v665
        %v1259 = vpop.f32.mrf.mxu0
        %v1260 = vadd.f32 %v1050, %v1259
        %v1261 = vpop.f32.mrf.mxu0
        %1262 = vmatprep.mubr.f32.mxu0 0.0
        %1263 = vmatmul.mubr.f32.gmra.mxu0 %v668
        %v1264 = vpop.f32.mrf.mxu0
        %v1265 = vadd.f32 %v1051, %v1264
        %v1266 = vpop.f32.mrf.mxu0
        %1267 = vdwg.mxu0
        %v1268 = vld [vmem:[%s10] sm:$0xf]
        %v1269 = vld [vmem:[%s10 + $0x4] sm:$0xf]
        %v1270 = vld [vmem:[%s10 + $0x8] sm:$0xf]
        %v1271 = vld [vmem:[%s10 + $0xc] sm:$0xf]
        %v1272 = vld [vmem:[%s10 + $0x10] sm:$0xf]
        %v1273 = vld [vmem:[%s10 + $0x14] sm:$0xf]
        %v1274 = vld [vmem:[%s10 + $0x18] sm:$0xf]
        %v1275 = vld [vmem:[%s10 + $0x1c] sm:$0xf]
        %v1276 = vpack.c.bf16 %v1149, %v1147
        %v1277 = vpack.c.bf16 %v1150, %v1148
        %1279 = vset.pattern.permute.xlu0 0
        %1280 = vperm.xlu0 %1279, %v1230
        %v1281 = vpop.permute.xlu0 %1280
        %1284 = vset.pattern.permute.xlu0 0
        %1285 = vperm.xlu0 %1284, %v1235
        %v1286 = vpop.permute.xlu0 %1285
        %1289 = vset.pattern.permute.xlu0 0
        %1290 = vperm.xlu0 %1289, %v1240
        %v1291 = vpop.permute.xlu0 %1290
        %1294 = vset.pattern.permute.xlu0 0
        %1295 = vperm.xlu0 %1294, %v1245
        %v1296 = vpop.permute.xlu0 %1295
        %1299 = vset.pattern.permute.xlu0 0
        %1300 = vperm.xlu0 %1299, %v1250
        %v1301 = vpop.permute.xlu0 %1300
        %1304 = vset.pattern.permute.xlu0 0
        %1305 = vperm.xlu0 %1304, %v1255
        %v1306 = vpop.permute.xlu0 %1305
        %1309 = vset.pattern.permute.xlu0 0
        %1310 = vperm.xlu0 %1309, %v1260
        %v1311 = vpop.permute.xlu0 %1310
        %1314 = vset.pattern.permute.xlu0 0
        %1315 = vperm.xlu0 %1314, %v1265
        %v1316 = vpop.permute.xlu0 %1315
        %v1326 = vunpack.c.l.b16 %v1268
        %v1327 = vunpack.c.l.b16 %v1269
        %v1328 = vunpack.c.l.b16 %v1270
        %v1329 = vunpack.c.l.b16 %v1271
        %v1330 = vunpack.c.l.b16 %v1272
        %v1331 = vunpack.c.l.b16 %v1273
        %v1332 = vunpack.c.l.b16 %v1274
        %v1333 = vunpack.c.l.b16 %v1275
        %v1334 = vpack.c.b16 %v1327, %v1326
        %v1335 = vpack.c.b16 %v1329, %v1328
        %v1336 = vpack.c.b16 %v1331, %v1330
        %v1337 = vpack.c.b16 %v1333, %v1332
        %v1339 = vsel %vm645, %v1334, 0
        %v1342 = vsel %vm645, %v1335, 0
        %v1345 = vsel %vm645, %v1336, 0
        %v1348 = vsel %vm645, %v1337, 0
        %1350 = vmatprep.subr.bf16.mxu0 0
        %1351 = vmatpush1.bf16.msra.mxu0 0
        %1352 = vmatprep.subr.bf16.mxu0 0
        %1353 = vmatpush1.bf16.msra.mxu0 0
        %1354 = vmatprep.subr.bf16.mxu0 0
        %1355 = vmatpush1.bf16.msra.mxu0 0
        %1356 = vmatprep.subr.bf16.mxu0 0
        %1357 = vmatpush1.bf16.msra.mxu0 0
        %1358 = vmatprep.subr.bf16.mxu0 0
        %1359 = vmatpush1.bf16.msra.mxu0 0
        %1360 = vmatprep.subr.bf16.mxu0 0
        %1361 = vmatpush1.bf16.msra.mxu0 0
        %1362 = vmatprep.subr.bf16.mxu0 0
        %1363 = vmatpush1.bf16.msra.mxu0 0
        %1364 = vmatprep.subr.bf16.mxu0 %v1277
        %1365 = vmatpush1.bf16.msra.mxu0 %v1276
        %1366 = vmatprep.subr.bf16.mxu0 0
        %1367 = vmatpush2.bf16.msra.mxu0 0
        %1368 = vmatprep.subr.bf16.mxu0 0
        %1369 = vmatpush2.bf16.msra.mxu0 0
        %1370 = vmatprep.subr.bf16.mxu0 0
        %1371 = vmatpush2.bf16.msra.mxu0 0
        %1372 = vmatprep.subr.bf16.mxu0 0
        %1373 = vmatpush2.bf16.msra.mxu0 0
        %1374 = vmatprep.subr.bf16.mxu0 0
        %1375 = vmatpush2.bf16.msra.mxu0 0
        %1376 = vmatprep.subr.bf16.mxu0 0
        %1377 = vmatpush2.bf16.msra.mxu0 0
        %1378 = vmatprep.subr.bf16.mxu0 0
        %1379 = vmatpush2.bf16.msra.mxu0 0
        %1380 = vmatprep.subr.bf16.mxu0 0
        %1381 = vmatpush2.bf16.msra.mxu0 0
        %1382 = vmatprep.mubr.bf16.mxu0 0
        %1383 = vmatmul.mubr.bf16.gmra.mxu0 %v1339
        %v1384 = vpop.f32.mrf.mxu0
        %v1385 = vadd.f32 %v1281, %v1384
        %v1386 = vpop.f32.mrf.mxu0
        %v1387 = vadd.f32 %v1281, %v1386
        %v1388 = vpop.f32.mrf.mxu0
        %v1389 = vadd.f32 %v1286, %v1388
        %v1390 = vpop.f32.mrf.mxu0
        %v1391 = vadd.f32 %v1286, %v1390
        %1392 = vmatprep.mubr.bf16.mxu0 0
        %1393 = vmatmul.mubr.bf16.gmra.mxu0 %v1342
        %v1394 = vpop.f32.mrf.mxu0
        %v1395 = vadd.f32 %v1291, %v1394
        %v1396 = vpop.f32.mrf.mxu0
        %v1397 = vadd.f32 %v1291, %v1396
        %v1398 = vpop.f32.mrf.mxu0
        %v1399 = vadd.f32 %v1296, %v1398
        %v1400 = vpop.f32.mrf.mxu0
        %v1401 = vadd.f32 %v1296, %v1400
        %1402 = vmatprep.mubr.bf16.mxu0 0
        %1403 = vmatmul.mubr.bf16.gmra.mxu0 %v1345
        %v1404 = vpop.f32.mrf.mxu0
        %v1405 = vadd.f32 %v1301, %v1404
        %v1406 = vpop.f32.mrf.mxu0
        %v1407 = vadd.f32 %v1301, %v1406
        %v1408 = vpop.f32.mrf.mxu0
        %v1409 = vadd.f32 %v1306, %v1408
        %v1410 = vpop.f32.mrf.mxu0
        %v1411 = vadd.f32 %v1306, %v1410
        %1412 = vmatprep.mubr.bf16.mxu0 0
        %1413 = vmatmul.mubr.bf16.gmra.mxu0 %v1348
        %v1414 = vpop.f32.mrf.mxu0
        %v1415 = vadd.f32 %v1311, %v1414
        %v1416 = vpop.f32.mrf.mxu0
        %v1417 = vadd.f32 %v1311, %v1416
        %v1418 = vpop.f32.mrf.mxu0
        %v1419 = vadd.f32 %v1316, %v1418
        %v1420 = vpop.f32.mrf.mxu0
        %v1421 = vadd.f32 %v1316, %v1420
        %1422 = vdwg.mxu0
        %v1423 = vsub.f32 0.0, %v1385
        %v1424 = vsub.f32 0.0, %v1387
        %v1425 = vsub.f32 0.0, %v1389
        %v1426 = vsub.f32 0.0, %v1391
        %v1427 = vsub.f32 0.0, %v1395
        %v1428 = vsub.f32 0.0, %v1397
        %v1429 = vsub.f32 0.0, %v1399
        %v1430 = vsub.f32 0.0, %v1401
        %v1431 = vsub.f32 0.0, %v1405
        %v1432 = vsub.f32 0.0, %v1407
        %v1433 = vsub.f32 0.0, %v1409
        %v1434 = vsub.f32 0.0, %v1411
        %v1435 = vsub.f32 0.0, %v1415
        %v1436 = vsub.f32 0.0, %v1417
        %v1437 = vsub.f32 0.0, %v1419
        %v1438 = vsub.f32 0.0, %v1421
        %v1439 = vmul.f32 %v1423, 1.442695
        %v1440 = vpow.pop %v1439
        %v1441 = vmul.f32 %v1424, 1.442695
        %v1442 = vpow.pop %v1441
        %v1443 = vmul.f32 %v1425, 1.442695
        %v1444 = vpow.pop %v1443
        %v1445 = vmul.f32 %v1426, 1.442695
        %v1446 = vpow.pop %v1445
        %v1447 = vmul.f32 %v1427, 1.442695
        %v1448 = vpow.pop %v1447
        %v1449 = vmul.f32 %v1428, 1.442695
        %v1450 = vpow.pop %v1449
        %v1451 = vmul.f32 %v1429, 1.442695
        %v1452 = vpow.pop %v1451
        %v1453 = vmul.f32 %v1430, 1.442695
        %v1454 = vpow.pop %v1453
        %v1455 = vmul.f32 %v1431, 1.442695
        %v1456 = vpow.pop %v1455
        %v1457 = vmul.f32 %v1432, 1.442695
        %v1458 = vpow.pop %v1457
        %v1459 = vmul.f32 %v1433, 1.442695
        %v1460 = vpow.pop %v1459
        %v1461 = vmul.f32 %v1434, 1.442695
        %v1462 = vpow.pop %v1461
        %v1463 = vmul.f32 %v1435, 1.442695
        %v1464 = vpow.pop %v1463
        %v1465 = vmul.f32 %v1436, 1.442695
        %v1466 = vpow.pop %v1465
        %v1467 = vmul.f32 %v1437, 1.442695
        %v1468 = vpow.pop %v1467
        %v1469 = vmul.f32 %v1438, 1.442695
        %v1470 = vpow.pop %v1469
        %v1471 = vadd.f32 %v1440, 1.0
        %v1472 = vadd.f32 %v1442, 1.0
        %v1473 = vadd.f32 %v1444, 1.0
        %v1474 = vadd.f32 %v1446, 1.0
        %v1475 = vadd.f32 %v1448, 1.0
        %v1476 = vadd.f32 %v1450, 1.0
        %v1477 = vadd.f32 %v1452, 1.0
        %v1478 = vadd.f32 %v1454, 1.0
        %v1479 = vadd.f32 %v1456, 1.0
        %v1480 = vadd.f32 %v1458, 1.0
        %v1481 = vadd.f32 %v1460, 1.0
        %v1482 = vadd.f32 %v1462, 1.0
        %v1483 = vadd.f32 %v1464, 1.0
        %v1484 = vadd.f32 %v1466, 1.0
        %v1485 = vadd.f32 %v1468, 1.0
        %v1486 = vadd.f32 %v1470, 1.0
        %v1487 = vrcp.pop %v1471
        %v1488 = vrcp.pop %v1472
        %v1489 = vrcp.pop %v1473
        %v1490 = vrcp.pop %v1474
        %v1491 = vrcp.pop %v1475
        %v1492 = vrcp.pop %v1476
        %v1493 = vrcp.pop %v1477
        %v1494 = vrcp.pop %v1478
        %v1495 = vrcp.pop %v1479
        %v1496 = vrcp.pop %v1480
        %v1497 = vrcp.pop %v1481
        %v1498 = vrcp.pop %v1482
        %v1499 = vrcp.pop %v1483
        %v1500 = vrcp.pop %v1484
        %v1501 = vrcp.pop %v1485
        %v1502 = vrcp.pop %v1486
        %v1503 = vmul.f32 %v481, %v1487
        %v1504 = vmul.f32 %v482, %v1488
        %v1505 = vmul.f32 %v483, %v1489
        %v1506 = vmul.f32 %v484, %v1490
        %v1507 = vmul.f32 %v485, %v1491
        %v1508 = vmul.f32 %v486, %v1492
        %v1509 = vmul.f32 %v487, %v1493
        %v1510 = vmul.f32 %v488, %v1494
        %v1511 = vmul.f32 %v489, %v1495
        %v1512 = vmul.f32 %v490, %v1496
        %v1513 = vmul.f32 %v491, %v1497
        %v1514 = vmul.f32 %v492, %v1498
        %v1515 = vmul.f32 %v493, %v1499
        %v1516 = vmul.f32 %v494, %v1500
        %v1517 = vmul.f32 %v495, %v1501
        %v1518 = vmul.f32 %v496, %v1502
        %v1519 = vadd.f32 %v465, %v1503
        %v1520 = vadd.f32 %v466, %v1504
        %v1521 = vadd.f32 %v467, %v1505
        %v1522 = vadd.f32 %v468, %v1506
        %v1523 = vadd.f32 %v469, %v1507
        %v1524 = vadd.f32 %v470, %v1508
        %v1525 = vadd.f32 %v471, %v1509
        %v1526 = vadd.f32 %v472, %v1510
        %v1527 = vadd.f32 %v473, %v1511
        %v1528 = vadd.f32 %v474, %v1512
        %v1529 = vadd.f32 %v475, %v1513
        %v1530 = vadd.f32 %v476, %v1514
        %v1531 = vadd.f32 %v477, %v1515
        %v1532 = vadd.f32 %v478, %v1516
        %v1533 = vadd.f32 %v479, %v1517
        %v1534 = vadd.f32 %v480, %v1518
        %1535 = vst [vmem:[%s421] sm:$0xff] %v1519
        %1536 = vst [vmem:[%s421 + $0x8] sm:$0xff] %v1520
        %1537 = vst [vmem:[%s421 + $0x10] sm:$0xff] %v1521
        %1538 = vst [vmem:[%s421 + $0x18] sm:$0xff] %v1522
        %1539 = vst [vmem:[%s421 + $0x20] sm:$0xff] %v1523
        %1540 = vst [vmem:[%s421 + $0x28] sm:$0xff] %v1524
        %1541 = vst [vmem:[%s421 + $0x30] sm:$0xff] %v1525
        %1542 = vst [vmem:[%s421 + $0x38] sm:$0xff] %v1526
        %1543 = vst [vmem:[%s421 + $0x40] sm:$0xff] %v1527
        %1544 = vst [vmem:[%s421 + $0x48] sm:$0xff] %v1528
        %1545 = vst [vmem:[%s421 + $0x50] sm:$0xff] %v1529
        %1546 = vst [vmem:[%s421 + $0x58] sm:$0xff] %v1530
        %1547 = vst [vmem:[%s421 + $0x60] sm:$0xff] %v1531
        %1548 = vst [vmem:[%s421 + $0x68] sm:$0xff] %v1532
        %1549 = vst [vmem:[%s421 + $0x70] sm:$0xff] %v1533
        %1550 = vst [vmem:[%s421 + $0x78] sm:$0xff] %v1534
        %s1551 = sand.u32 %s296, 1
        %s1552 = scalar_lea.sflag [#allocation3], %s1551
        %s1553 = sand.u32 %s296, 1
        %s1554 = smul.addr %s1553, 128
        %s1555 = scalar_lea.vmem [#allocation2], %s1554
        // Predicated region
        $region69: #{tpu_custom_call.1} parent=67 // pred_check
          %p1556 = pneg %p306
        $region70: #{tpu_custom_call.1} parent=67 // pred_check_branch
          %1558 = sbr.rel (%p1556) target = $region72
        $region71: #{tpu_custom_call.1} parent=67 // pred_region
          %s1560 = ssub.s32 2048, 2048
          %1561 = vsyncadd %s1552, %s1560
          %s1562 = smul.addr %s26, 16
          %s1563 = smul.addr %s1562, 128
          %s1564 = scalar_lea.hbm %s12, %s1563
          %s1565 = sshll.u32 %s1555, 4
          %s1566 = int_to_ptr.vmem [resolvable:$true] %s1565
          %1571 = dma.vmem_to_hbm [thread:$0]  %s1566, 2048, %s1564, %s1552, 256, 256, 16
        $region72: #{tpu_custom_call.1} parent=67 // pred_fallthru
          _
      $region68: #{tpu_custom_call.1} parent=5 // pred_fallthru
        _
      %p1572 = scmp.le.s32.totalorder 2, %s21
      // Predicated region
      $region73: #{tpu_custom_call.1} parent=5 // pred_check
        %p1573 = pneg %p1572
      $region74: #{tpu_custom_call.1} parent=5 // pred_check_branch
        %1575 = sbr.rel (%p1573) target = $region76
      $region75: #{tpu_custom_call.1} parent=5 // pred_region
        %s1576 = ssub.s32 %s21, 2
        // Predicated region
        $region77: #{tpu_custom_call.1} parent=75 // pred_check
          %p1577 = pneg %p312
        $region78: #{tpu_custom_call.1} parent=75 // pred_check_branch
          %1579 = sbr.rel (%p1577) target = $region80
        $region79: #{tpu_custom_call.1} parent=75 // pred_region
          %s1580 = sand.u32 %s297, 1
          %s1581 = scalar_lea.sflag [#allocation3], %s1580
          %s1582 = sand.u32 %s297, 1
          %s1583 = smul.addr %s1582, 128
          %s1584 = scalar_lea.vmem [#allocation2], %s1583
          %1585 = dma.done %s1581, 2048
        $region80: #{tpu_custom_call.1} parent=75 // pred_fallthru
          _
      $region76: #{tpu_custom_call.1} parent=5 // pred_fallthru
        _
    $region6: #{tpu_custom_call.1} parent=1 // loop_footer
      %s25 = sadd.s32 1, %s21
    $region7: #{tpu_custom_call.1} parent=1 // loop_footer_branch
      %20 = sbr.rel target = $region3
    $region8: #{tpu_custom_call.1} parent=1 // loop_exit
      _
    %1586 = vsyncpa [#allocation3], 1
    %s1587 = scalar_lea.sflag [#allocation3], 1
    %1588 = vsyncpa %s1587, 1

// kernel: tpu_custom_call.1
$region0: #{tpu_custom_call.1}
  #allocation0 [shape = 'u32[]', space=smem, size = 0x4, offset = 0x4, fixed_abs, tag = 'smem constant byte address 0x4 - core index']
  #allocation1 [shape = 'u32[144,128]{1,0:T(1,128)}', space=vmem, size = 0x12000, scoped, tag = 'internal scratch']
  %s0 = inlined_call_operand.vmem [shape: bf16[2,64,256], index: 0, kind: input, shape index: {}]
  %s1 = inlined_call_operand.vmem [shape: bf16[2,64,256], index: 1, kind: input, shape index: {}]
  %s2 = inlined_call_operand.vmem [shape: bf16[32,64], index: 2, kind: input, shape index: {}]
  %s3 = inlined_call_operand.vmem [shape: f32[16,1], index: 3, kind: input, shape index: {}]
  %s4 = inlined_call_operand.vmem [shape: f32[16,1], index: 4, kind: input, shape index: {}]
  %s5 = inlined_call_operand.vmem [shape: bf16[64,16], index: 5, kind: input, shape index: {}]
  %s6 = inlined_call_operand.vmem [shape: f32[64,1], index: 6, kind: input, shape index: {}]
  %s7 = inlined_call_operand.vmem [shape: f32[64,16], index: 7, kind: input, shape index: {}]
  %s8 = inlined_call_operand.vmem [shape: bf16[32,64], index: 8, kind: input, shape index: {}]
  %s9 = inlined_call_operand.vmem [shape: f32[16,1], index: 9, kind: input, shape index: {}]
  %s10 = inlined_call_operand.vmem [shape: bf16[64,16], index: 10, kind: input, shape index: {}]
  %s11 = inlined_call_operand.vmem [shape: f32[64,1], index: 11, kind: input, shape index: {}]
  %s12 = inlined_call_operand.hbm [shape: f32[2,64,256], index: 12, kind: output, shape index: {}]
  %s13 = sld [smem:[#allocation0]]
  $region81: #{tpu_custom_call.1} parent=0
    _
  %s15 = ssub.s32 1, %s13
  %s16 = scalar_select 0, %s15, %s13
  $region1: #{tpu_custom_call.1} parent=0
    #allocation2 [shape = 'u8[131072]{0}', space=vmem, size = 0x20000, scoped, tag = 'output window, operand 0']
    #allocation3 [shape = 's32[2]{0}', space=sflag, size = 0x8, scoped, tag = 'scoped memory for tpu_custom_call.1']
    %17 = vsyncpa [#allocation3], 0
    %s18 = scalar_lea.sflag [#allocation3], 1
    %19 = vsyncpa %s18, 0
    loop: start=0, step=1, limit=4
    $region2: #{tpu_custom_call.1} parent=1 // loop_pre_header
      _
    $region3: #{tpu_custom_call.1} parent=1 // loop_header
      %s21 = sphi 0, %s25
      %p22 = scmp.ge.s32.totalorder %s21, 4
      %s31 = sphi 0, %s33
      %s34 = sphi 0, %s31
      %s35 = sphi 0, %s34
      %s51 = sphi 0, %s35
      %s57 = sphi 0, %s59
      %s60 = sphi 0, %s57
      %s61 = sphi 0, %s60
      %s77 = sphi 0, %s61
      %s81 = sphi 0, %s81
      %s83 = sphi 0, %s81
      %s84 = sphi 0, %s83
      %s98 = sphi 0, %s84
      %s102 = sphi 0, %s102
      %s104 = sphi 0, %s102
      %s105 = sphi 0, %s104
      %s119 = sphi 0, %s105
      %s123 = sphi 0, %s123
      %s125 = sphi 0, %s123
      %s126 = sphi 0, %s125
      %s140 = sphi 0, %s126
      %s144 = sphi 0, %s144
      %s146 = sphi 0, %s144
      %s147 = sphi 0, %s146
      %s161 = sphi 0, %s147
      %s165 = sphi 0, %s165
      %s167 = sphi 0, %s165
      %s168 = sphi 0, %s167
      %s182 = sphi 0, %s168
      %s186 = sphi 0, %s186
      %s188 = sphi 0, %s186
      %s189 = sphi 0, %s188
      %s203 = sphi 0, %s189
      %s207 = sphi 0, %s207
      %s209 = sphi 0, %s207
      %s210 = sphi 0, %s209
      %s224 = sphi 0, %s210
      %s228 = sphi 0, %s228
      %s230 = sphi 0, %s228
      %s231 = sphi 0, %s230
      %s245 = sphi 0, %s231
      %s249 = sphi 0, %s249
      %s251 = sphi 0, %s249
      %s252 = sphi 0, %s251
      %s266 = sphi 0, %s252
      %s270 = sphi 0, %s270
      %s272 = sphi 0, %s270
      %s273 = sphi 0, %s272
      %s287 = sphi 0, %s273
      %s293 = sphi 0, %s295
      %s296 = sphi 0, %s293
      %s297 = sphi 0, %s296
      %s313 = sphi 0, %s297
    $region4: #{tpu_custom_call.1} parent=1 // loop_header_branch
      %24 = sbr.rel (%p22) target = $region8
    $region5: #{tpu_custom_call.1} parent=1 // loop_body
      %s26 = ssub.s32 %s21, 1
      %s27 = ssub.s32 %s21, 2
      %s28 = sadd.s32 %s21, 1
      %s29 = ssub.s32 %s21, %s28
      %p30 = scmp.eq.s32.totalorder %s29, 0
      %s32 = sadd.s32 %s31, 1
      %s33 = scalar_select %p30, %s31, %s32
      %p36 = pneg %p30
      %p37 = scmp.eq.s32.totalorder %s21, 1
      %p38 = por %p36, %p37
      %p39 = scmp.ne.s32.totalorder %s31, %s34
      %p40 = scmp.eq.s32.totalorder %s21, 0
      %p41 = por %p39, %p40
      %p42 = scmp.ne.s32.totalorder %s31, %s34
      %p43 = scmp.eq.s32.totalorder %s26, 1
      %p44 = por %p42, %p43
      %p45 = scmp.ne.s32.totalorder %s34, %s35
      %p46 = scmp.eq.s32.totalorder %s26, 0
      %p47 = por %p45, %p46
      %p48 = scmp.ne.s32.totalorder %s34, %s35
      %p49 = scmp.eq.s32.totalorder %s27, 1
      %p50 = por %p48, %p49
      %p52 = scmp.ne.s32.totalorder %s35, %s51
      %p53 = scmp.eq.s32.totalorder %s27, 0
      %p54 = por %p52, %p53
      %s55 = ssub.s32 %s21, %s28
      %p56 = scmp.eq.s32.totalorder %s55, 0
      %s58 = sadd.s32 %s57, 1
      %s59 = scalar_select %p56, %s57, %s58
      %p62 = pneg %p56
      %p63 = scmp.eq.s32.totalorder %s21, 1
      %p64 = por %p62, %p63
      %p65 = scmp.ne.s32.totalorder %s57, %s60
      %p66 = scmp.eq.s32.totalorder %s21, 0
      %p67 = por %p65, %p66
      %p68 = scmp.ne.s32.totalorder %s57, %s60
      %p69 = scmp.eq.s32.totalorder %s26, 1
      %p70 = por %p68, %p69
      %p71 = scmp.ne.s32.totalorder %s60, %s61
      %p72 = scmp.eq.s32.totalorder %s26, 0
      %p73 = por %p71, %p72
      %p74 = scmp.ne.s32.totalorder %s60, %s61
      %p75 = scmp.eq.s32.totalorder %s27, 1
      %p76 = por %p74, %p75
      %p78 = scmp.ne.s32.totalorder %s61, %s77
      %p79 = scmp.eq.s32.totalorder %s27, 0
      %p80 = por %p78, %p79
      %s82 = sadd.s32 %s81, 1
      %p85 = scmp.eq.s32.totalorder %s21, 1
      %p86 = scmp.ne.s32.totalorder %s81, %s83
      %p87 = scmp.eq.s32.totalorder %s21, 0
      %p88 = por %p86, %p87
      %p89 = scmp.ne.s32.totalorder %s81, %s83
      %p90 = scmp.eq.s32.totalorder %s26, 1
      %p91 = por %p89, %p90
      %p92 = scmp.ne.s32.totalorder %s83, %s84
      %p93 = scmp.eq.s32.totalorder %s26, 0
      %p94 = por %p92, %p93
      %p95 = scmp.ne.s32.totalorder %s83, %s84
      %p96 = scmp.eq.s32.totalorder %s27, 1
      %p97 = por %p95, %p96
      %p99 = scmp.ne.s32.totalorder %s84, %s98
      %p100 = scmp.eq.s32.totalorder %s27, 0
      %p101 = por %p99, %p100
      %s103 = sadd.s32 %s102, 1
      %p106 = scmp.eq.s32.totalorder %s21, 1
      %p107 = scmp.ne.s32.totalorder %s102, %s104
      %p108 = scmp.eq.s32.totalorder %s21, 0
      %p109 = por %p107, %p108
      %p110 = scmp.ne.s32.totalorder %s102, %s104
      %p111 = scmp.eq.s32.totalorder %s26, 1
      %p112 = por %p110, %p111
      %p113 = scmp.ne.s32.totalorder %s104, %s105
      %p114 = scmp.eq.s32.totalorder %s26, 0
      %p115 = por %p113, %p114
      %p116 = scmp.ne.s32.totalorder %s104, %s105
      %p117 = scmp.eq.s32.totalorder %s27, 1
      %p118 = por %p116, %p117
      %p120 = scmp.ne.s32.totalorder %s105, %s119
      %p121 = scmp.eq.s32.totalorder %s27, 0
      %p122 = por %p120, %p121
      %s124 = sadd.s32 %s123, 1
      %p127 = scmp.eq.s32.totalorder %s21, 1
      %p128 = scmp.ne.s32.totalorder %s123, %s125
      %p129 = scmp.eq.s32.totalorder %s21, 0
      %p130 = por %p128, %p129
      %p131 = scmp.ne.s32.totalorder %s123, %s125
      %p132 = scmp.eq.s32.totalorder %s26, 1
      %p133 = por %p131, %p132
      %p134 = scmp.ne.s32.totalorder %s125, %s126
      %p135 = scmp.eq.s32.totalorder %s26, 0
      %p136 = por %p134, %p135
      %p137 = scmp.ne.s32.totalorder %s125, %s126
      %p138 = scmp.eq.s32.totalorder %s27, 1
      %p139 = por %p137, %p138
      %p141 = scmp.ne.s32.totalorder %s126, %s140
      %p142 = scmp.eq.s32.totalorder %s27, 0
      %p143 = por %p141, %p142
      %s145 = sadd.s32 %s144, 1
      %p148 = scmp.eq.s32.totalorder %s21, 1
      %p149 = scmp.ne.s32.totalorder %s144, %s146
      %p150 = scmp.eq.s32.totalorder %s21, 0
      %p151 = por %p149, %p150
      %p152 = scmp.ne.s32.totalorder %s144, %s146
      %p153 = scmp.eq.s32.totalorder %s26, 1
      %p154 = por %p152, %p153
      %p155 = scmp.ne.s32.totalorder %s146, %s147
      %p156 = scmp.eq.s32.totalorder %s26, 0
      %p157 = por %p155, %p156
      %p158 = scmp.ne.s32.totalorder %s146, %s147
      %p159 = scmp.eq.s32.totalorder %s27, 1
      %p160 = por %p158, %p159
      %p162 = scmp.ne.s32.totalorder %s147, %s161
      %p163 = scmp.eq.s32.totalorder %s27, 0
      %p164 = por %p162, %p163
      %s166 = sadd.s32 %s165, 1
      %p169 = scmp.eq.s32.totalorder %s21, 1
      %p170 = scmp.ne.s32.totalorder %s165, %s167
      %p171 = scmp.eq.s32.totalorder %s21, 0
      %p172 = por %p170, %p171
      %p173 = scmp.ne.s32.totalorder %s165, %s167
      %p174 = scmp.eq.s32.totalorder %s26, 1
      %p175 = por %p173, %p174
      %p176 = scmp.ne.s32.totalorder %s167, %s168
      %p177 = scmp.eq.s32.totalorder %s26, 0
      %p178 = por %p176, %p177
      %p179 = scmp.ne.s32.totalorder %s167, %s168
      %p180 = scmp.eq.s32.totalorder %s27, 1
      %p181 = por %p179, %p180
      %p183 = scmp.ne.s32.totalorder %s168, %s182
      %p184 = scmp.eq.s32.totalorder %s27, 0
      %p185 = por %p183, %p184
      %s187 = sadd.s32 %s186, 1
      %p190 = scmp.eq.s32.totalorder %s21, 1
      %p191 = scmp.ne.s32.totalorder %s186, %s188
      %p192 = scmp.eq.s32.totalorder %s21, 0
      %p193 = por %p191, %p192
      %p194 = scmp.ne.s32.totalorder %s186, %s188
      %p195 = scmp.eq.s32.totalorder %s26, 1
      %p196 = por %p194, %p195
      %p197 = scmp.ne.s32.totalorder %s188, %s189
      %p198 = scmp.eq.s32.totalorder %s26, 0
      %p199 = por %p197, %p198
      %p200 = scmp.ne.s32.totalorder %s188, %s189
      %p201 = scmp.eq.s32.totalorder %s27, 1
      %p202 = por %p200, %p201
      %p204 = scmp.ne.s32.totalorder %s189, %s203
      %p205 = scmp.eq.s32.totalorder %s27, 0
      %p206 = por %p204, %p205
      %s208 = sadd.s32 %s207, 1
      %p211 = scmp.eq.s32.totalorder %s21, 1
      %p212 = scmp.ne.s32.totalorder %s207, %s209
      %p213 = scmp.eq.s32.totalorder %s21, 0
      %p214 = por %p212, %p213
      %p215 = scmp.ne.s32.totalorder %s207, %s209
      %p216 = scmp.eq.s32.totalorder %s26, 1
      %p217 = por %p215, %p216
      %p218 = scmp.ne.s32.totalorder %s209, %s210
      %p219 = scmp.eq.s32.totalorder %s26, 0
      %p220 = por %p218, %p219
      %p221 = scmp.ne.s32.totalorder %s209, %s210
      %p222 = scmp.eq.s32.totalorder %s27, 1
      %p223 = por %p221, %p222
      %p225 = scmp.ne.s32.totalorder %s210, %s224
      %p226 = scmp.eq.s32.totalorder %s27, 0
      %p227 = por %p225, %p226
      %s229 = sadd.s32 %s228, 1
      %p232 = scmp.eq.s32.totalorder %s21, 1
      %p233 = scmp.ne.s32.totalorder %s228, %s230
      %p234 = scmp.eq.s32.totalorder %s21, 0
      %p235 = por %p233, %p234
      %p236 = scmp.ne.s32.totalorder %s228, %s230
      %p237 = scmp.eq.s32.totalorder %s26, 1
      %p238 = por %p236, %p237
      %p239 = scmp.ne.s32.totalorder %s230, %s231
      %p240 = scmp.eq.s32.totalorder %s26, 0
      %p241 = por %p239, %p240
      %p242 = scmp.ne.s32.totalorder %s230, %s231
      %p243 = scmp.eq.s32.totalorder %s27, 1
      %p244 = por %p242, %p243
      %p246 = scmp.ne.s32.totalorder %s231, %s245
      %p247 = scmp.eq.s32.totalorder %s27, 0
      %p248 = por %p246, %p247
      %s250 = sadd.s32 %s249, 1
      %p253 = scmp.eq.s32.totalorder %s21, 1
      %p254 = scmp.ne.s32.totalorder %s249, %s251
      %p255 = scmp.eq.s32.totalorder %s21, 0
      %p256 = por %p254, %p255
      %p257 = scmp.ne.s32.totalorder %s249, %s251
      %p258 = scmp.eq.s32.totalorder %s26, 1
      %p259 = por %p257, %p258
      %p260 = scmp.ne.s32.totalorder %s251, %s252
      %p261 = scmp.eq.s32.totalorder %s26, 0
      %p262 = por %p260, %p261
      %p263 = scmp.ne.s32.totalorder %s251, %s252
      %p264 = scmp.eq.s32.totalorder %s27, 1
      %p265 = por %p263, %p264
      %p267 = scmp.ne.s32.totalorder %s252, %s266
      %p268 = scmp.eq.s32.totalorder %s27, 0
      %p269 = por %p267, %p268
      %s271 = sadd.s32 %s270, 1
      %p274 = scmp.eq.s32.totalorder %s21, 1
      %p275 = scmp.ne.s32.totalorder %s270, %s272
      %p276 = scmp.eq.s32.totalorder %s21, 0
      %p277 = por %p275, %p276
      %p278 = scmp.ne.s32.totalorder %s270, %s272
      %p279 = scmp.eq.s32.totalorder %s26, 1
      %p280 = por %p278, %p279
      %p281 = scmp.ne.s32.totalorder %s272, %s273
      %p282 = scmp.eq.s32.totalorder %s26, 0
      %p283 = por %p281, %p282
      %p284 = scmp.ne.s32.totalorder %s272, %s273
      %p285 = scmp.eq.s32.totalorder %s27, 1
      %p286 = por %p284, %p285
      %p288 = scmp.ne.s32.totalorder %s273, %s287
      %p289 = scmp.eq.s32.totalorder %s27, 0
      %p290 = por %p288, %p289
      %s291 = ssub.s32 %s21, %s28
      %p292 = scmp.eq.s32.totalorder %s291, 0
      %s294 = sadd.s32 %s293, 1
      %s295 = scalar_select %p292, %s293, %s294
      %p298 = pneg %p292
      %p299 = scmp.eq.s32.totalorder %s21, 1
      %p300 = por %p298, %p299
      %p301 = scmp.ne.s32.totalorder %s293, %s296
      %p302 = scmp.eq.s32.totalorder %s21, 0
      %p303 = por %p301, %p302
      %p304 = scmp.ne.s32.totalorder %s293, %s296
      %p305 = scmp.eq.s32.totalorder %s26, 1
      %p306 = por %p304, %p305
      %p307 = scmp.ne.s32.totalorder %s296, %s297
      %p308 = scmp.eq.s32.totalorder %s26, 0
      %p309 = por %p307, %p308
      %p310 = scmp.ne.s32.totalorder %s296, %s297
      %p311 = scmp.eq.s32.totalorder %s27, 1
      %p312 = por %p310, %p311
      %p314 = scmp.ne.s32.totalorder %s297, %s313
      %p315 = scmp.eq.s32.totalorder %s27, 0
      %p316 = por %p314, %p315
      %p317 = scmp.le.s32.totalorder 1, %s21
      %p318 = scmp.lt.s32.totalorder %s21, 3
      %p319 = pnand %p317, %p318
      %p320 = pneg %p319
      // Predicated region
      $region9: #{tpu_custom_call.1} parent=5 // pred_check
        _
      $region10: #{tpu_custom_call.1} parent=5 // pred_check_branch
        %322 = sbr.rel (%p319) target = $region12
      $region11: #{tpu_custom_call.1} parent=5 // pred_region
        %s323 = ssub.s32 %s21, 1
        // Predicated region
        $region13: #{tpu_custom_call.1} parent=11 // pred_check
          %p324 = pneg %p94
        $region14: #{tpu_custom_call.1} parent=11 // pred_check_branch
          %326 = sbr.rel (%p324) target = $region16
        $region15: #{tpu_custom_call.1} parent=11 // pred_region
          _
        $region16: #{tpu_custom_call.1} parent=11 // pred_fallthru
          _
        // Predicated region
        $region17: #{tpu_custom_call.1} parent=11 // pred_check
          %p327 = pneg %p115
        $region18: #{tpu_custom_call.1} parent=11 // pred_check_branch
          %329 = sbr.rel (%p327) target = $region20
        $region19: #{tpu_custom_call.1} parent=11 // pred_region
          _
        $region20: #{tpu_custom_call.1} parent=11 // pred_fallthru
          _
        // Predicated region
        $region21: #{tpu_custom_call.1} parent=11 // pred_check
          %p330 = pneg %p136
        $region22: #{tpu_custom_call.1} parent=11 // pred_check_branch
          %332 = sbr.rel (%p330) target = $region24
        $region23: #{tpu_custom_call.1} parent=11 // pred_region
          _
        $region24: #{tpu_custom_call.1} parent=11 // pred_fallthru
          _
        // Predicated region
        $region25: #{tpu_custom_call.1} parent=11 // pred_check
          %p333 = pneg %p157
        $region26: #{tpu_custom_call.1} parent=11 // pred_check_branch
          %335 = sbr.rel (%p333) target = $region28
        $region27: #{tpu_custom_call.1} parent=11 // pred_region
          _
        $region28: #{tpu_custom_call.1} parent=11 // pred_fallthru
          _
        // Predicated region
        $region29: #{tpu_custom_call.1} parent=11 // pred_check
          %p336 = pneg %p178
        $region30: #{tpu_custom_call.1} parent=11 // pred_check_branch
          %338 = sbr.rel (%p336) target = $region32
        $region31: #{tpu_custom_call.1} parent=11 // pred_region
          _
        $region32: #{tpu_custom_call.1} parent=11 // pred_fallthru
          _
        // Predicated region
        $region33: #{tpu_custom_call.1} parent=11 // pred_check
          %p339 = pneg %p199
        $region34: #{tpu_custom_call.1} parent=11 // pred_check_branch
          %341 = sbr.rel (%p339) target = $region36
        $region35: #{tpu_custom_call.1} parent=11 // pred_region
          _
        $region36: #{tpu_custom_call.1} parent=11 // pred_fallthru
          _
        // Predicated region
        $region37: #{tpu_custom_call.1} parent=11 // pred_check
          %p342 = pneg %p220
        $region38: #{tpu_custom_call.1} parent=11 // pred_check_branch
          %344 = sbr.rel (%p342) target = $region40
        $region39: #{tpu_custom_call.1} parent=11 // pred_region
          _
        $region40: #{tpu_custom_call.1} parent=11 // pred_fallthru
          _
        // Predicated region
        $region41: #{tpu_custom_call.1} parent=11 // pred_check
          %p345 = pneg %p241
        $region42: #{tpu_custom_call.1} parent=11 // pred_check_branch
          %347 = sbr.rel (%p345) target = $region44
        $region43: #{tpu_custom_call.1} parent=11 // pred_region
          _
        $region44: #{tpu_custom_call.1} parent=11 // pred_fallthru
          _
        // Predicated region
        $region45: #{tpu_custom_call.1} parent=11 // pred_check
          %p348 = pneg %p262
        $region46: #{tpu_custom_call.1} parent=11 // pred_check_branch
          %350 = sbr.rel (%p348) target = $region48
        $region47: #{tpu_custom_call.1} parent=11 // pred_region
          _
        $region48: #{tpu_custom_call.1} parent=11 // pred_fallthru
          _
        // Predicated region
        $region49: #{tpu_custom_call.1} parent=11 // pred_check
          %p351 = pneg %p283
        $region50: #{tpu_custom_call.1} parent=11 // pred_check_branch
          %353 = sbr.rel (%p351) target = $region52
        $region51: #{tpu_custom_call.1} parent=11 // pred_region
          _
        $region52: #{tpu_custom_call.1} parent=11 // pred_fallthru
          _
      $region12: #{tpu_custom_call.1} parent=5 // pred_fallthru
        _
      %p354 = scmp.lt.s32.totalorder %s21, 2
      // Predicated region
      $region53: #{tpu_custom_call.1} parent=5 // pred_check
        %p355 = pneg %p354
      $region54: #{tpu_custom_call.1} parent=5 // pred_check_branch
        %357 = sbr.rel (%p355) target = $region56
      $region55: #{tpu_custom_call.1} parent=5 // pred_region
        // Predicated region
        $region57: #{tpu_custom_call.1} parent=55 // pred_check
          %p358 = pneg %p41
        $region58: #{tpu_custom_call.1} parent=55 // pred_check_branch
          %360 = sbr.rel (%p358) target = $region60
        $region59: #{tpu_custom_call.1} parent=55 // pred_region
          %p361 = scmp.lt.s32.totalorder %s21, 1
          %s362 = scalar_select %p361, %s21, 1
          %s363 = smul.addr %s362, 16
          %s364 = smul.addr %s363, 4
          %s365 = scalar_lea.vmem %s0, %s364
        $region60: #{tpu_custom_call.1} parent=55 // pred_fallthru
          _
        // Predicated region
        $region61: #{tpu_custom_call.1} parent=55 // pred_check
          %p366 = pneg %p67
        $region62: #{tpu_custom_call.1} parent=55 // pred_check_branch
          %368 = sbr.rel (%p366) target = $region64
        $region63: #{tpu_custom_call.1} parent=55 // pred_region
          %p369 = scmp.lt.s32.totalorder %s21, 1
          %s370 = scalar_select %p369, %s21, 1
          %s371 = smul.addr %s370, 16
          %s372 = smul.addr %s371, 4
          %s373 = scalar_lea.vmem %s1, %s372
        $region64: #{tpu_custom_call.1} parent=55 // pred_fallthru
          _
      $region56: #{tpu_custom_call.1} parent=5 // pred_fallthru
        _
      %p374 = scmp.le.s32.totalorder 1, %s21
      %p375 = scmp.lt.s32.totalorder %s21, 3
      %p376 = pnand %p374, %p375
      %p377 = pneg %p376
      // Predicated region
      $region65: #{tpu_custom_call.1} parent=5 // pred_check
        _
      $region66: #{tpu_custom_call.1} parent=5 // pred_check_branch
        %379 = sbr.rel (%p376) target = $region68
      $region67: #{tpu_custom_call.1} parent=5 // pred_region
        %s380 = ssub.s32 %s21, 1
        %p381 = scmp.lt.s32.totalorder %s26, 1
        %s382 = scalar_select %p381, %s26, 1
        %s383 = smul.addr %s382, 16
        %s384 = smul.addr %s383, 4
        %s385 = scalar_lea.vmem %s0, %s384
        %p386 = pneg %p47
        %p387 = pneg %p44
        %p388 = scmp.lt.s32.totalorder %s26, 1
        %s389 = scalar_select %p388, %s26, 1
        %s390 = smul.addr %s389, 16
        %s391 = smul.addr %s390, 4
        %s392 = scalar_lea.vmem %s1, %s391
        %p393 = pneg %p73
        %p394 = pneg %p70
        %p395 = pneg %p94
        %p396 = pneg %p91
        %p397 = pneg %p115
        %p398 = pneg %p112
        %p399 = pneg %p136
        %p400 = pneg %p133
        %p401 = pneg %p157
        %p402 = pneg %p154
        %p403 = pneg %p178
        %p404 = pneg %p175
        %p405 = pneg %p199
        %p406 = pneg %p196
        %p407 = pneg %p220
        %p408 = pneg %p217
        %p409 = pneg %p241
        %p410 = pneg %p238
        %p411 = pneg %p262
        %p412 = pneg %p259
        %p413 = pneg %p283
        %p414 = pneg %p280
        %p415 = pneg %p309
        %p416 = pneg %p306
        %s417 = sand.u32 %s296, 1
        %s418 = scalar_lea.sflag [#allocation3], %s417
        %s419 = sand.u32 %s296, 1
        %s420 = smul.addr %s419, 128
        %s421 = scalar_lea.vmem [#allocation2], %s420
        %p422 = scmp.lt.s32.totalorder %s26, 1
        %s423 = scalar_select %p422, %s26, 1
        %s424 = smul.addr %s423, 16
        %s425 = smul.addr %s424, 4
        %s426 = scalar_lea.vmem %s0, %s425
        %p427 = scmp.lt.s32.totalorder %s26, 1
        %s428 = scalar_select %p427, %s26, 1
        %s429 = smul.addr %s428, 16
        %s430 = smul.addr %s429, 4
        %s431 = scalar_lea.vmem %s1, %s430
        %v433 = vld [vmem:[%s426] sm:$0xff]
        %v434 = vld [vmem:[%s426 + $0x8] sm:$0xff]
        %v435 = vld [vmem:[%s426 + $0x10] sm:$0xff]
        %v436 = vld [vmem:[%s426 + $0x18] sm:$0xff]
        %v437 = vld [vmem:[%s426 + $0x20] sm:$0xff]
        %v438 = vld [vmem:[%s426 + $0x28] sm:$0xff]
        %v439 = vld [vmem:[%s426 + $0x30] sm:$0xff]
        %v440 = vld [vmem:[%s426 + $0x38] sm:$0xff]
        %v441 = vunpack.c.l.bf16 %v433
        %v442 = vunpack.c.h.bf16 %v433
        %v443 = vunpack.c.l.bf16 %v434
        %v444 = vunpack.c.h.bf16 %v434
        %v445 = vunpack.c.l.bf16 %v435
        %v446 = vunpack.c.h.bf16 %v435
        %v447 = vunpack.c.l.bf16 %v436
        %v448 = vunpack.c.h.bf16 %v436
        %v449 = vunpack.c.l.bf16 %v437
        %v450 = vunpack.c.h.bf16 %v437
        %v451 = vunpack.c.l.bf16 %v438
        %v452 = vunpack.c.h.bf16 %v438
        %v453 = vunpack.c.l.bf16 %v439
        %v454 = vunpack.c.h.bf16 %v439
        %v455 = vunpack.c.l.bf16 %v440
        %v456 = vunpack.c.h.bf16 %v440
        %v457 = vld [vmem:[%s431] sm:$0xff]
        %v458 = vld [vmem:[%s431 + $0x8] sm:$0xff]
        %v459 = vld [vmem:[%s431 + $0x10] sm:$0xff]
        %v460 = vld [vmem:[%s431 + $0x18] sm:$0xff]
        %v461 = vld [vmem:[%s431 + $0x20] sm:$0xff]
        %v462 = vld [vmem:[%s431 + $0x28] sm:$0xff]
        %v463 = vld [vmem:[%s431 + $0x30] sm:$0xff]
        %v464 = vld [vmem:[%s431 + $0x38] sm:$0xff]
        %v465 = vunpack.c.l.bf16 %v457
        %v466 = vunpack.c.h.bf16 %v457
        %v467 = vunpack.c.l.bf16 %v458
        %v468 = vunpack.c.h.bf16 %v458
        %v469 = vunpack.c.l.bf16 %v459
        %v470 = vunpack.c.h.bf16 %v459
        %v471 = vunpack.c.l.bf16 %v460
        %v472 = vunpack.c.h.bf16 %v460
        %v473 = vunpack.c.l.bf16 %v461
        %v474 = vunpack.c.h.bf16 %v461
        %v475 = vunpack.c.l.bf16 %v462
        %v476 = vunpack.c.h.bf16 %v462
        %v477 = vunpack.c.l.bf16 %v463
        %v478 = vunpack.c.h.bf16 %v463
        %v479 = vunpack.c.l.bf16 %v464
        %v480 = vunpack.c.h.bf16 %v464
        %v481 = vsub.f32 %v441, %v465
        %v482 = vsub.f32 %v442, %v466
        %v483 = vsub.f32 %v443, %v467
        %v484 = vsub.f32 %v444, %v468
        %v485 = vsub.f32 %v445, %v469
        %v486 = vsub.f32 %v446, %v470
        %v487 = vsub.f32 %v447, %v471
        %v488 = vsub.f32 %v448, %v472
        %v489 = vsub.f32 %v449, %v473
        %v490 = vsub.f32 %v450, %v474
        %v491 = vsub.f32 %v451, %v475
        %v492 = vsub.f32 %v452, %v476
        %v493 = vsub.f32 %v453, %v477
        %v494 = vsub.f32 %v454, %v478
        %v495 = vsub.f32 %v455, %v479
        %v496 = vsub.f32 %v456, %v480
        %v497 = vadd.f32 %v441, %v465
        %v498 = vadd.f32 %v442, %v466
        %v499 = vadd.f32 %v443, %v467
        %v500 = vadd.f32 %v444, %v468
        %v501 = vadd.f32 %v445, %v469
        %v502 = vadd.f32 %v446, %v470
        %v503 = vadd.f32 %v447, %v471
        %v504 = vadd.f32 %v448, %v472
        %v505 = vadd.f32 %v449, %v473
        %v506 = vadd.f32 %v450, %v474
        %v507 = vadd.f32 %v451, %v475
        %v508 = vadd.f32 %v452, %v476
        %v509 = vadd.f32 %v453, %v477
        %v510 = vadd.f32 %v454, %v478
        %v511 = vadd.f32 %v455, %v479
        %v512 = vadd.f32 %v456, %v480
        %v513 = vld [vmem:[%s7] sm:$0xff]
        %v514 = vld [vmem:[%s7 + $0x8] sm:$0xff]
        %v515 = vld [vmem:[%s7 + $0x10] sm:$0xff]
        %v516 = vld [vmem:[%s7 + $0x18] sm:$0xff]
        %v517 = vld [vmem:[%s7 + $0x20] sm:$0xff]
        %v518 = vld [vmem:[%s7 + $0x28] sm:$0xff]
        %v519 = vld [vmem:[%s7 + $0x30] sm:$0xff]
        %v520 = vld [vmem:[%s7 + $0x38] sm:$0xff]
        %v521 = vld [vmem:[%s4] sm:$0xff]
        %v522 = vld [vmem:[%s4 + $0x8] sm:$0xff]
        %v523 = vld [vmem:[%s3] sm:$0xff]
        %v524 = vld [vmem:[%s3 + $0x8] sm:$0xff]
        %v525 = vld [vmem:[%s6] sm:$0xff]
        %v526 = vld [vmem:[%s6 + $0x8] sm:$0xff]
        %v527 = vld [vmem:[%s6 + $0x10] sm:$0xff]
        %v528 = vld [vmem:[%s6 + $0x18] sm:$0xff]
        %v529 = vld [vmem:[%s6 + $0x20] sm:$0xff]
        %v530 = vld [vmem:[%s6 + $0x28] sm:$0xff]
        %v531 = vld [vmem:[%s6 + $0x30] sm:$0xff]
        %v532 = vld [vmem:[%s6 + $0x38] sm:$0xff]
        %v533 = vpack.c.bf16 %v499, %v497
        %v534 = vpack.c.bf16 %v500, %v498
        %v535 = vpack.c.bf16 %v503, %v501
        %v536 = vpack.c.bf16 %v504, %v502
        %v537 = vpack.c.bf16 %v507, %v505
        %v538 = vpack.c.bf16 %v508, %v506
        %v539 = vpack.c.bf16 %v511, %v509
        %v540 = vpack.c.bf16 %v512, %v510
        %v541 = vld [vmem:[%s2] sm:$0xf]
        %v542 = vld [vmem:[%s2 + $0x4] sm:$0xf]
        %v543 = vld [vmem:[%s2 + $0x8] sm:$0xf]
        %v544 = vld [vmem:[%s2 + $0xc] sm:$0xf]
        %v549 = vunpack.c.l.b16 %v541
        %v550 = vunpack.c.l.b16 %v542
        %v551 = vunpack.c.l.b16 %v543
        %v552 = vunpack.c.l.b16 %v544
        %v553 = vpack.c.b16 %v550, %v549
        %v554 = vpack.c.b16 %v552, %v551
        %vm555 = vcmask 523264
        %v557 = vsel %vm555, %v553, 0
        %v560 = vsel %vm555, %v554, 0
        %562 = vmatprep.subr.bf16.mxu0 0
        %563 = vmatpush1.bf16.msra.mxu0 0
        %564 = vmatprep.subr.bf16.mxu0 0
        %565 = vmatpush1.bf16.msra.mxu0 0
        %566 = vmatprep.subr.bf16.mxu0 0
        %567 = vmatpush1.bf16.msra.mxu0 0
        %568 = vmatprep.subr.bf16.mxu0 0
        %569 = vmatpush1.bf16.msra.mxu0 0
        %570 = vmatprep.subr.bf16.mxu0 %v540
        %571 = vmatpush1.bf16.msra.mxu0 %v539
        %572 = vmatprep.subr.bf16.mxu0 %v538
        %573 = vmatpush1.bf16.msra.mxu0 %v537
        %574 = vmatprep.subr.bf16.mxu0 %v536
        %575 = vmatpush1.bf16.msra.mxu0 %v535
        %576 = vmatprep.subr.bf16.mxu0 %v534
        %577 = vmatpush1.bf16.msra.mxu0 %v533
        %578 = vmatprep.subr.bf16.mxu0 0
        %579 = vmatpush2.bf16.msra.mxu0 0
        %580 = vmatprep.subr.bf16.mxu0 0
        %581 = vmatpush2.bf16.msra.mxu0 0
        %582 = vmatprep.subr.bf16.mxu0 0
        %583 = vmatpush2.bf16.msra.mxu0 0
        %584 = vmatprep.subr.bf16.mxu0 0
        %585 = vmatpush2.bf16.msra.mxu0 0
        %586 = vmatprep.subr.bf16.mxu0 0
        %587 = vmatpush2.bf16.msra.mxu0 0
        %588 = vmatprep.subr.bf16.mxu0 0
        %589 = vmatpush2.bf16.msra.mxu0 0
        %590 = vmatprep.subr.bf16.mxu0 0
        %591 = vmatpush2.bf16.msra.mxu0 0
        %592 = vmatprep.subr.bf16.mxu0 0
        %593 = vmatpush2.bf16.msra.mxu0 0
        %594 = vmatprep.mubr.bf16.mxu0 0
        %595 = vmatmul.mubr.bf16.gmra.mxu0 %v557
        %v596 = vpop.f32.mrf.mxu0
        %v597 = vadd.f32 0.0, %v596
        %v598 = vpop.f32.mrf.mxu0
        %v599 = vadd.f32 0.0, %v598
        %v600 = vpop.f32.mrf.mxu0
        %v601 = vadd.f32 0.0, %v600
        %v602 = vpop.f32.mrf.mxu0
        %v603 = vadd.f32 0.0, %v602
        %604 = vmatprep.mubr.bf16.mxu0 0
        %605 = vmatmul.mubr.bf16.gmra.mxu0 %v560
        %v606 = vpop.f32.mrf.mxu0
        %v607 = vadd.f32 0.0, %v606
        %v608 = vpop.f32.mrf.mxu0
        %v609 = vadd.f32 0.0, %v608
        %v610 = vpop.f32.mrf.mxu0
        %v611 = vadd.f32 0.0, %v610
        %v612 = vpop.f32.mrf.mxu0
        %v613 = vadd.f32 0.0, %v612
        %614 = vdwg.mxu0
        %616 = vset.pattern.permute.xlu0 0
        %617 = vperm.xlu0 %616, %v523
        %v618 = vpop.permute.xlu0 %617
        %621 = vset.pattern.permute.xlu0 0
        %622 = vperm.xlu0 %621, %v524
        %v623 = vpop.permute.xlu0 %622
        %v625 = vadd.f32 %v597, %v618
        %v626 = vadd.f32 %v599, %v618
        %v627 = vadd.f32 %v601, %v623
        %v628 = vadd.f32 %v603, %v623
        %v629 = vmax.f32 %v625, 0.0
        %v630 = vmax.f32 %v626, 0.0
        %v631 = vmax.f32 %v627, 0.0
        %v632 = vmax.f32 %v628, 0.0
        %v633 = vadd.f32 %v607, %v609
        %634 = vadd.xlane.f32.xlu0 %v633
        %v635 = vpop.xlane.xlu0 %634
        %v636 = vadd.f32 %v611, %v613
        %637 = vadd.xlane.f32.xlu0 %v636
        %v638 = vpop.xlane.xlu0 %637
        %v639 = vmul.f32 %v635, 0.00390625
        %v640 = vmul.f32 %v638, 0.00390625
        %v641 = vadd.f32 %v639, %v521
        %v642 = vadd.f32 %v640, %v522
        %v643 = vmax.f32 %v641, 0.0
        %v644 = vmax.f32 %v642, 0.0
        %vm645 = vcmask 130048
        %v647 = vsel %vm645, %v513, 0
        %v650 = vsel %vm645, %v514, 0
        %v653 = vsel %vm645, %v515, 0
        %v656 = vsel %vm645, %v516, 0
        %v659 = vsel %vm645, %v517, 0
        %v662 = vsel %vm645, %v518, 0
        %v665 = vsel %vm645, %v519, 0
        %v668 = vsel %vm645, %v520, 0
        %670 = vmatprep.subr.mxu0 0.0
        %671 = vmatpush1.msra.mxu0 0.0
        %672 = vmatprep.subr.mxu0 0.0
        %673 = vmatpush1.msra.mxu0 0.0
        %674 = vmatprep.subr.mxu0 0.0
        %675 = vmatpush1.msra.mxu0 0.0
        %676 = vmatprep.subr.mxu0 0.0
        %677 = vmatpush1.msra.mxu0 0.0
        %678 = vmatprep.subr.mxu0 0.0
        %679 = vmatpush1.msra.mxu0 0.0
        %680 = vmatprep.subr.mxu0 0.0
        %681 = vmatpush1.msra.mxu0 0.0
        %682 = vmatprep.subr.mxu0 0.0
        %683 = vmatpush1.msra.mxu0 0.0
        %684 = vmatprep.subr.mxu0 0.0
        %685 = vmatpush1.msra.mxu0 0.0
        %686 = vmatprep.subr.mxu0 0.0
        %687 = vmatpush1.msra.mxu0 0.0
        %688 = vmatprep.subr.mxu0 0.0
        %689 = vmatpush1.msra.mxu0 0.0
        %690 = vmatprep.subr.mxu0 0.0
        %691 = vmatpush1.msra.mxu0 0.0
        %692 = vmatprep.subr.mxu0 0.0
        %693 = vmatpush1.msra.mxu0 0.0
        %694 = vmatprep.subr.mxu0 0.0
        %695 = vmatpush1.msra.mxu0 0.0
        %696 = vmatprep.subr.mxu0 0.0
        %697 = vmatpush1.msra.mxu0 0.0
        %698 = vmatprep.subr.mxu0 0.0
        %699 = vmatpush1.msra.mxu0 %v644
        %700 = vmatprep.subr.mxu0 0.0
        %701 = vmatpush1.msra.mxu0 %v643
        %702 = vmatprep.subr.mxu0 0.0
        %703 = vmatpush2.msra.mxu0 0.0
        %704 = vmatprep.subr.mxu0 0.0
        %705 = vmatpush2.msra.mxu0 0.0
        %706 = vmatprep.subr.mxu0 0.0
        %707 = vmatpush2.msra.mxu0 0.0
        %708 = vmatprep.subr.mxu0 0.0
        %709 = vmatpush2.msra.mxu0 0.0
        %710 = vmatprep.subr.mxu0 0.0
        %711 = vmatpush2.msra.mxu0 0.0
        %712 = vmatprep.subr.mxu0 0.0
        %713 = vmatpush2.msra.mxu0 0.0
        %714 = vmatprep.subr.mxu0 0.0
        %715 = vmatpush2.msra.mxu0 0.0
        %716 = vmatprep.subr.mxu0 0.0
        %717 = vmatpush2.msra.mxu0 0.0
        %718 = vmatprep.subr.mxu0 0.0
        %719 = vmatpush2.msra.mxu0 0.0
        %720 = vmatprep.subr.mxu0 0.0
        %721 = vmatpush2.msra.mxu0 0.0
        %722 = vmatprep.subr.mxu0 0.0
        %723 = vmatpush2.msra.mxu0 0.0
        %724 = vmatprep.subr.mxu0 0.0
        %725 = vmatpush2.msra.mxu0 0.0
        %726 = vmatprep.subr.mxu0 0.0
        %727 = vmatpush2.msra.mxu0 0.0
        %728 = vmatprep.subr.mxu0 0.0
        %729 = vmatpush2.msra.mxu0 0.0
        %730 = vmatprep.subr.mxu0 0.0
        %731 = vmatpush2.msra.mxu0 0.0
        %732 = vmatprep.subr.mxu0 0.0
        %733 = vmatpush2.msra.mxu0 0.0
        %734 = vmatprep.mubr.f32.mxu0 0.0
        %735 = vmatmul.mubr.f32.gmra.mxu0 %v647
        %v736 = vpop.f32.mrf.mxu0
        %v737 = vadd.f32 %v525, %v736
        %v738 = vpop.f32.mrf.mxu0
        %739 = vmatprep.mubr.f32.mxu0 0.0
        %740 = vmatmul.mubr.f32.gmra.mxu0 %v650
        %v741 = vpop.f32.mrf.mxu0
        %v742 = vadd.f32 %v526, %v741
        %v743 = vpop.f32.mrf.mxu0
        %744 = vmatprep.mubr.f32.mxu0 0.0
        %745 = vmatmul.mubr.f32.gmra.mxu0 %v653
        %v746 = vpop.f32.mrf.mxu0
        %v747 = vadd.f32 %v527, %v746
        %v748 = vpop.f32.mrf.mxu0
        %749 = vmatprep.mubr.f32.mxu0 0.0
        %750 = vmatmul.mubr.f32.gmra.mxu0 %v656
        %v751 = vpop.f32.mrf.mxu0
        %v752 = vadd.f32 %v528, %v751
        %v753 = vpop.f32.mrf.mxu0
        %754 = vmatprep.mubr.f32.mxu0 0.0
        %755 = vmatmul.mubr.f32.gmra.mxu0 %v659
        %v756 = vpop.f32.mrf.mxu0
        %v757 = vadd.f32 %v529, %v756
        %v758 = vpop.f32.mrf.mxu0
        %759 = vmatprep.mubr.f32.mxu0 0.0
        %760 = vmatmul.mubr.f32.gmra.mxu0 %v662
        %v761 = vpop.f32.mrf.mxu0
        %v762 = vadd.f32 %v530, %v761
        %v763 = vpop.f32.mrf.mxu0
        %764 = vmatprep.mubr.f32.mxu0 0.0
        %765 = vmatmul.mubr.f32.gmra.mxu0 %v665
        %v766 = vpop.f32.mrf.mxu0
        %v767 = vadd.f32 %v531, %v766
        %v768 = vpop.f32.mrf.mxu0
        %769 = vmatprep.mubr.f32.mxu0 0.0
        %770 = vmatmul.mubr.f32.gmra.mxu0 %v668
        %v771 = vpop.f32.mrf.mxu0
        %v772 = vadd.f32 %v532, %v771
        %v773 = vpop.f32.mrf.mxu0
        %774 = vdwg.mxu0
        %v775 = vld [vmem:[%s5] sm:$0xf]
        %v776 = vld [vmem:[%s5 + $0x4] sm:$0xf]
        %v777 = vld [vmem:[%s5 + $0x8] sm:$0xf]
        %v778 = vld [vmem:[%s5 + $0xc] sm:$0xf]
        %v779 = vld [vmem:[%s5 + $0x10] sm:$0xf]
        %v780 = vld [vmem:[%s5 + $0x14] sm:$0xf]
        %v781 = vld [vmem:[%s5 + $0x18] sm:$0xf]
        %v782 = vld [vmem:[%s5 + $0x1c] sm:$0xf]
        %v783 = vpack.c.bf16 %v631, %v629
        %v784 = vpack.c.bf16 %v632, %v630
        %786 = vset.pattern.permute.xlu0 0
        %787 = vperm.xlu0 %786, %v737
        %v788 = vpop.permute.xlu0 %787
        %791 = vset.pattern.permute.xlu0 0
        %792 = vperm.xlu0 %791, %v742
        %v793 = vpop.permute.xlu0 %792
        %796 = vset.pattern.permute.xlu0 0
        %797 = vperm.xlu0 %796, %v747
        %v798 = vpop.permute.xlu0 %797
        %801 = vset.pattern.permute.xlu0 0
        %802 = vperm.xlu0 %801, %v752
        %v803 = vpop.permute.xlu0 %802
        %806 = vset.pattern.permute.xlu0 0
        %807 = vperm.xlu0 %806, %v757
        %v808 = vpop.permute.xlu0 %807
        %811 = vset.pattern.permute.xlu0 0
        %812 = vperm.xlu0 %811, %v762
        %v813 = vpop.permute.xlu0 %812
        %816 = vset.pattern.permute.xlu0 0
        %817 = vperm.xlu0 %816, %v767
        %v818 = vpop.permute.xlu0 %817
        %821 = vset.pattern.permute.xlu0 0
        %822 = vperm.xlu0 %821, %v772
        %v823 = vpop.permute.xlu0 %822
        %v833 = vunpack.c.l.b16 %v775
        %v834 = vunpack.c.l.b16 %v776
        %v835 = vunpack.c.l.b16 %v777
        %v836 = vunpack.c.l.b16 %v778
        %v837 = vunpack.c.l.b16 %v779
        %v838 = vunpack.c.l.b16 %v780
        %v839 = vunpack.c.l.b16 %v781
        %v840 = vunpack.c.l.b16 %v782
        %v841 = vpack.c.b16 %v834, %v833
        %v842 = vpack.c.b16 %v836, %v835
        %v843 = vpack.c.b16 %v838, %v837
        %v844 = vpack.c.b16 %v840, %v839
        %v846 = vsel %vm645, %v841, 0
        %v849 = vsel %vm645, %v842, 0
        %v852 = vsel %vm645, %v843, 0
        %v855 = vsel %vm645, %v844, 0
        %857 = vmatprep.subr.bf16.mxu0 0
        %858 = vmatpush1.bf16.msra.mxu0 0
        %859 = vmatprep.subr.bf16.mxu0 0
        %860 = vmatpush1.bf16.msra.mxu0 0
        %861 = vmatprep.subr.bf16.mxu0 0
        %862 = vmatpush1.bf16.msra.mxu0 0
        %863 = vmatprep.subr.bf16.mxu0 0
        %864 = vmatpush1.bf16.msra.mxu0 0
        %865 = vmatprep.subr.bf16.mxu0 0
        %866 = vmatpush1.bf16.msra.mxu0 0
        %867 = vmatprep.subr.bf16.mxu0 0
        %868 = vmatpush1.bf16.msra.mxu0 0
        %869 = vmatprep.subr.bf16.mxu0 0
        %870 = vmatpush1.bf16.msra.mxu0 0
        %871 = vmatprep.subr.bf16.mxu0 %v784
        %872 = vmatpush1.bf16.msra.mxu0 %v783
        %873 = vmatprep.subr.bf16.mxu0 0
        %874 = vmatpush2.bf16.msra.mxu0 0
        %875 = vmatprep.subr.bf16.mxu0 0
        %876 = vmatpush2.bf16.msra.mxu0 0
        %877 = vmatprep.subr.bf16.mxu0 0
        %878 = vmatpush2.bf16.msra.mxu0 0
        %879 = vmatprep.subr.bf16.mxu0 0
        %880 = vmatpush2.bf16.msra.mxu0 0
        %881 = vmatprep.subr.bf16.mxu0 0
        %882 = vmatpush2.bf16.msra.mxu0 0
        %883 = vmatprep.subr.bf16.mxu0 0
        %884 = vmatpush2.bf16.msra.mxu0 0
        %885 = vmatprep.subr.bf16.mxu0 0
        %886 = vmatpush2.bf16.msra.mxu0 0
        %887 = vmatprep.subr.bf16.mxu0 0
        %888 = vmatpush2.bf16.msra.mxu0 0
        %889 = vmatprep.mubr.bf16.mxu0 0
        %890 = vmatmul.mubr.bf16.gmra.mxu0 %v846
        %v891 = vpop.f32.mrf.mxu0
        %v892 = vadd.f32 %v788, %v891
        %v893 = vpop.f32.mrf.mxu0
        %v894 = vadd.f32 %v788, %v893
        %v895 = vpop.f32.mrf.mxu0
        %v896 = vadd.f32 %v793, %v895
        %v897 = vpop.f32.mrf.mxu0
        %v898 = vadd.f32 %v793, %v897
        %899 = vmatprep.mubr.bf16.mxu0 0
        %900 = vmatmul.mubr.bf16.gmra.mxu0 %v849
        %v901 = vpop.f32.mrf.mxu0
        %v902 = vadd.f32 %v798, %v901
        %v903 = vpop.f32.mrf.mxu0
        %v904 = vadd.f32 %v798, %v903
        %v905 = vpop.f32.mrf.mxu0
        %v906 = vadd.f32 %v803, %v905
        %v907 = vpop.f32.mrf.mxu0
        %v908 = vadd.f32 %v803, %v907
        %909 = vmatprep.mubr.bf16.mxu0 0
        %910 = vmatmul.mubr.bf16.gmra.mxu0 %v852
        %v911 = vpop.f32.mrf.mxu0
        %v912 = vadd.f32 %v808, %v911
        %v913 = vpop.f32.mrf.mxu0
        %v914 = vadd.f32 %v808, %v913
        %v915 = vpop.f32.mrf.mxu0
        %v916 = vadd.f32 %v813, %v915
        %v917 = vpop.f32.mrf.mxu0
        %v918 = vadd.f32 %v813, %v917
        %919 = vmatprep.mubr.bf16.mxu0 0
        %920 = vmatmul.mubr.bf16.gmra.mxu0 %v855
        %v921 = vpop.f32.mrf.mxu0
        %v922 = vadd.f32 %v818, %v921
        %v923 = vpop.f32.mrf.mxu0
        %v924 = vadd.f32 %v818, %v923
        %v925 = vpop.f32.mrf.mxu0
        %v926 = vadd.f32 %v823, %v925
        %v927 = vpop.f32.mrf.mxu0
        %v928 = vadd.f32 %v823, %v927
        %929 = vdwg.mxu0
        %v930 = vsub.f32 0.0, %v892
        %v931 = vsub.f32 0.0, %v894
        %v932 = vsub.f32 0.0, %v896
        %v933 = vsub.f32 0.0, %v898
        %v934 = vsub.f32 0.0, %v902
        %v935 = vsub.f32 0.0, %v904
        %v936 = vsub.f32 0.0, %v906
        %v937 = vsub.f32 0.0, %v908
        %v938 = vsub.f32 0.0, %v912
        %v939 = vsub.f32 0.0, %v914
        %v940 = vsub.f32 0.0, %v916
        %v941 = vsub.f32 0.0, %v918
        %v942 = vsub.f32 0.0, %v922
        %v943 = vsub.f32 0.0, %v924
        %v944 = vsub.f32 0.0, %v926
        %v945 = vsub.f32 0.0, %v928
        %v946 = vmul.f32 %v930, 1.442695
        %v947 = vpow.pop %v946
        %v948 = vmul.f32 %v931, 1.442695
        %v949 = vpow.pop %v948
        %v950 = vmul.f32 %v932, 1.442695
        %v951 = vpow.pop %v950
        %v952 = vmul.f32 %v933, 1.442695
        %v953 = vpow.pop %v952
        %v954 = vmul.f32 %v934, 1.442695
        %v955 = vpow.pop %v954
        %v956 = vmul.f32 %v935, 1.442695
        %v957 = vpow.pop %v956
        %v958 = vmul.f32 %v936, 1.442695
        %v959 = vpow.pop %v958
        %v960 = vmul.f32 %v937, 1.442695
        %v961 = vpow.pop %v960
        %v962 = vmul.f32 %v938, 1.442695
        %v963 = vpow.pop %v962
        %v964 = vmul.f32 %v939, 1.442695
        %v965 = vpow.pop %v964
        %v966 = vmul.f32 %v940, 1.442695
        %v967 = vpow.pop %v966
        %v968 = vmul.f32 %v941, 1.442695
        %v969 = vpow.pop %v968
        %v970 = vmul.f32 %v942, 1.442695
        %v971 = vpow.pop %v970
        %v972 = vmul.f32 %v943, 1.442695
        %v973 = vpow.pop %v972
        %v974 = vmul.f32 %v944, 1.442695
        %v975 = vpow.pop %v974
        %v976 = vmul.f32 %v945, 1.442695
        %v977 = vpow.pop %v976
        %v978 = vadd.f32 %v947, 1.0
        %v979 = vadd.f32 %v949, 1.0
        %v980 = vadd.f32 %v951, 1.0
        %v981 = vadd.f32 %v953, 1.0
        %v982 = vadd.f32 %v955, 1.0
        %v983 = vadd.f32 %v957, 1.0
        %v984 = vadd.f32 %v959, 1.0
        %v985 = vadd.f32 %v961, 1.0
        %v986 = vadd.f32 %v963, 1.0
        %v987 = vadd.f32 %v965, 1.0
        %v988 = vadd.f32 %v967, 1.0
        %v989 = vadd.f32 %v969, 1.0
        %v990 = vadd.f32 %v971, 1.0
        %v991 = vadd.f32 %v973, 1.0
        %v992 = vadd.f32 %v975, 1.0
        %v993 = vadd.f32 %v977, 1.0
        %v994 = vrcp.pop %v978
        %v995 = vrcp.pop %v979
        %v996 = vrcp.pop %v980
        %v997 = vrcp.pop %v981
        %v998 = vrcp.pop %v982
        %v999 = vrcp.pop %v983
        %v1000 = vrcp.pop %v984
        %v1001 = vrcp.pop %v985
        %v1002 = vrcp.pop %v986
        %v1003 = vrcp.pop %v987
        %v1004 = vrcp.pop %v988
        %v1005 = vrcp.pop %v989
        %v1006 = vrcp.pop %v990
        %v1007 = vrcp.pop %v991
        %v1008 = vrcp.pop %v992
        %v1009 = vrcp.pop %v993
        %v1010 = vmul.f32 %v481, %v994
        %v1011 = vmul.f32 %v482, %v995
        %v1012 = vmul.f32 %v483, %v996
        %v1013 = vmul.f32 %v484, %v997
        %v1014 = vmul.f32 %v485, %v998
        %v1015 = vmul.f32 %v486, %v999
        %v1016 = vmul.f32 %v487, %v1000
        %v1017 = vmul.f32 %v488, %v1001
        %v1018 = vmul.f32 %v489, %v1002
        %v1019 = vmul.f32 %v490, %v1003
        %v1020 = vmul.f32 %v491, %v1004
        %v1021 = vmul.f32 %v492, %v1005
        %v1022 = vmul.f32 %v493, %v1006
        %v1023 = vmul.f32 %v494, %v1007
        %v1024 = vmul.f32 %v495, %v1008
        %v1025 = vmul.f32 %v496, %v1009
        %v1026 = vadd.f32 %v465, %v1010
        %v1027 = vadd.f32 %v466, %v1011
        %v1028 = vadd.f32 %v467, %v1012
        %v1029 = vadd.f32 %v468, %v1013
        %v1030 = vadd.f32 %v469, %v1014
        %v1031 = vadd.f32 %v470, %v1015
        %v1032 = vadd.f32 %v471, %v1016
        %v1033 = vadd.f32 %v472, %v1017
        %v1034 = vadd.f32 %v473, %v1018
        %v1035 = vadd.f32 %v474, %v1019
        %v1036 = vadd.f32 %v475, %v1020
        %v1037 = vadd.f32 %v476, %v1021
        %v1038 = vadd.f32 %v477, %v1022
        %v1039 = vadd.f32 %v478, %v1023
        %v1040 = vadd.f32 %v479, %v1024
        %v1041 = vadd.f32 %v480, %v1025
        %v1042 = vld [vmem:[%s9] sm:$0xff]
        %v1043 = vld [vmem:[%s9 + $0x8] sm:$0xff]
        %v1044 = vld [vmem:[%s11] sm:$0xff]
        %v1045 = vld [vmem:[%s11 + $0x8] sm:$0xff]
        %v1046 = vld [vmem:[%s11 + $0x10] sm:$0xff]
        %v1047 = vld [vmem:[%s11 + $0x18] sm:$0xff]
        %v1048 = vld [vmem:[%s11 + $0x20] sm:$0xff]
        %v1049 = vld [vmem:[%s11 + $0x28] sm:$0xff]
        %v1050 = vld [vmem:[%s11 + $0x30] sm:$0xff]
        %v1051 = vld [vmem:[%s11 + $0x38] sm:$0xff]
        %v1052 = vpack.c.bf16 %v1028, %v1026
        %v1053 = vpack.c.bf16 %v1029, %v1027
        %v1054 = vpack.c.bf16 %v1032, %v1030
        %v1055 = vpack.c.bf16 %v1033, %v1031
        %v1056 = vpack.c.bf16 %v1036, %v1034
        %v1057 = vpack.c.bf16 %v1037, %v1035
        %v1058 = vpack.c.bf16 %v1040, %v1038
        %v1059 = vpack.c.bf16 %v1041, %v1039
        %v1060 = vld [vmem:[%s8] sm:$0xf]
        %v1061 = vld [vmem:[%s8 + $0x4] sm:$0xf]
        %v1062 = vld [vmem:[%s8 + $0x8] sm:$0xf]
        %v1063 = vld [vmem:[%s8 + $0xc] sm:$0xf]
        %v1068 = vunpack.c.l.b16 %v1060
        %v1069 = vunpack.c.l.b16 %v1061
        %v1070 = vunpack.c.l.b16 %v1062
        %v1071 = vunpack.c.l.b16 %v1063
        %v1072 = vpack.c.b16 %v1069, %v1068
        %v1073 = vpack.c.b16 %v1071, %v1070
        %v1075 = vsel %vm555, %v1072, 0
        %v1078 = vsel %vm555, %v1073, 0
        %1080 = vmatprep.subr.bf16.mxu0 0
        %1081 = vmatpush1.bf16.msra.mxu0 0
        %1082 = vmatprep.subr.bf16.mxu0 0
        %1083 = vmatpush1.bf16.msra.mxu0 0
        %1084 = vmatprep.subr.bf16.mxu0 0
        %1085 = vmatpush1.bf16.msra.mxu0 0
        %1086 = vmatprep.subr.bf16.mxu0 0
        %1087 = vmatpush1.bf16.msra.mxu0 0
        %1088 = vmatprep.subr.bf16.mxu0 %v1059
        %1089 = vmatpush1.bf16.msra.mxu0 %v1058
        %1090 = vmatprep.subr.bf16.mxu0 %v1057
        %1091 = vmatpush1.bf16.msra.mxu0 %v1056
        %1092 = vmatprep.subr.bf16.mxu0 %v1055
        %1093 = vmatpush1.bf16.msra.mxu0 %v1054
        %1094 = vmatprep.subr.bf16.mxu0 %v1053
        %1095 = vmatpush1.bf16.msra.mxu0 %v1052
        %1096 = vmatprep.subr.bf16.mxu0 0
        %1097 = vmatpush2.bf16.msra.mxu0 0
        %1098 = vmatprep.subr.bf16.mxu0 0
        %1099 = vmatpush2.bf16.msra.mxu0 0
        %1100 = vmatprep.subr.bf16.mxu0 0
        %1101 = vmatpush2.bf16.msra.mxu0 0
        %1102 = vmatprep.subr.bf16.mxu0 0
        %1103 = vmatpush2.bf16.msra.mxu0 0
        %1104 = vmatprep.subr.bf16.mxu0 0
        %1105 = vmatpush2.bf16.msra.mxu0 0
        %1106 = vmatprep.subr.bf16.mxu0 0
        %1107 = vmatpush2.bf16.msra.mxu0 0
        %1108 = vmatprep.subr.bf16.mxu0 0
        %1109 = vmatpush2.bf16.msra.mxu0 0
        %1110 = vmatprep.subr.bf16.mxu0 0
        %1111 = vmatpush2.bf16.msra.mxu0 0
        %1112 = vmatprep.mubr.bf16.mxu0 0
        %1113 = vmatmul.mubr.bf16.gmra.mxu0 %v1075
        %v1114 = vpop.f32.mrf.mxu0
        %v1115 = vadd.f32 0.0, %v1114
        %v1116 = vpop.f32.mrf.mxu0
        %v1117 = vadd.f32 0.0, %v1116
        %v1118 = vpop.f32.mrf.mxu0
        %v1119 = vadd.f32 0.0, %v1118
        %v1120 = vpop.f32.mrf.mxu0
        %v1121 = vadd.f32 0.0, %v1120
        %1122 = vmatprep.mubr.bf16.mxu0 0
        %1123 = vmatmul.mubr.bf16.gmra.mxu0 %v1078
        %v1124 = vpop.f32.mrf.mxu0
        %v1125 = vadd.f32 0.0, %v1124
        %v1126 = vpop.f32.mrf.mxu0
        %v1127 = vadd.f32 0.0, %v1126
        %v1128 = vpop.f32.mrf.mxu0
        %v1129 = vadd.f32 0.0, %v1128
        %v1130 = vpop.f32.mrf.mxu0
        %v1131 = vadd.f32 0.0, %v1130
        %1132 = vdwg.mxu0
        %1134 = vset.pattern.permute.xlu0 0
        %1135 = vperm.xlu0 %1134, %v1042
        %v1136 = vpop.permute.xlu0 %1135
        %1139 = vset.pattern.permute.xlu0 0
        %1140 = vperm.xlu0 %1139, %v1043
        %v1141 = vpop.permute.xlu0 %1140
        %v1143 = vadd.f32 %v1115, %v1136
        %v1144 = vadd.f32 %v1117, %v1136
        %v1145 = vadd.f32 %v1119, %v1141
        %v1146 = vadd.f32 %v1121, %v1141
        %v1147 = vmax.f32 %v1143, 0.0
        %v1148 = vmax.f32 %v1144, 0.0
        %v1149 = vmax.f32 %v1145, 0.0
        %v1150 = vmax.f32 %v1146, 0.0
        %v1151 = vadd.f32 %v1125, %v1127
        %1152 = vadd.xlane.f32.xlu0 %v1151
        %v1153 = vpop.xlane.xlu0 %1152
        %v1154 = vadd.f32 %v1129, %v1131
        %1155 = vadd.xlane.f32.xlu0 %v1154
        %v1156 = vpop.xlane.xlu0 %1155
        %v1157 = vmul.f32 %v1153, 0.00390625
        %v1158 = vmul.f32 %v1156, 0.00390625
        %v1159 = vadd.f32 %v1157, %v521
        %v1160 = vadd.f32 %v1158, %v522
        %v1161 = vmax.f32 %v1159, 0.0
        %v1162 = vmax.f32 %v1160, 0.0
        %1163 = vmatprep.subr.mxu0 0.0
        %1164 = vmatpush1.msra.mxu0 0.0
        %1165 = vmatprep.subr.mxu0 0.0
        %1166 = vmatpush1.msra.mxu0 0.0
        %1167 = vmatprep.subr.mxu0 0.0
        %1168 = vmatpush1.msra.mxu0 0.0
        %1169 = vmatprep.subr.mxu0 0.0
        %1170 = vmatpush1.msra.mxu0 0.0
        %1171 = vmatprep.subr.mxu0 0.0
        %1172 = vmatpush1.msra.mxu0 0.0
        %1173 = vmatprep.subr.mxu0 0.0
        %1174 = vmatpush1.msra.mxu0 0.0
        %1175 = vmatprep.subr.mxu0 0.0
        %1176 = vmatpush1.msra.mxu0 0.0
        %1177 = vmatprep.subr.mxu0 0.0
        %1178 = vmatpush1.msra.mxu0 0.0
        %1179 = vmatprep.subr.mxu0 0.0
        %1180 = vmatpush1.msra.mxu0 0.0
        %1181 = vmatprep.subr.mxu0 0.0
        %1182 = vmatpush1.msra.mxu0 0.0
        %1183 = vmatprep.subr.mxu0 0.0
        %1184 = vmatpush1.msra.mxu0 0.0
        %1185 = vmatprep.subr.mxu0 0.0
        %1186 = vmatpush1.msra.mxu0 0.0
        %1187 = vmatprep.subr.mxu0 0.0
        %1188 = vmatpush1.msra.mxu0 0.0
        %1189 = vmatprep.subr.mxu0 0.0
        %1190 = vmatpush1.msra.mxu0 0.0
        %1191 = vmatprep.subr.mxu0 0.0
        %1192 = vmatpush1.msra.mxu0 %v1162
        %1193 = vmatprep.subr.mxu0 0.0
        %1194 = vmatpush1.msra.mxu0 %v1161
        %1195 = vmatprep.subr.mxu0 0.0
        %1196 = vmatpush2.msra.mxu0 0.0
        %1197 = vmatprep.subr.mxu0 0.0
        %1198 = vmatpush2.msra.mxu0 0.0
        %1199 = vmatprep.subr.mxu0 0.0
        %1200 = vmatpush2.msra.mxu0 0.0
        %1201 = vmatprep.subr.mxu0 0.0
        %1202 = vmatpush2.msra.mxu0 0.0
        %1203 = vmatprep.subr.mxu0 0.0
        %1204 = vmatpush2.msra.mxu0 0.0
        %1205 = vmatprep.subr.mxu0 0.0
        %1206 = vmatpush2.msra.mxu0 0.0
        %1207 = vmatprep.subr.mxu0 0.0
        %1208 = vmatpush2.msra.mxu0 0.0
        %1209 = vmatprep.subr.mxu0 0.0
        %1210 = vmatpush2.msra.mxu0 0.0
        %1211 = vmatprep.subr.mxu0 0.0
        %1212 = vmatpush2.msra.mxu0 0.0
        %1213 = vmatprep.subr.mxu0 0.0
        %1214 = vmatpush2.msra.mxu0 0.0
        %1215 = vmatprep.subr.mxu0 0.0
        %1216 = vmatpush2.msra.mxu0 0.0
        %1217 = vmatprep.subr.mxu0 0.0
        %1218 = vmatpush2.msra.mxu0 0.0
        %1219 = vmatprep.subr.mxu0 0.0
        %1220 = vmatpush2.msra.mxu0 0.0
        %1221 = vmatprep.subr.mxu0 0.0
        %1222 = vmatpush2.msra.mxu0 0.0
        %1223 = vmatprep.subr.mxu0 0.0
        %1224 = vmatpush2.msra.mxu0 0.0
        %1225 = vmatprep.subr.mxu0 0.0
        %1226 = vmatpush2.msra.mxu0 0.0
        %1227 = vmatprep.mubr.f32.mxu0 0.0
        %1228 = vmatmul.mubr.f32.gmra.mxu0 %v647
        %v1229 = vpop.f32.mrf.mxu0
        %v1230 = vadd.f32 %v1044, %v1229
        %v1231 = vpop.f32.mrf.mxu0
        %1232 = vmatprep.mubr.f32.mxu0 0.0
        %1233 = vmatmul.mubr.f32.gmra.mxu0 %v650
        %v1234 = vpop.f32.mrf.mxu0
        %v1235 = vadd.f32 %v1045, %v1234
        %v1236 = vpop.f32.mrf.mxu0
        %1237 = vmatprep.mubr.f32.mxu0 0.0
        %1238 = vmatmul.mubr.f32.gmra.mxu0 %v653
        %v1239 = vpop.f32.mrf.mxu0
        %v1240 = vadd.f32 %v1046, %v1239
        %v1241 = vpop.f32.mrf.mxu0
        %1242 = vmatprep.mubr.f32.mxu0 0.0
        %1243 = vmatmul.mubr.f32.gmra.mxu0 %v656
        %v1244 = vpop.f32.mrf.mxu0
        %v1245 = vadd.f32 %v1047, %v1244
        %v1246 = vpop.f32.mrf.mxu0
        %1247 = vmatprep.mubr.f32.mxu0 0.0
        %1248 = vmatmul.mubr.f32.gmra.mxu0 %v659
        %v1249 = vpop.f32.mrf.mxu0
        %v1250 = vadd.f32 %v1048, %v1249
        %v1251 = vpop.f32.mrf.mxu0
        %1252 = vmatprep.mubr.f32.mxu0 0.0
        %1253 = vmatmul.mubr.f32.gmra.mxu0 %v662
        %v1254 = vpop.f32.mrf.mxu0
        %v1255 = vadd.f32 %v1049, %v1254
        %v1256 = vpop.f32.mrf.mxu0
        %1257 = vmatprep.mubr.f32.mxu0 0.0
        %1258 = vmatmul.mubr.f32.gmra.mxu0 %v665
        %v1259 = vpop.f32.mrf.mxu0
        %v1260 = vadd.f32 %v1050, %v1259
        %v1261 = vpop.f32.mrf.mxu0
        %1262 = vmatprep.mubr.f32.mxu0 0.0
        %1263 = vmatmul.mubr.f32.gmra.mxu0 %v668
        %v1264 = vpop.f32.mrf.mxu0
        %v1265 = vadd.f32 %v1051, %v1264
        %v1266 = vpop.f32.mrf.mxu0
        %1267 = vdwg.mxu0
        %v1268 = vld [vmem:[%s10] sm:$0xf]
        %v1269 = vld [vmem:[%s10 + $0x4] sm:$0xf]
        %v1270 = vld [vmem:[%s10 + $0x8] sm:$0xf]
        %v1271 = vld [vmem:[%s10 + $0xc] sm:$0xf]
        %v1272 = vld [vmem:[%s10 + $0x10] sm:$0xf]
        %v1273 = vld [vmem:[%s10 + $0x14] sm:$0xf]
        %v1274 = vld [vmem:[%s10 + $0x18] sm:$0xf]
        %v1275 = vld [vmem:[%s10 + $0x1c] sm:$0xf]
        %v1276 = vpack.c.bf16 %v1149, %v1147
        %v1277 = vpack.c.bf16 %v1150, %v1148
        %1279 = vset.pattern.permute.xlu0 0
        %1280 = vperm.xlu0 %1279, %v1230
        %v1281 = vpop.permute.xlu0 %1280
        %1284 = vset.pattern.permute.xlu0 0
        %1285 = vperm.xlu0 %1284, %v1235
        %v1286 = vpop.permute.xlu0 %1285
        %1289 = vset.pattern.permute.xlu0 0
        %1290 = vperm.xlu0 %1289, %v1240
        %v1291 = vpop.permute.xlu0 %1290
        %1294 = vset.pattern.permute.xlu0 0
        %1295 = vperm.xlu0 %1294, %v1245
        %v1296 = vpop.permute.xlu0 %1295
        %1299 = vset.pattern.permute.xlu0 0
        %1300 = vperm.xlu0 %1299, %v1250
        %v1301 = vpop.permute.xlu0 %1300
        %1304 = vset.pattern.permute.xlu0 0
        %1305 = vperm.xlu0 %1304, %v1255
        %v1306 = vpop.permute.xlu0 %1305
        %1309 = vset.pattern.permute.xlu0 0
        %1310 = vperm.xlu0 %1309, %v1260
        %v1311 = vpop.permute.xlu0 %1310
        %1314 = vset.pattern.permute.xlu0 0
        %1315 = vperm.xlu0 %1314, %v1265
        %v1316 = vpop.permute.xlu0 %1315
        %v1326 = vunpack.c.l.b16 %v1268
        %v1327 = vunpack.c.l.b16 %v1269
        %v1328 = vunpack.c.l.b16 %v1270
        %v1329 = vunpack.c.l.b16 %v1271
        %v1330 = vunpack.c.l.b16 %v1272
        %v1331 = vunpack.c.l.b16 %v1273
        %v1332 = vunpack.c.l.b16 %v1274
        %v1333 = vunpack.c.l.b16 %v1275
        %v1334 = vpack.c.b16 %v1327, %v1326
        %v1335 = vpack.c.b16 %v1329, %v1328
        %v1336 = vpack.c.b16 %v1331, %v1330
        %v1337 = vpack.c.b16 %v1333, %v1332
        %v1339 = vsel %vm645, %v1334, 0
        %v1342 = vsel %vm645, %v1335, 0
        %v1345 = vsel %vm645, %v1336, 0
        %v1348 = vsel %vm645, %v1337, 0
        %1350 = vmatprep.subr.bf16.mxu0 0
        %1351 = vmatpush1.bf16.msra.mxu0 0
        %1352 = vmatprep.subr.bf16.mxu0 0
        %1353 = vmatpush1.bf16.msra.mxu0 0
        %1354 = vmatprep.subr.bf16.mxu0 0
        %1355 = vmatpush1.bf16.msra.mxu0 0
        %1356 = vmatprep.subr.bf16.mxu0 0
        %1357 = vmatpush1.bf16.msra.mxu0 0
        %1358 = vmatprep.subr.bf16.mxu0 0
        %1359 = vmatpush1.bf16.msra.mxu0 0
        %1360 = vmatprep.subr.bf16.mxu0 0
        %1361 = vmatpush1.bf16.msra.mxu0 0
        %1362 = vmatprep.subr.bf16.mxu0 0
        %1363 = vmatpush1.bf16.msra.mxu0 0
        %1364 = vmatprep.subr.bf16.mxu0 %v1277
        %1365 = vmatpush1.bf16.msra.mxu0 %v1276
        %1366 = vmatprep.subr.bf16.mxu0 0
        %1367 = vmatpush2.bf16.msra.mxu0 0
        %1368 = vmatprep.subr.bf16.mxu0 0
        %1369 = vmatpush2.bf16.msra.mxu0 0
        %1370 = vmatprep.subr.bf16.mxu0 0
        %1371 = vmatpush2.bf16.msra.mxu0 0
        %1372 = vmatprep.subr.bf16.mxu0 0
        %1373 = vmatpush2.bf16.msra.mxu0 0
        %1374 = vmatprep.subr.bf16.mxu0 0
        %1375 = vmatpush2.bf16.msra.mxu0 0
        %1376 = vmatprep.subr.bf16.mxu0 0
        %1377 = vmatpush2.bf16.msra.mxu0 0
        %1378 = vmatprep.subr.bf16.mxu0 0
        %1379 = vmatpush2.bf16.msra.mxu0 0
        %1380 = vmatprep.subr.bf16.mxu0 0
        %1381 = vmatpush2.bf16.msra.mxu0 0
        %1382 = vmatprep.mubr.bf16.mxu0 0
        %1383 = vmatmul.mubr.bf16.gmra.mxu0 %v1339
        %v1384 = vpop.f32.mrf.mxu0
        %v1385 = vadd.f32 %v1281, %v1384
        %v1386 = vpop.f32.mrf.mxu0
        %v1387 = vadd.f32 %v1281, %v1386
        %v1388 = vpop.f32.mrf.mxu0
        %v1389 = vadd.f32 %v1286, %v1388
        %v1390 = vpop.f32.mrf.mxu0
        %v1391 = vadd.f32 %v1286, %v1390
        %1392 = vmatprep.mubr.bf16.mxu0 0
        %1393 = vmatmul.mubr.bf16.gmra.mxu0 %v1342
        %v1394 = vpop.f32.mrf.mxu0
        %v1395 = vadd.f32 %v1291, %v1394
        %v1396 = vpop.f32.mrf.mxu0
        %v1397 = vadd.f32 %v1291, %v1396
        %v1398 = vpop.f32.mrf.mxu0
        %v1399 = vadd.f32 %v1296, %v1398
        %v1400 = vpop.f32.mrf.mxu0
        %v1401 = vadd.f32 %v1296, %v1400
        %1402 = vmatprep.mubr.bf16.mxu0 0
        %1403 = vmatmul.mubr.bf16.gmra.mxu0 %v1345
        %v1404 = vpop.f32.mrf.mxu0
        %v1405 = vadd.f32 %v1301, %v1404
        %v1406 = vpop.f32.mrf.mxu0
        %v1407 = vadd.f32 %v1301, %v1406
        %v1408 = vpop.f32.mrf.mxu0
        %v1409 = vadd.f32 %v1306, %v1408
        %v1410 = vpop.f32.mrf.mxu0
        %v1411 = vadd.f32 %v1306, %v1410
        %1412 = vmatprep.mubr.bf16.mxu0 0
        %1413 = vmatmul.mubr.bf16.gmra.mxu0 %v1348
        %v1414 = vpop.f32.mrf.mxu0
        %v1415 = vadd.f32 %v1311, %v1414
        %v1416 = vpop.f32.mrf.mxu0
        %v1417 = vadd.f32 %v1311, %v1416
        %v1418 = vpop.f32.mrf.mxu0
        %v1419 = vadd.f32 %v1316, %v1418
        %v1420 = vpop.f32.mrf.mxu0
        %v1421 = vadd.f32 %v1316, %v1420
        %1422 = vdwg.mxu0
        %v1423 = vsub.f32 0.0, %v1385
        %v1424 = vsub.f32 0.0, %v1387
        %v1425 = vsub.f32 0.0, %v1389
        %v1426 = vsub.f32 0.0, %v1391
        %v1427 = vsub.f32 0.0, %v1395
        %v1428 = vsub.f32 0.0, %v1397
        %v1429 = vsub.f32 0.0, %v1399
        %v1430 = vsub.f32 0.0, %v1401
        %v1431 = vsub.f32 0.0, %v1405
        %v1432 = vsub.f32 0.0, %v1407
        %v1433 = vsub.f32 0.0, %v1409
        %v1434 = vsub.f32 0.0, %v1411
        %v1435 = vsub.f32 0.0, %v1415
        %v1436 = vsub.f32 0.0, %v1417
        %v1437 = vsub.f32 0.0, %v1419
        %v1438 = vsub.f32 0.0, %v1421
        %v1439 = vmul.f32 %v1423, 1.442695
        %v1440 = vpow.pop %v1439
        %v1441 = vmul.f32 %v1424, 1.442695
        %v1442 = vpow.pop %v1441
        %v1443 = vmul.f32 %v1425, 1.442695
        %v1444 = vpow.pop %v1443
        %v1445 = vmul.f32 %v1426, 1.442695
        %v1446 = vpow.pop %v1445
        %v1447 = vmul.f32 %v1427, 1.442695
        %v1448 = vpow.pop %v1447
        %v1449 = vmul.f32 %v1428, 1.442695
        %v1450 = vpow.pop %v1449
        %v1451 = vmul.f32 %v1429, 1.442695
        %v1452 = vpow.pop %v1451
        %v1453 = vmul.f32 %v1430, 1.442695
        %v1454 = vpow.pop %v1453
        %v1455 = vmul.f32 %v1431, 1.442695
        %v1456 = vpow.pop %v1455
        %v1457 = vmul.f32 %v1432, 1.442695
        %v1458 = vpow.pop %v1457
        %v1459 = vmul.f32 %v1433, 1.442695
        %v1460 = vpow.pop %v1459
        %v1461 = vmul.f32 %v1434, 1.442695
        %v1462 = vpow.pop %v1461
        %v1463 = vmul.f32 %v1435, 1.442695
        %v1464 = vpow.pop %v1463
        %v1465 = vmul.f32 %v1436, 1.442695
        %v1466 = vpow.pop %v1465
        %v1467 = vmul.f32 %v1437, 1.442695
        %v1468 = vpow.pop %v1467
        %v1469 = vmul.f32 %v1438, 1.442695
        %v1470 = vpow.pop %v1469
        %v1471 = vadd.f32 %v1440, 1.0
        %v1472 = vadd.f32 %v1442, 1.0
        %v1473 = vadd.f32 %v1444, 1.0
        %v1474 = vadd.f32 %v1446, 1.0
        %v1475 = vadd.f32 %v1448, 1.0
        %v1476 = vadd.f32 %v1450, 1.0
        %v1477 = vadd.f32 %v1452, 1.0
        %v1478 = vadd.f32 %v1454, 1.0
        %v1479 = vadd.f32 %v1456, 1.0
        %v1480 = vadd.f32 %v1458, 1.0
        %v1481 = vadd.f32 %v1460, 1.0
        %v1482 = vadd.f32 %v1462, 1.0
        %v1483 = vadd.f32 %v1464, 1.0
        %v1484 = vadd.f32 %v1466, 1.0
        %v1485 = vadd.f32 %v1468, 1.0
        %v1486 = vadd.f32 %v1470, 1.0
        %v1487 = vrcp.pop %v1471
        %v1488 = vrcp.pop %v1472
        %v1489 = vrcp.pop %v1473
        %v1490 = vrcp.pop %v1474
        %v1491 = vrcp.pop %v1475
        %v1492 = vrcp.pop %v1476
        %v1493 = vrcp.pop %v1477
        %v1494 = vrcp.pop %v1478
        %v1495 = vrcp.pop %v1479
        %v1496 = vrcp.pop %v1480
        %v1497 = vrcp.pop %v1481
        %v1498 = vrcp.pop %v1482
        %v1499 = vrcp.pop %v1483
        %v1500 = vrcp.pop %v1484
        %v1501 = vrcp.pop %v1485
        %v1502 = vrcp.pop %v1486
        %v1503 = vmul.f32 %v481, %v1487
        %v1504 = vmul.f32 %v482, %v1488
        %v1505 = vmul.f32 %v483, %v1489
        %v1506 = vmul.f32 %v484, %v1490
        %v1507 = vmul.f32 %v485, %v1491
        %v1508 = vmul.f32 %v486, %v1492
        %v1509 = vmul.f32 %v487, %v1493
        %v1510 = vmul.f32 %v488, %v1494
        %v1511 = vmul.f32 %v489, %v1495
        %v1512 = vmul.f32 %v490, %v1496
        %v1513 = vmul.f32 %v491, %v1497
        %v1514 = vmul.f32 %v492, %v1498
        %v1515 = vmul.f32 %v493, %v1499
        %v1516 = vmul.f32 %v494, %v1500
        %v1517 = vmul.f32 %v495, %v1501
        %v1518 = vmul.f32 %v496, %v1502
        %v1519 = vadd.f32 %v465, %v1503
        %v1520 = vadd.f32 %v466, %v1504
        %v1521 = vadd.f32 %v467, %v1505
        %v1522 = vadd.f32 %v468, %v1506
        %v1523 = vadd.f32 %v469, %v1507
        %v1524 = vadd.f32 %v470, %v1508
        %v1525 = vadd.f32 %v471, %v1509
        %v1526 = vadd.f32 %v472, %v1510
        %v1527 = vadd.f32 %v473, %v1511
        %v1528 = vadd.f32 %v474, %v1512
        %v1529 = vadd.f32 %v475, %v1513
        %v1530 = vadd.f32 %v476, %v1514
        %v1531 = vadd.f32 %v477, %v1515
        %v1532 = vadd.f32 %v478, %v1516
        %v1533 = vadd.f32 %v479, %v1517
        %v1534 = vadd.f32 %v480, %v1518
        %1535 = vst [vmem:[%s421] sm:$0xff] %v1519
        %1536 = vst [vmem:[%s421 + $0x8] sm:$0xff] %v1520
        %1537 = vst [vmem:[%s421 + $0x10] sm:$0xff] %v1521
        %1538 = vst [vmem:[%s421 + $0x18] sm:$0xff] %v1522
        %1539 = vst [vmem:[%s421 + $0x20] sm:$0xff] %v1523
        %1540 = vst [vmem:[%s421 + $0x28] sm:$0xff] %v1524
        %1541 = vst [vmem:[%s421 + $0x30] sm:$0xff] %v1525
        %1542 = vst [vmem:[%s421 + $0x38] sm:$0xff] %v1526
        %1543 = vst [vmem:[%s421 + $0x40] sm:$0xff] %v1527
        %1544 = vst [vmem:[%s421 + $0x48] sm:$0xff] %v1528
        %1545 = vst [vmem:[%s421 + $0x50] sm:$0xff] %v1529
        %1546 = vst [vmem:[%s421 + $0x58] sm:$0xff] %v1530
        %1547 = vst [vmem:[%s421 + $0x60] sm:$0xff] %v1531
        %1548 = vst [vmem:[%s421 + $0x68] sm:$0xff] %v1532
        %1549 = vst [vmem:[%s421 + $0x70] sm:$0xff] %v1533
        %1550 = vst [vmem:[%s421 + $0x78] sm:$0xff] %v1534
        %s1551 = sand.u32 %s296, 1
        %s1552 = scalar_lea.sflag [#allocation3], %s1551
        %s1553 = sand.u32 %s296, 1
        %s1554 = smul.addr %s1553, 128
        %s1555 = scalar_lea.vmem [#allocation2], %s1554
        // Predicated region
        $region69: #{tpu_custom_call.1} parent=67 // pred_check
          %p1556 = pneg %p306
        $region70: #{tpu_custom_call.1} parent=67 // pred_check_branch
          %1558 = sbr.rel (%p1556) target = $region72
        $region71: #{tpu_custom_call.1} parent=67 // pred_region
          %s1560 = ssub.s32 2048, 2048
          %1561 = vsyncadd %s1552, %s1560
          %s1562 = smul.addr %s26, 16
          %s1563 = smul.addr %s1562, 128
          %s1564 = scalar_lea.hbm %s12, %s1563
          %s1565 = sshll.u32 %s1555, 4
          %s1566 = int_to_ptr.vmem [resolvable:$true] %s1565
          %1571 = dma.vmem_to_hbm [thread:$0]  %s1566, 2048, %s1564, %s1552, 256, 256, 16
        $region72: #{tpu_custom_call.1} parent=67 // pred_fallthru
          _
      $region68: #{tpu_custom_call.1} parent=5 // pred_fallthru
        _
      %p1572 = scmp.le.s32.totalorder 2, %s21
      // Predicated region
      $region73: #{tpu_custom_call.1} parent=5 // pred_check
        %p1573 = pneg %p1572
      $region74: #{tpu_custom_call.1} parent=5 // pred_check_branch
        %1575 = sbr.rel (%p1573) target = $region76
      $region75: #{tpu_custom_call.1} parent=5 // pred_region
        %s1576 = ssub.s32 %s21, 2
        // Predicated region
        $region77: #{tpu_custom_call.1} parent=75 // pred_check
          %p1577 = pneg %p312
        $region78: #{tpu_custom_call.1} parent=75 // pred_check_branch
          %1579 = sbr.rel (%p1577) target = $region80
        $region79: #{tpu_custom_call.1} parent=75 // pred_region
          %s1580 = sand.u32 %s297, 1
          %s1581 = scalar_lea.sflag [#allocation3], %s1580
          %s1582 = sand.u32 %s297, 1
          %s1583 = smul.addr %s1582, 128
          %s1584 = scalar_lea.vmem [#allocation2], %s1583
          %1585 = dma.done %s1581, 2048
        $region80: #{tpu_custom_call.1} parent=75 // pred_fallthru
          _
      $region76: #{tpu_custom_call.1} parent=5 // pred_fallthru
        _
    $region6: #{tpu_custom_call.1} parent=1 // loop_footer
      %s25 = sadd.s32 1, %s21
    $region7: #{tpu_custom_call.1} parent=1 // loop_footer_branch
      %20 = sbr.rel target = $region3
    $region8: #{tpu_custom_call.1} parent=1 // loop_exit
      _
    %1586 = vsyncpa [#allocation3], 1
    %s1587 = scalar_lea.sflag [#allocation3], 1
    %1588 = vsyncpa %s1587, 1

</llo_original>
